<compile_context>
chip_gen: v6e
topology: v6e:2x2x1
jax: 0.10.0
libtpu: 0.0.40
codegen_flags: <defaults>
</compile_context>

<pallas_src>
import math

import jax
import jax.numpy as jnp
import numpy as np
from jax import lax
from jax.experimental import pallas as pl
from jax.experimental.pallas import tpu as pltpu


def _round_up(x, m):
    return ((x + m - 1) // m) * m


def _attention_pooler_kernel(q_ref, hm_ref, g_ref, wkv_ref, wo_ref,
                             x_ref, bias_ref, o_ref,
                             m_ref, l_ref, acc_ref):
    """Grid = (batch blocks, L chunks); online softmax over the L axis.

    q_ref    : (S, Dp)       masked + pre-scaled expanded query (S = H*T), compute dtype
    hm_ref   : (S, Dp)       0/1 head mask, compute dtype
    g_ref    : (Tp, S)       token-select / head-sum matrix, compute dtype
    wkv_ref  : (Dp, 2*Dp)    fused K|V projection weights, compute dtype
    wo_ref   : (Dp, Dp)      output projection weights, compute dtype
    x_ref    : (bb, Lt, Dp)  input chunk, input dtype (cast in-kernel)
    bias_ref : (bb, 1, Lt)   additive attention bias (0 / -1e30), f32
    o_ref    : (bb*Tp, Dp)   lane-dense output slab, written on the last L step
    m/l/acc  : online-softmax running state (f32), persistent across L steps
    """
    bb, lt, d = x_ref.shape
    t_pad = g_ref.shape[0]
    cdtype = q_ref.dtype
    approx = cdtype != jnp.float32          # exact reciprocal on the f32 path

    li = pl.program_id(1)
    nl = pl.num_programs(1)

    @pl.when(li == 0)
    def _init():
        m_ref[...] = jnp.full(m_ref.shape, -jnp.inf, m_ref.dtype)
        l_ref[...] = jnp.zeros(l_ref.shape, l_ref.dtype)
        acc_ref[...] = jnp.zeros(acc_ref.shape, acc_ref.dtype)

    # ---- fused K/V projection: one (bb*Lt, Dp) @ (Dp, 2*Dp) MXU matmul. ----
    xf = x_ref[...].astype(cdtype).reshape(bb * lt, d)     # in-kernel cast, free reshape
    kv = jnp.dot(xf, wkv_ref[...], preferred_element_type=jnp.float32)
    kv = kv.astype(cdtype)
    k = kv[:, :d].reshape(bb, lt, d)                       # 128-aligned lane split
    v = kv[:, d:].reshape(bb, lt, d)

    q = q_ref[...]                                         # (S, Dp); no broadcast_to

    for b in range(bb):                                    # static unroll, bb is small
        # scores (S, Lt) = q @ k_b^T; 1/sqrt(d_head) and head masking are folded in q.
        s_b = lax.dot_general(q, k[b], (((1,), (1,)), ((), ())),
                              preferred_element_type=jnp.float32)
        s_b = s_b + bias_ref[b]                            # (1, Lt) row-broadcast, f32

        # Online softmax update over the L axis.
        m_prev = m_ref[b]                                  # (S, 1)
        m_new = jnp.maximum(m_prev, jnp.max(s_b, axis=-1, keepdims=True))
        alpha = jnp.exp(m_prev - m_new)                    # (S, 1)
        p = jnp.exp(s_b - m_new)                           # (S, Lt) f32
        l_ref[b] = alpha * l_ref[b] + jnp.sum(p, axis=-1, keepdims=True)
        acc_ref[b] = alpha * acc_ref[b] + jnp.dot(
            p.astype(cdtype), v[b], preferred_element_type=jnp.float32)
        m_ref[b] = m_new

    @pl.when(li == nl - 1)
    def _finalize():
        g = g_ref[...]
        hm = hm_ref[...]
        wo = wo_ref[...]
        for b in range(bb):
            inv_l = pl.reciprocal(l_ref[b], approx=approx)             # (S, 1)
            ctx = (acc_ref[b] * inv_l).astype(cdtype) * hm             # head-h cols only
            pooled = jnp.dot(g, ctx, preferred_element_type=jnp.float32)   # (Tp, Dp)
            out = jnp.dot(pooled.astype(cdtype), wo,
                          preferred_element_type=jnp.float32)          # (Tp, Dp)
            o_ref[pl.ds(b * t_pad, t_pad), :] = out.astype(o_ref.dtype)


def _tpu_vmem_capacity():
    try:
        info = pltpu.get_tpu_info()
        cap = getattr(info, "vmem_capacity_bytes", None)
        if cap:
            return int(cap)
    except Exception:
        pass
    return 64 * 1024 * 1024        # conservative default (v7x per-core VMEM)


def _select_tiles(b, l_pad, d_pad, s_rows, t_pad, cdt_bytes, budget):
    """Pick (batch_block, l_chunk) so the per-step live set fits `budget` bytes."""
    # Resident grid-invariant operands (counted x2 in case single-buffering falls back).
    resident = 2 * cdt_bytes * (3 * d_pad * d_pad + 2 * s_rows * d_pad + t_pad * s_rows)
    # Per (batch*seq) row: x chunk f32 double-buffered (8B) + compute-dtype copy
    # + kv f32 (8B) + kv compute-dtype (2*cdt) + small softmax intermediates.
    per_row = d_pad * (8 + 3 * cdt_bytes + 8) + 8 * _round_up(s_rows, 8)
    # Per batch element: acc/m/l scratch + output slab.
    per_batch = 4 * s_rows * d_pad + 8 * 128 * s_rows + 8 * t_pad * d_pad
    avail = budget - resident - (2 << 20)

    lt_opts = sorted({v for v in range(128, l_pad + 1, 128) if l_pad % v == 0} | {l_pad})
    bb_opts = [v for v in range(1, min(b, 8) + 1) if b % v == 0]

    best = None
    for lt in lt_opts:
        for bb in bb_opts:
            if per_row * bb * lt + per_batch * bb > avail:
                continue
            nb = b // bb
            rows = bb * lt
            score = (nb >= 2 or b == 1,          # keep >= 2 parallel steps when possible
                     min(rows, 2048),            # MXU M for the projection matmul
                     nb % 2 == 0 or nb == 1,     # even split across 2 TCs (v7x)
                     -(nb * (l_pad // lt)))      # fewer grid steps
            if best is None or score > best[0]:
                best = (score, bb, lt)
    if best is None:
        return 1, lt_opts[0]                     # minimum tile; rely on vmem_limit
    return best[1], best[2]


def attention_pooler(x, params, n_heads, attention_mask=None, *,
                     batch_block=None, l_chunk=None,
                     compute_dtype=jnp.bfloat16, vmem_limit_bytes=None):
    """Pallas-backed forward pass of AttentionPooler.

    x: (B, L, D); params: Q (n_tokens, D), Wq/Wk/Wv/Wo (D, D) in (in, out) layout.
    attention_mask: optional (B, L) {0,1}/bool; 0 positions are masked out.
    returns: (B, n_tokens, D) in x.dtype.
    """
    b, seq, d = x.shape
    Q, Wq, Wk, Wv, Wo = params["Q"], params["Wq"], params["Wk"], params["Wv"], params["Wo"]
    n_tokens = Q.shape[0]
    assert d % n_heads == 0, "hidden_size must be divisible by n_heads"
    d_head = d // n_heads
    s_rows = n_heads * n_tokens
    t_pad = _round_up(n_tokens, 8)

    # Tile-aligned padded sizes (padding is exact; stripped after the call).
    d_pad = _round_up(d, 128)
    l_pad = _round_up(seq, 128 if seq > 512 else 8)

    out_dtype = x.dtype
    cdt_bytes = jnp.dtype(compute_dtype).itemsize
    scale = 1.0 / math.sqrt(d_head)
    f32 = jnp.float32

    # --- VMEM-aware tiling + explicit scoped-VMEM limit. ----------------------
    cap = _tpu_vmem_capacity()
    budget = int(cap * 0.7)
    if vmem_limit_bytes is None:
        vmem_limit_bytes = min(int(cap * 0.85), 100 * 1024 * 1024)

    auto_bb, auto_lt = _select_tiles(b, l_pad, d_pad, s_rows, t_pad, cdt_bytes, budget)
    bb = batch_block if batch_block is not None else auto_bb
    bb = max(1, min(bb, b))
    while b % bb:
        bb -= 1
    lt_valid = sorted({v for v in range(128, l_pad + 1, 128) if l_pad % v == 0} | {l_pad})
    if l_chunk is None:
        lt = auto_lt
    else:
        lt = max([v for v in lt_valid if v <= l_chunk] or [lt_valid[0]])
    nb, nl = b // bb, l_pad // lt

    # --- batch-invariant precomputation (hoisted out of the kernel). ----------
    q_full = (jnp.asarray(Q, f32) @ jnp.asarray(Wq, f32)) * scale              # (T, D)
    head_of_row = np.arange(s_rows) // n_tokens
    head_of_col = np.arange(d) // d_head
    hmask_np = (head_of_row[:, None] == head_of_col[None, :]).astype(np.float32)  # (S, D)
    q_exp = jnp.tile(q_full, (n_heads, 1)) * hmask_np                          # (S, D)

    q_exp_p = jnp.zeros((s_rows, d_pad), f32).at[:, :d].set(q_exp).astype(compute_dtype)
    hmask_p = jnp.zeros((s_rows, d_pad), f32).at[:, :d].set(hmask_np).astype(compute_dtype)
    gsel = (np.arange(t_pad)[:, None] == (np.arange(s_rows) % n_tokens)[None, :])
    gsel = jnp.asarray(gsel, compute_dtype)                                    # (Tp, S)

    wkv = jnp.zeros((d_pad, 2 * d_pad), f32)
    wkv = wkv.at[:d, :d].set(jnp.asarray(Wk, f32))
    wkv = wkv.at[:d, d_pad:d_pad + d].set(jnp.asarray(Wv, f32)).astype(compute_dtype)
    wo_p = jnp.zeros((d_pad, d_pad), f32).at[:d, :d].set(jnp.asarray(Wo, f32))
    wo_p = wo_p.astype(compute_dtype)

    # Additive attention bias in f32 (0 keep / -1e30 drop); padded keys are dropped.
    if attention_mask is None:
        keep = jnp.ones((b, seq), bool)
    else:
        keep = attention_mask.astype(bool)
    if l_pad != seq:
        keep = jnp.concatenate([keep, jnp.zeros((b, l_pad - seq), bool)], axis=1)
    bias = jnp.where(keep, 0.0, -1e30).astype(f32)[:, None, :]                 # (B, 1, Lp)

    # x stays in its HBM dtype; the compute-dtype cast happens inside the kernel.
    if (l_pad, d_pad) != (seq, d):
        x_in = jnp.zeros((b, l_pad, d_pad), x.dtype).at[:, :seq, :d].set(x)
    else:
        x_in = x

    def _call(single_buffer_weights):
        const_kw = {"pipeline_mode": pl.Buffered(1)} if single_buffer_weights else {}

        def const(shape):
            return pl.BlockSpec(shape, lambda i, li: (0, 0), **const_kw)

        return pl.pallas_call(
            _attention_pooler_kernel,
            out_shape=jax.ShapeDtypeStruct((b * t_pad, d_pad), out_dtype),
            grid=(nb, nl),
            in_specs=[
                const((s_rows, d_pad)),                                 # q_exp
                const((s_rows, d_pad)),                                 # head mask
                const((t_pad, s_rows)),                                 # token-select / head-sum
                const((d_pad, 2 * d_pad)),                              # fused Wkv
                const((d_pad, d_pad)),                                  # Wo
                pl.BlockSpec((bb, lt, d_pad), lambda i, li: (i, li, 0)),  # x chunk
                pl.BlockSpec((bb, 1, lt), lambda i, li: (i, 0, li)),      # bias chunk
            ],
            out_specs=pl.BlockSpec((bb * t_pad, d_pad), lambda i, li: (i, 0)),
            scratch_shapes=[
                pltpu.VMEM((bb, s_rows, 1), jnp.float32),       # running max
                pltpu.VMEM((bb, s_rows, 1), jnp.float32),       # running denominator
                pltpu.VMEM((bb, s_rows, d_pad), jnp.float32),   # running context
            ],
            compiler_params=pltpu.CompilerParams(
                dimension_semantics=("parallel", "arbitrary"),
                vmem_limit_bytes=int(vmem_limit_bytes)),
        )(q_exp_p, hmask_p, gsel, wkv, wo_p, x_in, bias)

    try:
        out2d = _call(True)
    except Exception:
        out2d = _call(False)      # fall back if single-buffering is unsupported

    # Strip token / hidden padding outside the kernel (free XLA reshape/slice).
    return out2d.reshape(b, t_pad, d_pad)[:, :n_tokens, :d]


def attention_pooler_reference(x, params, n_heads, attention_mask=None):
    """Pure-JAX reference mirroring the PyTorch forward."""
    Q, Wq, Wk, Wv, Wo = params["Q"], params["Wq"], params["Wk"], params["Wv"], params["Wo"]
    b, seq, d = x.shape
    n_tokens = Q.shape[0]
    d_head = d // n_heads

    q = jnp.broadcast_to((Q @ Wq)[None], (b, n_tokens, d))
    k = x @ Wk
    v = x @ Wv

    def split_heads(t):  # 'b s (h d) -> b h s d'
        bb, s, _ = t.shape
        return t.reshape(bb, s, n_heads, d_head).transpose(0, 2, 1, 3)

    qh, kh, vh = split_heads(q), split_heads(k), split_heads(v)
    scores = jnp.einsum('bhsd,bhld->bhsl', qh, kh) / math.sqrt(d_head)
    if attention_mask is not None:
        m = attention_mask[:, None, None, :].astype(bool)
        scores = jnp.where(m, scores, -1e30)
    p = jax.nn.softmax(scores, axis=-1)
    out = jnp.einsum('bhsl,bhld->bhsd', p, vh)
    out = out.transpose(0, 2, 1, 3).reshape(b, n_tokens, d)   # 'b h s d -> b s (h d)'
    return out @ Wo


def _make_params(key, n_tokens, d):
    ks = jax.random.split(key, 5)
    return {
        "Q":  jax.random.normal(ks[0], (n_tokens, d), jnp.float32),
        "Wq": jax.random.normal(ks[1], (d, d), jnp.float32) / math.sqrt(d),
        "Wk": jax.random.normal(ks[2], (d, d), jnp.float32) / math.sqrt(d),
        "Wv": jax.random.normal(ks[3], (d, d), jnp.float32) / math.sqrt(d),
        "Wo": jax.random.normal(ks[4], (d, d), jnp.float32) / math.sqrt(d),
    }


if __name__ == "__main__":
    key = jax.random.PRNGKey(0)

    # ---- Test 1: small shape (D not 128-aligned -> exercises padding path). ----
    b, L, d = 4, 16, 32
    n_tokens, n_heads = 2, 4          # d_head = 8
    k0, k1, k2 = jax.random.split(key, 3)
    x = jax.random.normal(k0, (b, L, d), jnp.float32)
    params = _make_params(k1, n_tokens, d)
    attention_mask = (jax.random.uniform(k2, (b, L)) > 0.25).astype(jnp.int32)
    attention_mask = attention_mask.at[:, 0].set(1)   # avoid the all-masked NaN case

    ref = attention_pooler_reference(x, params, n_heads, attention_mask=attention_mask)

    out_bf16 = jax.block_until_ready(
        attention_pooler(x, params, n_heads, attention_mask=attention_mask))
    np.testing.assert_allclose(np.asarray(out_bf16), np.asarray(ref), rtol=8e-2, atol=8e-2)

    out_f32 = jax.block_until_ready(
        attention_pooler(x, params, n_heads, attention_mask=attention_mask,
                         compute_dtype=jnp.float32))
    np.testing.assert_allclose(np.asarray(out_f32), np.asarray(ref), rtol=2e-4, atol=2e-4)

    out_nm = jax.block_until_ready(
        attention_pooler(x, params, n_heads, compute_dtype=jnp.float32))
    ref_nm = attention_pooler_reference(x, params, n_heads)
    np.testing.assert_allclose(np.asarray(out_nm), np.asarray(ref_nm), rtol=2e-4, atol=2e-4)

    # ---- Test 2: longer sequence with a forced L chunk -> exercises the ----
    # ---- online-softmax accumulation across multiple L grid steps.       ----
    b2, L2, d2 = 2, 256, 128
    n_tokens2, n_heads2 = 1, 16       # d_head = 8
    k3, k4, k5 = jax.random.split(jax.random.PRNGKey(1), 3)
    x2 = jax.random.normal(k3, (b2, L2, d2), jnp.float32)
    params2 = _make_params(k4, n_tokens2, d2)
    mask2 = (jax.random.uniform(k5, (b2, L2)) > 0.3).astype(jnp.int32)
    mask2 = mask2.at[:, 0].set(1)

    ref2 = attention_pooler_reference(x2, params2, n_heads2, attention_mask=mask2)
    out2 = jax.block_until_ready(
        attention_pooler(x2, params2, n_heads2, attention_mask=mask2,
                         l_chunk=128, compute_dtype=jnp.float32))
    np.testing.assert_allclose(np.asarray(out2), np.asarray(ref2), rtol=2e-4, atol=2e-4)

    out2_fast = jax.block_until_ready(
        attention_pooler(x2, params2, n_heads2, attention_mask=mask2, l_chunk=128))
    np.testing.assert_allclose(np.asarray(out2_fast), np.asarray(ref2), rtol=8e-2, atol=8e-2)

    print("KERNEL_OK")
</pallas_src>

<mosaic_0001>
module attributes {stable_mosaic.version = 11 : i64} {
  func.func @_attention_pooler_kernel(%arg0: i32, %arg1: i32, %arg2: memref<8x128xbf16, #tpu.memory_space<vmem>>, %arg3: memref<8x128xbf16, #tpu.memory_space<vmem>>, %arg4: memref<8x8xbf16, #tpu.memory_space<vmem>>, %arg5: memref<128x256xbf16, #tpu.memory_space<vmem>>, %arg6: memref<128x128xbf16, #tpu.memory_space<vmem>>, %arg7: memref<2x16x128xf32, #tpu.memory_space<vmem>>, %arg8: memref<2x1x16xf32, #tpu.memory_space<vmem>>, %arg9: memref<16x128xf32, #tpu.memory_space<vmem>>, %arg10: memref<2x8x1xf32, #tpu.memory_space<vmem>>, %arg11: memref<2x8x1xf32, #tpu.memory_space<vmem>>, %arg12: memref<2x8x128xf32, #tpu.memory_space<vmem>>) attributes {dimension_semantics = [#tpu.dimension_semantics<parallel>, #tpu.dimension_semantics<arbitrary>], iteration_bounds = array<i64: 2, 1>, scalar_prefetch = 0 : i64, scratch_operands = 3 : i64, tpu.core_type = #tpu.core_type<tc>, window_params = [{pipeline_mode = #tpu.pipeline_mode<synchronous>, transform_indices = @transform_0, window_bounds = array<i64: 8, 128>}, {pipeline_mode = #tpu.pipeline_mode<synchronous>, transform_indices = @transform_1, window_bounds = array<i64: 8, 128>}, {pipeline_mode = #tpu.pipeline_mode<synchronous>, transform_indices = @transform_2, window_bounds = array<i64: 8, 8>}, {pipeline_mode = #tpu.pipeline_mode<synchronous>, transform_indices = @transform_3, window_bounds = array<i64: 128, 256>}, {pipeline_mode = #tpu.pipeline_mode<synchronous>, transform_indices = @transform_4, window_bounds = array<i64: 128, 128>}, {transform_indices = @transform_5, window_bounds = array<i64: 2, 16, 128>}, {transform_indices = @transform_6, window_bounds = array<i64: 2, 1, 16>}, {transform_indices = @transform_7, window_bounds = array<i64: 16, 128>}]} {
    %c0_i32 = arith.constant 0 : i32
    %0 = arith.cmpi eq, %arg1, %c0_i32 : i32
    %1 = arith.extui %0 : i1 to i32
    %c0_i32_0 = arith.constant 0 : i32
    %2 = arith.cmpi ne, %1, %c0_i32_0 : i32
    scf.if %2 {
      %cst_58 = arith.constant 0xFF800000 : f32
      %99 = vector.broadcast %cst_58 : f32 to vector<2x8x1xf32>
      %c0_59 = arith.constant 0 : index
      %c0_60 = arith.constant 0 : index
      %c0_61 = arith.constant 0 : index
      %100 = vector.load %arg10[%c0_59, %c0_60, %c0_61] : memref<2x8x1xf32, #tpu.memory_space<vmem>>, vector<2x8x1xf32>
      tpu.vector_store %arg10[%c0_59, %c0_60, %c0_61], %99 {strides = array<i32>} : memref<2x8x1xf32, #tpu.memory_space<vmem>>, vector<2x8x1xf32>,
      %cst_62 = arith.constant 0.000000e+00 : f32
      %101 = vector.broadcast %cst_62 : f32 to vector<2x8x1xf32>
      %c0_63 = arith.constant 0 : index
      %c0_64 = arith.constant 0 : index
      %c0_65 = arith.constant 0 : index
      %102 = vector.load %arg11[%c0_63, %c0_64, %c0_65] : memref<2x8x1xf32, #tpu.memory_space<vmem>>, vector<2x8x1xf32>
      tpu.vector_store %arg11[%c0_63, %c0_64, %c0_65], %101 {strides = array<i32>} : memref<2x8x1xf32, #tpu.memory_space<vmem>>, vector<2x8x1xf32>,
      %cst_66 = arith.constant 0.000000e+00 : f32
      %103 = vector.broadcast %cst_66 : f32 to vector<2x8x128xf32>
      %c0_67 = arith.constant 0 : index
      %c0_68 = arith.constant 0 : index
      %c0_69 = arith.constant 0 : index
      %104 = vector.load %arg12[%c0_67, %c0_68, %c0_69] : memref<2x8x128xf32, #tpu.memory_space<vmem>>, vector<2x8x128xf32>
      tpu.vector_store %arg12[%c0_67, %c0_68, %c0_69], %103 {strides = array<i32>} : memref<2x8x128xf32, #tpu.memory_space<vmem>>, vector<2x8x128xf32>,
    } else {
    }
    %c0 = arith.constant 0 : index
    %c0_1 = arith.constant 0 : index
    %c0_2 = arith.constant 0 : index
    %3 = vector.load %arg7[%c0, %c0_1, %c0_2] : memref<2x16x128xf32, #tpu.memory_space<vmem>>, vector<2x16x128xf32>
    %4 = arith.truncf %3 : vector<2x16x128xf32> to vector<2x16x128xbf16>
    %5 = vector.shape_cast %4 : vector<2x16x128xbf16> to vector<32x128xbf16>
    %c0_3 = arith.constant 0 : index
    %c0_4 = arith.constant 0 : index
    %6 = vector.load %arg5[%c0_3, %c0_4] : memref<128x256xbf16, #tpu.memory_space<vmem>>, vector<128x256xbf16>
    %cst = arith.constant dense<0.000000e+00> : vector<32x256xf32>
    %7 = tpu.matmul %5, %6, %cst {dimension_numbers = #tpu.dot_dimension_numbers<[1], [0], [0], [1], [0, 0, 1, 1], [], []>} : vector<32x128xbf16>, vector<128x256xbf16>, vector<32x256xf32> -> vector<32x256xf32>
    %8 = arith.truncf %7 : vector<32x256xf32> to vector<32x256xbf16>
    %9 = vector.extract_strided_slice %8 {offsets = [0, 0], sizes = [32, 128], strides = [1, 1]} : vector<32x256xbf16> to vector<32x128xbf16>
    %10 = vector.shape_cast %9 : vector<32x128xbf16> to vector<2x16x128xbf16>
    %11 = vector.extract_strided_slice %8 {offsets = [0, 128], sizes = [32, 128], strides = [1, 1]} : vector<32x256xbf16> to vector<32x128xbf16>
    %12 = vector.shape_cast %11 : vector<32x128xbf16> to vector<2x16x128xbf16>
    %c0_5 = arith.constant 0 : index
    %c0_6 = arith.constant 0 : index
    %13 = vector.load %arg2[%c0_5, %c0_6] : memref<8x128xbf16, #tpu.memory_space<vmem>>, vector<8x128xbf16>
    %14 = vector.extract_strided_slice %10 {offsets = [0, 0, 0], sizes = [1, 16, 128], strides = [1, 1, 1]} : vector<2x16x128xbf16> to vector<1x16x128xbf16>
    %15 = vector.shape_cast %14 : vector<1x16x128xbf16> to vector<16x128xbf16>
    %cst_7 = arith.constant dense<0.000000e+00> : vector<8x16xf32>
    %16 = tpu.matmul %13, %15, %cst_7 {dimension_numbers = #tpu.dot_dimension_numbers<[1], [1], [0], [0], [0, 0, 1, 0], [], []>} : vector<8x128xbf16>, vector<16x128xbf16>, vector<8x16xf32> -> vector<8x16xf32>
    %c0_8 = arith.constant 0 : index
    %c0_9 = arith.constant 0 : index
    %c0_10 = arith.constant 0 : index
    %17 = vector.load %arg8[%c0_8, %c0_9, %c0_10] : memref<2x1x16xf32, #tpu.memory_space<vmem>>, vector<1x1x16xf32>
    %18 = vector.shape_cast %17 : vector<1x1x16xf32> to vector<1x16xf32>
    %19 = vector.broadcast %18 : vector<1x16xf32> to vector<8x16xf32>
    %20 = arith.addf %16, %19 : vector<8x16xf32>
    %c0_11 = arith.constant 0 : index
    %c0_12 = arith.constant 0 : index
    %c0_13 = arith.constant 0 : index
    %21 = vector.load %arg10[%c0_11, %c0_12, %c0_13] : memref<2x8x1xf32, #tpu.memory_space<vmem>>, vector<1x8x1xf32>
    %22 = vector.shape_cast %21 : vector<1x8x1xf32> to vector<8x1xf32>
    %cst_14 = arith.constant dense<0xFF800000> : vector<8xf32>
    %23 = vector.multi_reduction <maximumf>, %20, %cst_14 [1] : vector<8x16xf32> to vector<8xf32>
    %24 = vector.shape_cast %23 : vector<8xf32> to vector<8x1xf32>
    %25 = arith.maximumf %22, %24 : vector<8x1xf32>
    %26 = arith.subf %22, %25 : vector<8x1xf32>
    %27 = math.exp %26 : vector<8x1xf32>
    %28 = vector.broadcast %25 : vector<8x1xf32> to vector<8x16xf32>
    %29 = arith.subf %20, %28 : vector<8x16xf32>
    %30 = math.exp %29 : vector<8x16xf32>
    %c0_15 = arith.constant 0 : index
    %c0_16 = arith.constant 0 : index
    %c0_17 = arith.constant 0 : index
    %31 = vector.load %arg11[%c0_15, %c0_16, %c0_17] : memref<2x8x1xf32, #tpu.memory_space<vmem>>, vector<1x8x1xf32>
    %32 = vector.shape_cast %31 : vector<1x8x1xf32> to vector<8x1xf32>
    %33 = arith.mulf %27, %32 : vector<8x1xf32>
    %cst_18 = arith.constant dense<0.000000e+00> : vector<8xf32>
    %34 = vector.multi_reduction <add>, %30, %cst_18 [1] : vector<8x16xf32> to vector<8xf32>
    %35 = vector.shape_cast %34 : vector<8xf32> to vector<8x1xf32>
    %36 = arith.addf %33, %35 : vector<8x1xf32>
    %c0_19 = arith.constant 0 : index
    %c0_20 = arith.constant 0 : index
    %c0_21 = arith.constant 0 : index
    %37 = vector.load %arg11[%c0_19, %c0_20, %c0_21] : memref<2x8x1xf32, #tpu.memory_space<vmem>>, vector<1x8x1xf32>
    %38 = vector.shape_cast %37 : vector<1x8x1xf32> to vector<8x1xf32>
    %39 = vector.shape_cast %36 : vector<8x1xf32> to vector<1x8x1xf32>
    tpu.vector_store %arg11[%c0_19, %c0_20, %c0_21], %39 {strides = array<i32>} : memref<2x8x1xf32, #tpu.memory_space<vmem>>, vector<1x8x1xf32>,
    %c0_22 = arith.constant 0 : index
    %c0_23 = arith.constant 0 : index
    %c0_24 = arith.constant 0 : index
    %40 = vector.load %arg12[%c0_22, %c0_23, %c0_24] : memref<2x8x128xf32, #tpu.memory_space<vmem>>, vector<1x8x128xf32>
    %41 = vector.shape_cast %40 : vector<1x8x128xf32> to vector<8x128xf32>
    %42 = vector.broadcast %27 : vector<8x1xf32> to vector<8x128xf32>
    %43 = arith.mulf %42, %41 : vector<8x128xf32>
    %44 = arith.truncf %30 : vector<8x16xf32> to vector<8x16xbf16>
    %45 = vector.extract_strided_slice %12 {offsets = [0, 0, 0], sizes = [1, 16, 128], strides = [1, 1, 1]} : vector<2x16x128xbf16> to vector<1x16x128xbf16>
    %46 = vector.shape_cast %45 : vector<1x16x128xbf16> to vector<16x128xbf16>
    %cst_25 = arith.constant dense<0.000000e+00> : vector<8x128xf32>
    %47 = tpu.matmul %44, %46, %cst_25 {dimension_numbers = #tpu.dot_dimension_numbers<[1], [0], [0], [1], [0, 0, 1, 1], [], []>} : vector<8x16xbf16>, vector<16x128xbf16>, vector<8x128xf32> -> vector<8x128xf32>
    %48 = arith.addf %43, %47 : vector<8x128xf32>
    %c0_26 = arith.constant 0 : index
    %c0_27 = arith.constant 0 : index
    %c0_28 = arith.constant 0 : index
    %49 = vector.load %arg12[%c0_26, %c0_27, %c0_28] : memref<2x8x128xf32, #tpu.memory_space<vmem>>, vector<1x8x128xf32>
    %50 = vector.shape_cast %49 : vector<1x8x128xf32> to vector<8x128xf32>
    %51 = vector.shape_cast %48 : vector<8x128xf32> to vector<1x8x128xf32>
    tpu.vector_store %arg12[%c0_26, %c0_27, %c0_28], %51 {strides = array<i32>} : memref<2x8x128xf32, #tpu.memory_space<vmem>>, vector<1x8x128xf32>,
    %c0_29 = arith.constant 0 : index
    %c0_30 = arith.constant 0 : index
    %c0_31 = arith.constant 0 : index
    %52 = vector.load %arg10[%c0_29, %c0_30, %c0_31] : memref<2x8x1xf32, #tpu.memory_space<vmem>>, vector<1x8x1xf32>
    %53 = vector.shape_cast %52 : vector<1x8x1xf32> to vector<8x1xf32>
    %54 = vector.shape_cast %25 : vector<8x1xf32> to vector<1x8x1xf32>
    tpu.vector_store %arg10[%c0_29, %c0_30, %c0_31], %54 {strides = array<i32>} : memref<2x8x1xf32, #tpu.memory_space<vmem>>, vector<1x8x1xf32>,
    %55 = vector.extract_strided_slice %10 {offsets = [1, 0, 0], sizes = [1, 16, 128], strides = [1, 1, 1]} : vector<2x16x128xbf16> to vector<1x16x128xbf16>
    %56 = vector.shape_cast %55 : vector<1x16x128xbf16> to vector<16x128xbf16>
    %cst_32 = arith.constant dense<0.000000e+00> : vector<8x16xf32>
    %57 = tpu.matmul %13, %56, %cst_32 {dimension_numbers = #tpu.dot_dimension_numbers<[1], [1], [0], [0], [0, 0, 1, 0], [], []>} : vector<8x128xbf16>, vector<16x128xbf16>, vector<8x16xf32> -> vector<8x16xf32>
    %c1 = arith.constant 1 : index
    %c0_33 = arith.constant 0 : index
    %c0_34 = arith.constant 0 : index
    %58 = vector.load %arg8[%c1, %c0_33, %c0_34] : memref<2x1x16xf32, #tpu.memory_space<vmem>>, vector<1x1x16xf32>
    %59 = vector.shape_cast %58 : vector<1x1x16xf32> to vector<1x16xf32>
    %60 = vector.broadcast %59 : vector<1x16xf32> to vector<8x16xf32>
    %61 = arith.addf %57, %60 : vector<8x16xf32>
    %c1_35 = arith.constant 1 : index
    %c0_36 = arith.constant 0 : index
    %c0_37 = arith.constant 0 : index
    %62 = vector.load %arg10[%c1_35, %c0_36, %c0_37] : memref<2x8x1xf32, #tpu.memory_space<vmem>>, vector<1x8x1xf32>
    %63 = vector.shape_cast %62 : vector<1x8x1xf32> to vector<8x1xf32>
    %cst_38 = arith.constant dense<0xFF800000> : vector<8xf32>
    %64 = vector.multi_reduction <maximumf>, %61, %cst_38 [1] : vector<8x16xf32> to vector<8xf32>
    %65 = vector.shape_cast %64 : vector<8xf32> to vector<8x1xf32>
    %66 = arith.maximumf %63, %65 : vector<8x1xf32>
    %67 = arith.subf %63, %66 : vector<8x1xf32>
    %68 = math.exp %67 : vector<8x1xf32>
    %69 = vector.broadcast %66 : vector<8x1xf32> to vector<8x16xf32>
    %70 = arith.subf %61, %69 : vector<8x16xf32>
    %71 = math.exp %70 : vector<8x16xf32>
    %c1_39 = arith.constant 1 : index
    %c0_40 = arith.constant 0 : index
    %c0_41 = arith.constant 0 : index
    %72 = vector.load %arg11[%c1_39, %c0_40, %c0_41] : memref<2x8x1xf32, #tpu.memory_space<vmem>>, vector<1x8x1xf32>
    %73 = vector.shape_cast %72 : vector<1x8x1xf32> to vector<8x1xf32>
    %74 = arith.mulf %68, %73 : vector<8x1xf32>
    %cst_42 = arith.constant dense<0.000000e+00> : vector<8xf32>
    %75 = vector.multi_reduction <add>, %71, %cst_42 [1] : vector<8x16xf32> to vector<8xf32>
    %76 = vector.shape_cast %75 : vector<8xf32> to vector<8x1xf32>
    %77 = arith.addf %74, %76 : vector<8x1xf32>
    %c1_43 = arith.constant 1 : index
    %c0_44 = arith.constant 0 : index
    %c0_45 = arith.constant 0 : index
    %78 = vector.load %arg11[%c1_43, %c0_44, %c0_45] : memref<2x8x1xf32, #tpu.memory_space<vmem>>, vector<1x8x1xf32>
    %79 = vector.shape_cast %78 : vector<1x8x1xf32> to vector<8x1xf32>
    %80 = vector.shape_cast %77 : vector<8x1xf32> to vector<1x8x1xf32>
    tpu.vector_store %arg11[%c1_43, %c0_44, %c0_45], %80 {strides = array<i32>} : memref<2x8x1xf32, #tpu.memory_space<vmem>>, vector<1x8x1xf32>,
    %c1_46 = arith.constant 1 : index
    %c0_47 = arith.constant 0 : index
    %c0_48 = arith.constant 0 : index
    %81 = vector.load %arg12[%c1_46, %c0_47, %c0_48] : memref<2x8x128xf32, #tpu.memory_space<vmem>>, vector<1x8x128xf32>
    %82 = vector.shape_cast %81 : vector<1x8x128xf32> to vector<8x128xf32>
    %83 = vector.broadcast %68 : vector<8x1xf32> to vector<8x128xf32>
    %84 = arith.mulf %83, %82 : vector<8x128xf32>
    %85 = arith.truncf %71 : vector<8x16xf32> to vector<8x16xbf16>
    %86 = vector.extract_strided_slice %12 {offsets = [1, 0, 0], sizes = [1, 16, 128], strides = [1, 1, 1]} : vector<2x16x128xbf16> to vector<1x16x128xbf16>
    %87 = vector.shape_cast %86 : vector<1x16x128xbf16> to vector<16x128xbf16>
    %cst_49 = arith.constant dense<0.000000e+00> : vector<8x128xf32>
    %88 = tpu.matmul %85, %87, %cst_49 {dimension_numbers = #tpu.dot_dimension_numbers<[1], [0], [0], [1], [0, 0, 1, 1], [], []>} : vector<8x16xbf16>, vector<16x128xbf16>, vector<8x128xf32> -> vector<8x128xf32>
    %89 = arith.addf %84, %88 : vector<8x128xf32>
    %c1_50 = arith.constant 1 : index
    %c0_51 = arith.constant 0 : index
    %c0_52 = arith.constant 0 : index
    %90 = vector.load %arg12[%c1_50, %c0_51, %c0_52] : memref<2x8x128xf32, #tpu.memory_space<vmem>>, vector<1x8x128xf32>
    %91 = vector.shape_cast %90 : vector<1x8x128xf32> to vector<8x128xf32>
    %92 = vector.shape_cast %89 : vector<8x128xf32> to vector<1x8x128xf32>
    tpu.vector_store %arg12[%c1_50, %c0_51, %c0_52], %92 {strides = array<i32>} : memref<2x8x128xf32, #tpu.memory_space<vmem>>, vector<1x8x128xf32>,
    %c1_53 = arith.constant 1 : index
    %c0_54 = arith.constant 0 : index
    %c0_55 = arith.constant 0 : index
    %93 = vector.load %arg10[%c1_53, %c0_54, %c0_55] : memref<2x8x1xf32, #tpu.memory_space<vmem>>, vector<1x8x1xf32>
    %94 = vector.shape_cast %93 : vector<1x8x1xf32> to vector<8x1xf32>
    %95 = vector.shape_cast %66 : vector<8x1xf32> to vector<1x8x1xf32>
    tpu.vector_store %arg10[%c1_53, %c0_54, %c0_55], %95 {strides = array<i32>} : memref<2x8x1xf32, #tpu.memory_space<vmem>>, vector<1x8x1xf32>,
    %c0_i32_56 = arith.constant 0 : i32
    %96 = arith.cmpi eq, %arg1, %c0_i32_56 : i32
    %97 = arith.extui %96 : i1 to i32
    %c0_i32_57 = arith.constant 0 : i32
    %98 = arith.cmpi ne, %97, %c0_i32_57 : i32
    scf.if %98 {
      %c0_58 = arith.constant 0 : index
      %c0_59 = arith.constant 0 : index
      %99 = vector.load %arg4[%c0_58, %c0_59] : memref<8x8xbf16, #tpu.memory_space<vmem>>, vector<8x8xbf16>
      %c0_60 = arith.constant 0 : index
      %c0_61 = arith.constant 0 : index
      %100 = vector.load %arg3[%c0_60, %c0_61] : memref<8x128xbf16, #tpu.memory_space<vmem>>, vector<8x128xbf16>
      %c0_62 = arith.constant 0 : index
      %c0_63 = arith.constant 0 : index
      %101 = vector.load %arg6[%c0_62, %c0_63] : memref<128x128xbf16, #tpu.memory_space<vmem>>, vector<128x128xbf16>
      %c0_64 = arith.constant 0 : index
      %c0_65 = arith.constant 0 : index
      %c0_66 = arith.constant 0 : index
      %102 = vector.load %arg11[%c0_64, %c0_65, %c0_66] : memref<2x8x1xf32, #tpu.memory_space<vmem>>, vector<1x8x1xf32>
      %103 = vector.shape_cast %102 : vector<1x8x1xf32> to vector<8x1xf32>
      %104 = tpu.reciprocal %103 {approx = true} : vector<8x1xf32> -> vector<8x1xf32>
      %c0_67 = arith.constant 0 : index
      %c0_68 = arith.constant 0 : index
      %c0_69 = arith.constant 0 : index
      %105 = vector.load %arg12[%c0_67, %c0_68, %c0_69] : memref<2x8x128xf32, #tpu.memory_space<vmem>>, vector<1x8x128xf32>
      %106 = vector.shape_cast %105 : vector<1x8x128xf32> to vector<8x128xf32>
      %107 = vector.broadcast %104 : vector<8x1xf32> to vector<8x128xf32>
      %108 = arith.mulf %106, %107 : vector<8x128xf32>
      %109 = arith.truncf %108 : vector<8x128xf32> to vector<8x128xbf16>
      %110 = arith.mulf %109, %100 : vector<8x128xbf16>
      %cst_70 = arith.constant dense<0.000000e+00> : vector<8x128xf32>
      %111 = tpu.matmul %99, %110, %cst_70 {dimension_numbers = #tpu.dot_dimension_numbers<[1], [0], [0], [1], [0, 0, 1, 1], [], []>} : vector<8x8xbf16>, vector<8x128xbf16>, vector<8x128xf32> -> vector<8x128xf32>
      %112 = arith.truncf %111 : vector<8x128xf32> to vector<8x128xbf16>
      %cst_71 = arith.constant dense<0.000000e+00> : vector<8x128xf32>
      %113 = tpu.matmul %112, %101, %cst_71 {dimension_numbers = #tpu.dot_dimension_numbers<[1], [0], [0], [1], [0, 0, 1, 1], [], []>} : vector<8x128xbf16>, vector<128x128xbf16>, vector<8x128xf32> -> vector<8x128xf32>
      %c0_72 = arith.constant 0 : index
      %c0_73 = arith.constant 0 : index
      %114 = vector.load %arg9[%c0_72, %c0_73] : memref<16x128xf32, #tpu.memory_space<vmem>>, vector<8x128xf32>
      tpu.vector_store %arg9[%c0_72, %c0_73], %113 {strides = array<i32>} : memref<16x128xf32, #tpu.memory_space<vmem>>, vector<8x128xf32>,
      %c1_74 = arith.constant 1 : index
      %c0_75 = arith.constant 0 : index
      %c0_76 = arith.constant 0 : index
      %115 = vector.load %arg11[%c1_74, %c0_75, %c0_76] : memref<2x8x1xf32, #tpu.memory_space<vmem>>, vector<1x8x1xf32>
      %116 = vector.shape_cast %115 : vector<1x8x1xf32> to vector<8x1xf32>
      %117 = tpu.reciprocal %116 {approx = true} : vector<8x1xf32> -> vector<8x1xf32>
      %c1_77 = arith.constant 1 : index
      %c0_78 = arith.constant 0 : index
      %c0_79 = arith.constant 0 : index
      %118 = vector.load %arg12[%c1_77, %c0_78, %c0_79] : memref<2x8x128xf32, #tpu.memory_space<vmem>>, vector<1x8x128xf32>
      %119 = vector.shape_cast %118 : vector<1x8x128xf32> to vector<8x128xf32>
      %120 = vector.broadcast %117 : vector<8x1xf32> to vector<8x128xf32>
      %121 = arith.mulf %119, %120 : vector<8x128xf32>
      %122 = arith.truncf %121 : vector<8x128xf32> to vector<8x128xbf16>
      %123 = arith.mulf %122, %100 : vector<8x128xbf16>
      %cst_80 = arith.constant dense<0.000000e+00> : vector<8x128xf32>
      %124 = tpu.matmul %99, %123, %cst_80 {dimension_numbers = #tpu.dot_dimension_numbers<[1], [0], [0], [1], [0, 0, 1, 1], [], []>} : vector<8x8xbf16>, vector<8x128xbf16>, vector<8x128xf32> -> vector<8x128xf32>
      %125 = arith.truncf %124 : vector<8x128xf32> to vector<8x128xbf16>
      %cst_81 = arith.constant dense<0.000000e+00> : vector<8x128xf32>
      %126 = tpu.matmul %125, %101, %cst_81 {dimension_numbers = #tpu.dot_dimension_numbers<[1], [0], [0], [1], [0, 0, 1, 1], [], []>} : vector<8x128xbf16>, vector<128x128xbf16>, vector<8x128xf32> -> vector<8x128xf32>
      %c8 = arith.constant 8 : index
      %c0_82 = arith.constant 0 : index
      %127 = vector.load %arg9[%c8, %c0_82] : memref<16x128xf32, #tpu.memory_space<vmem>>, vector<8x128xf32>
      tpu.vector_store %arg9[%c8, %c0_82], %126 {strides = array<i32>} : memref<16x128xf32, #tpu.memory_space<vmem>>, vector<8x128xf32>,
    } else {
    }
    return
  }
  func.func @transform_0(%arg0: i32, %arg1: i32) -> (i32, i32) {
    %c0_i32 = arith.constant 0 : i32
    %c0_i32_0 = arith.constant 0 : i32
    %c0_i32_1 = arith.constant 0 : i32
    return %c0_i32, %c0_i32_0 : i32, i32
  }
  func.func @transform_1(%arg0: i32, %arg1: i32) -> (i32, i32) {
    %c0_i32 = arith.constant 0 : i32
    %c0_i32_0 = arith.constant 0 : i32
    %c0_i32_1 = arith.constant 0 : i32
    return %c0_i32, %c0_i32_0 : i32, i32
  }
  func.func @transform_2(%arg0: i32, %arg1: i32) -> (i32, i32) {
    %c0_i32 = arith.constant 0 : i32
    %c0_i32_0 = arith.constant 0 : i32
    %c0_i32_1 = arith.constant 0 : i32
    return %c0_i32, %c0_i32_0 : i32, i32
  }
  func.func @transform_3(%arg0: i32, %arg1: i32) -> (i32, i32) {
    %c0_i32 = arith.constant 0 : i32
    %c0_i32_0 = arith.constant 0 : i32
    %c0_i32_1 = arith.constant 0 : i32
    return %c0_i32, %c0_i32_0 : i32, i32
  }
  func.func @transform_4(%arg0: i32, %arg1: i32) -> (i32, i32) {
    %c0_i32 = arith.constant 0 : i32
    %c0_i32_0 = arith.constant 0 : i32
    %c0_i32_1 = arith.constant 0 : i32
    return %c0_i32, %c0_i32_0 : i32, i32
  }
  func.func @transform_5(%arg0: i32, %arg1: i32) -> (i32, i32, i32) {
    %c0_i32 = arith.constant 0 : i32
    %c0_i32_0 = arith.constant 0 : i32
    return %arg0, %arg1, %c0_i32 : i32, i32, i32
  }
  func.func @transform_6(%arg0: i32, %arg1: i32) -> (i32, i32, i32) {
    %c0_i32 = arith.constant 0 : i32
    %c0_i32_0 = arith.constant 0 : i32
    return %arg0, %c0_i32, %arg1 : i32, i32, i32
  }
  func.func @transform_7(%arg0: i32, %arg1: i32) -> (i32, i32) {
    %c0_i32 = arith.constant 0 : i32
    %c0_i32_0 = arith.constant 0 : i32
    return %arg0, %c0_i32 : i32, i32
  }
}

module attributes {stable_mosaic.version = 11 : i64} {
  func.func @_attention_pooler_kernel(%arg0: i32, %arg1: i32, %arg2: memref<8x128xbf16, #tpu.memory_space<vmem>>, %arg3: memref<8x128xbf16, #tpu.memory_space<vmem>>, %arg4: memref<8x8xbf16, #tpu.memory_space<vmem>>, %arg5: memref<128x256xbf16, #tpu.memory_space<vmem>>, %arg6: memref<128x128xbf16, #tpu.memory_space<vmem>>, %arg7: memref<2x16x128xf32, #tpu.memory_space<vmem>>, %arg8: memref<2x1x16xf32, #tpu.memory_space<vmem>>, %arg9: memref<16x128xf32, #tpu.memory_space<vmem>>, %arg10: memref<2x8x1xf32, #tpu.memory_space<vmem>>, %arg11: memref<2x8x1xf32, #tpu.memory_space<vmem>>, %arg12: memref<2x8x128xf32, #tpu.memory_space<vmem>>) attributes {dimension_semantics = [#tpu.dimension_semantics<parallel>, #tpu.dimension_semantics<arbitrary>], iteration_bounds = array<i64: 2, 1>, scalar_prefetch = 0 : i64, scratch_operands = 3 : i64, tpu.core_type = #tpu.core_type<tc>, window_params = [{pipeline_mode = #tpu.pipeline_mode<synchronous>, transform_indices = @transform_0, window_bounds = array<i64: 8, 128>}, {pipeline_mode = #tpu.pipeline_mode<synchronous>, transform_indices = @transform_1, window_bounds = array<i64: 8, 128>}, {pipeline_mode = #tpu.pipeline_mode<synchronous>, transform_indices = @transform_2, window_bounds = array<i64: 8, 8>}, {pipeline_mode = #tpu.pipeline_mode<synchronous>, transform_indices = @transform_3, window_bounds = array<i64: 128, 256>}, {pipeline_mode = #tpu.pipeline_mode<synchronous>, transform_indices = @transform_4, window_bounds = array<i64: 128, 128>}, {transform_indices = @transform_5, window_bounds = array<i64: 2, 16, 128>}, {transform_indices = @transform_6, window_bounds = array<i64: 2, 1, 16>}, {transform_indices = @transform_7, window_bounds = array<i64: 16, 128>}]} {
    %c0_i32 = arith.constant 0 : i32
    %0 = arith.cmpi eq, %arg1, %c0_i32 : i32
    %1 = arith.extui %0 : i1 to i32
    %c0_i32_0 = arith.constant 0 : i32
    %2 = arith.cmpi ne, %1, %c0_i32_0 : i32
    scf.if %2 {
      %cst_58 = arith.constant 0xFF800000 : f32
      %99 = vector.broadcast %cst_58 : f32 to vector<2x8x1xf32>
      %c0_59 = arith.constant 0 : index
      %c0_60 = arith.constant 0 : index
      %c0_61 = arith.constant 0 : index
      %100 = vector.load %arg10[%c0_59, %c0_60, %c0_61] : memref<2x8x1xf32, #tpu.memory_space<vmem>>, vector<2x8x1xf32>
      tpu.vector_store %arg10[%c0_59, %c0_60, %c0_61], %99 {strides = array<i32>} : memref<2x8x1xf32, #tpu.memory_space<vmem>>, vector<2x8x1xf32>,
      %cst_62 = arith.constant 0.000000e+00 : f32
      %101 = vector.broadcast %cst_62 : f32 to vector<2x8x1xf32>
      %c0_63 = arith.constant 0 : index
      %c0_64 = arith.constant 0 : index
      %c0_65 = arith.constant 0 : index
      %102 = vector.load %arg11[%c0_63, %c0_64, %c0_65] : memref<2x8x1xf32, #tpu.memory_space<vmem>>, vector<2x8x1xf32>
      tpu.vector_store %arg11[%c0_63, %c0_64, %c0_65], %101 {strides = array<i32>} : memref<2x8x1xf32, #tpu.memory_space<vmem>>, vector<2x8x1xf32>,
      %cst_66 = arith.constant 0.000000e+00 : f32
      %103 = vector.broadcast %cst_66 : f32 to vector<2x8x128xf32>
      %c0_67 = arith.constant 0 : index
      %c0_68 = arith.constant 0 : index
      %c0_69 = arith.constant 0 : index
      %104 = vector.load %arg12[%c0_67, %c0_68, %c0_69] : memref<2x8x128xf32, #tpu.memory_space<vmem>>, vector<2x8x128xf32>
      tpu.vector_store %arg12[%c0_67, %c0_68, %c0_69], %103 {strides = array<i32>} : memref<2x8x128xf32, #tpu.memory_space<vmem>>, vector<2x8x128xf32>,
    } else {
    }
    %c0 = arith.constant 0 : index
    %c0_1 = arith.constant 0 : index
    %c0_2 = arith.constant 0 : index
    %3 = vector.load %arg7[%c0, %c0_1, %c0_2] : memref<2x16x128xf32, #tpu.memory_space<vmem>>, vector<2x16x128xf32>
    %4 = arith.truncf %3 : vector<2x16x128xf32> to vector<2x16x128xbf16>
    %5 = vector.shape_cast %4 : vector<2x16x128xbf16> to vector<32x128xbf16>
    %c0_3 = arith.constant 0 : index
    %c0_4 = arith.constant 0 : index
    %6 = vector.load %arg5[%c0_3, %c0_4] : memref<128x256xbf16, #tpu.memory_space<vmem>>, vector<128x256xbf16>
    %cst = arith.constant dense<0.000000e+00> : vector<32x256xf32>
    %7 = tpu.matmul %5, %6, %cst {dimension_numbers = #tpu.dot_dimension_numbers<[1], [0], [0], [1], [0, 0, 1, 1], [], []>} : vector<32x128xbf16>, vector<128x256xbf16>, vector<32x256xf32> -> vector<32x256xf32>
    %8 = arith.truncf %7 : vector<32x256xf32> to vector<32x256xbf16>
    %9 = vector.extract_strided_slice %8 {offsets = [0, 0], sizes = [32, 128], strides = [1, 1]} : vector<32x256xbf16> to vector<32x128xbf16>
    %10 = vector.shape_cast %9 : vector<32x128xbf16> to vector<2x16x128xbf16>
    %11 = vector.extract_strided_slice %8 {offsets = [0, 128], sizes = [32, 128], strides = [1, 1]} : vector<32x256xbf16> to vector<32x128xbf16>
    %12 = vector.shape_cast %11 : vector<32x128xbf16> to vector<2x16x128xbf16>
    %c0_5 = arith.constant 0 : index
    %c0_6 = arith.constant 0 : index
    %13 = vector.load %arg2[%c0_5, %c0_6] : memref<8x128xbf16, #tpu.memory_space<vmem>>, vector<8x128xbf16>
    %14 = vector.extract_strided_slice %10 {offsets = [0, 0, 0], sizes = [1, 16, 128], strides = [1, 1, 1]} : vector<2x16x128xbf16> to vector<1x16x128xbf16>
    %15 = vector.shape_cast %14 : vector<1x16x128xbf16> to vector<16x128xbf16>
    %cst_7 = arith.constant dense<0.000000e+00> : vector<8x16xf32>
    %16 = tpu.matmul %13, %15, %cst_7 {dimension_numbers = #tpu.dot_dimension_numbers<[1], [1], [0], [0], [0, 0, 1, 0], [], []>} : vector<8x128xbf16>, vector<16x128xbf16>, vector<8x16xf32> -> vector<8x16xf32>
    %c0_8 = arith.constant 0 : index
    %c0_9 = arith.constant 0 : index
    %c0_10 = arith.constant 0 : index
    %17 = vector.load %arg8[%c0_8, %c0_9, %c0_10] : memref<2x1x16xf32, #tpu.memory_space<vmem>>, vector<1x1x16xf32>
    %18 = vector.shape_cast %17 : vector<1x1x16xf32> to vector<1x16xf32>
    %19 = vector.broadcast %18 : vector<1x16xf32> to vector<8x16xf32>
    %20 = arith.addf %16, %19 : vector<8x16xf32>
    %c0_11 = arith.constant 0 : index
    %c0_12 = arith.constant 0 : index
    %c0_13 = arith.constant 0 : index
    %21 = vector.load %arg10[%c0_11, %c0_12, %c0_13] : memref<2x8x1xf32, #tpu.memory_space<vmem>>, vector<1x8x1xf32>
    %22 = vector.shape_cast %21 : vector<1x8x1xf32> to vector<8x1xf32>
    %cst_14 = arith.constant dense<0xFF800000> : vector<8xf32>
    %23 = vector.multi_reduction <maximumf>, %20, %cst_14 [1] : vector<8x16xf32> to vector<8xf32>
    %24 = vector.shape_cast %23 : vector<8xf32> to vector<8x1xf32>
    %25 = arith.maximumf %22, %24 : vector<8x1xf32>
    %26 = arith.subf %22, %25 : vector<8x1xf32>
    %27 = math.exp %26 : vector<8x1xf32>
    %28 = vector.broadcast %25 : vector<8x1xf32> to vector<8x16xf32>
    %29 = arith.subf %20, %28 : vector<8x16xf32>
    %30 = math.exp %29 : vector<8x16xf32>
    %c0_15 = arith.constant 0 : index
    %c0_16 = arith.constant 0 : index
    %c0_17 = arith.constant 0 : index
    %31 = vector.load %arg11[%c0_15, %c0_16, %c0_17] : memref<2x8x1xf32, #tpu.memory_space<vmem>>, vector<1x8x1xf32>
    %32 = vector.shape_cast %31 : vector<1x8x1xf32> to vector<8x1xf32>
    %33 = arith.mulf %27, %32 : vector<8x1xf32>
    %cst_18 = arith.constant dense<0.000000e+00> : vector<8xf32>
    %34 = vector.multi_reduction <add>, %30, %cst_18 [1] : vector<8x16xf32> to vector<8xf32>
    %35 = vector.shape_cast %34 : vector<8xf32> to vector<8x1xf32>
    %36 = arith.addf %33, %35 : vector<8x1xf32>
    %c0_19 = arith.constant 0 : index
    %c0_20 = arith.constant 0 : index
    %c0_21 = arith.constant 0 : index
    %37 = vector.load %arg11[%c0_19, %c0_20, %c0_21] : memref<2x8x1xf32, #tpu.memory_space<vmem>>, vector<1x8x1xf32>
    %38 = vector.shape_cast %37 : vector<1x8x1xf32> to vector<8x1xf32>
    %39 = vector.shape_cast %36 : vector<8x1xf32> to vector<1x8x1xf32>
    tpu.vector_store %arg11[%c0_19, %c0_20, %c0_21], %39 {strides = array<i32>} : memref<2x8x1xf32, #tpu.memory_space<vmem>>, vector<1x8x1xf32>,
    %c0_22 = arith.constant 0 : index
    %c0_23 = arith.constant 0 : index
    %c0_24 = arith.constant 0 : index
    %40 = vector.load %arg12[%c0_22, %c0_23, %c0_24] : memref<2x8x128xf32, #tpu.memory_space<vmem>>, vector<1x8x128xf32>
    %41 = vector.shape_cast %40 : vector<1x8x128xf32> to vector<8x128xf32>
    %42 = vector.broadcast %27 : vector<8x1xf32> to vector<8x128xf32>
    %43 = arith.mulf %42, %41 : vector<8x128xf32>
    %44 = arith.truncf %30 : vector<8x16xf32> to vector<8x16xbf16>
    %45 = vector.extract_strided_slice %12 {offsets = [0, 0, 0], sizes = [1, 16, 128], strides = [1, 1, 1]} : vector<2x16x128xbf16> to vector<1x16x128xbf16>
    %46 = vector.shape_cast %45 : vector<1x16x128xbf16> to vector<16x128xbf16>
    %cst_25 = arith.constant dense<0.000000e+00> : vector<8x128xf32>
    %47 = tpu.matmul %44, %46, %cst_25 {dimension_numbers = #tpu.dot_dimension_numbers<[1], [0], [0], [1], [0, 0, 1, 1], [], []>} : vector<8x16xbf16>, vector<16x128xbf16>, vector<8x128xf32> -> vector<8x128xf32>
    %48 = arith.addf %43, %47 : vector<8x128xf32>
    %c0_26 = arith.constant 0 : index
    %c0_27 = arith.constant 0 : index
    %c0_28 = arith.constant 0 : index
    %49 = vector.load %arg12[%c0_26, %c0_27, %c0_28] : memref<2x8x128xf32, #tpu.memory_space<vmem>>, vector<1x8x128xf32>
    %50 = vector.shape_cast %49 : vector<1x8x128xf32> to vector<8x128xf32>
    %51 = vector.shape_cast %48 : vector<8x128xf32> to vector<1x8x128xf32>
    tpu.vector_store %arg12[%c0_26, %c0_27, %c0_28], %51 {strides = array<i32>} : memref<2x8x128xf32, #tpu.memory_space<vmem>>, vector<1x8x128xf32>,
    %c0_29 = arith.constant 0 : index
    %c0_30 = arith.constant 0 : index
    %c0_31 = arith.constant 0 : index
    %52 = vector.load %arg10[%c0_29, %c0_30, %c0_31] : memref<2x8x1xf32, #tpu.memory_space<vmem>>, vector<1x8x1xf32>
    %53 = vector.shape_cast %52 : vector<1x8x1xf32> to vector<8x1xf32>
    %54 = vector.shape_cast %25 : vector<8x1xf32> to vector<1x8x1xf32>
    tpu.vector_store %arg10[%c0_29, %c0_30, %c0_31], %54 {strides = array<i32>} : memref<2x8x1xf32, #tpu.memory_space<vmem>>, vector<1x8x1xf32>,
    %55 = vector.extract_strided_slice %10 {offsets = [1, 0, 0], sizes = [1, 16, 128], strides = [1, 1, 1]} : vector<2x16x128xbf16> to vector<1x16x128xbf16>
    %56 = vector.shape_cast %55 : vector<1x16x128xbf16> to vector<16x128xbf16>
    %cst_32 = arith.constant dense<0.000000e+00> : vector<8x16xf32>
    %57 = tpu.matmul %13, %56, %cst_32 {dimension_numbers = #tpu.dot_dimension_numbers<[1], [1], [0], [0], [0, 0, 1, 0], [], []>} : vector<8x128xbf16>, vector<16x128xbf16>, vector<8x16xf32> -> vector<8x16xf32>
    %c1 = arith.constant 1 : index
    %c0_33 = arith.constant 0 : index
    %c0_34 = arith.constant 0 : index
    %58 = vector.load %arg8[%c1, %c0_33, %c0_34] : memref<2x1x16xf32, #tpu.memory_space<vmem>>, vector<1x1x16xf32>
    %59 = vector.shape_cast %58 : vector<1x1x16xf32> to vector<1x16xf32>
    %60 = vector.broadcast %59 : vector<1x16xf32> to vector<8x16xf32>
    %61 = arith.addf %57, %60 : vector<8x16xf32>
    %c1_35 = arith.constant 1 : index
    %c0_36 = arith.constant 0 : index
    %c0_37 = arith.constant 0 : index
    %62 = vector.load %arg10[%c1_35, %c0_36, %c0_37] : memref<2x8x1xf32, #tpu.memory_space<vmem>>, vector<1x8x1xf32>
    %63 = vector.shape_cast %62 : vector<1x8x1xf32> to vector<8x1xf32>
    %cst_38 = arith.constant dense<0xFF800000> : vector<8xf32>
    %64 = vector.multi_reduction <maximumf>, %61, %cst_38 [1] : vector<8x16xf32> to vector<8xf32>
    %65 = vector.shape_cast %64 : vector<8xf32> to vector<8x1xf32>
    %66 = arith.maximumf %63, %65 : vector<8x1xf32>
    %67 = arith.subf %63, %66 : vector<8x1xf32>
    %68 = math.exp %67 : vector<8x1xf32>
    %69 = vector.broadcast %66 : vector<8x1xf32> to vector<8x16xf32>
    %70 = arith.subf %61, %69 : vector<8x16xf32>
    %71 = math.exp %70 : vector<8x16xf32>
    %c1_39 = arith.constant 1 : index
    %c0_40 = arith.constant 0 : index
    %c0_41 = arith.constant 0 : index
    %72 = vector.load %arg11[%c1_39, %c0_40, %c0_41] : memref<2x8x1xf32, #tpu.memory_space<vmem>>, vector<1x8x1xf32>
    %73 = vector.shape_cast %72 : vector<1x8x1xf32> to vector<8x1xf32>
    %74 = arith.mulf %68, %73 : vector<8x1xf32>
    %cst_42 = arith.constant dense<0.000000e+00> : vector<8xf32>
    %75 = vector.multi_reduction <add>, %71, %cst_42 [1] : vector<8x16xf32> to vector<8xf32>
    %76 = vector.shape_cast %75 : vector<8xf32> to vector<8x1xf32>
    %77 = arith.addf %74, %76 : vector<8x1xf32>
    %c1_43 = arith.constant 1 : index
    %c0_44 = arith.constant 0 : index
    %c0_45 = arith.constant 0 : index
    %78 = vector.load %arg11[%c1_43, %c0_44, %c0_45] : memref<2x8x1xf32, #tpu.memory_space<vmem>>, vector<1x8x1xf32>
    %79 = vector.shape_cast %78 : vector<1x8x1xf32> to vector<8x1xf32>
    %80 = vector.shape_cast %77 : vector<8x1xf32> to vector<1x8x1xf32>
    tpu.vector_store %arg11[%c1_43, %c0_44, %c0_45], %80 {strides = array<i32>} : memref<2x8x1xf32, #tpu.memory_space<vmem>>, vector<1x8x1xf32>,
    %c1_46 = arith.constant 1 : index
    %c0_47 = arith.constant 0 : index
    %c0_48 = arith.constant 0 : index
    %81 = vector.load %arg12[%c1_46, %c0_47, %c0_48] : memref<2x8x128xf32, #tpu.memory_space<vmem>>, vector<1x8x128xf32>
    %82 = vector.shape_cast %81 : vector<1x8x128xf32> to vector<8x128xf32>
    %83 = vector.broadcast %68 : vector<8x1xf32> to vector<8x128xf32>
    %84 = arith.mulf %83, %82 : vector<8x128xf32>
    %85 = arith.truncf %71 : vector<8x16xf32> to vector<8x16xbf16>
    %86 = vector.extract_strided_slice %12 {offsets = [1, 0, 0], sizes = [1, 16, 128], strides = [1, 1, 1]} : vector<2x16x128xbf16> to vector<1x16x128xbf16>
    %87 = vector.shape_cast %86 : vector<1x16x128xbf16> to vector<16x128xbf16>
    %cst_49 = arith.constant dense<0.000000e+00> : vector<8x128xf32>
    %88 = tpu.matmul %85, %87, %cst_49 {dimension_numbers = #tpu.dot_dimension_numbers<[1], [0], [0], [1], [0, 0, 1, 1], [], []>} : vector<8x16xbf16>, vector<16x128xbf16>, vector<8x128xf32> -> vector<8x128xf32>
    %89 = arith.addf %84, %88 : vector<8x128xf32>
    %c1_50 = arith.constant 1 : index
    %c0_51 = arith.constant 0 : index
    %c0_52 = arith.constant 0 : index
    %90 = vector.load %arg12[%c1_50, %c0_51, %c0_52] : memref<2x8x128xf32, #tpu.memory_space<vmem>>, vector<1x8x128xf32>
    %91 = vector.shape_cast %90 : vector<1x8x128xf32> to vector<8x128xf32>
    %92 = vector.shape_cast %89 : vector<8x128xf32> to vector<1x8x128xf32>
    tpu.vector_store %arg12[%c1_50, %c0_51, %c0_52], %92 {strides = array<i32>} : memref<2x8x128xf32, #tpu.memory_space<vmem>>, vector<1x8x128xf32>,
    %c1_53 = arith.constant 1 : index
    %c0_54 = arith.constant 0 : index
    %c0_55 = arith.constant 0 : index
    %93 = vector.load %arg10[%c1_53, %c0_54, %c0_55] : memref<2x8x1xf32, #tpu.memory_space<vmem>>, vector<1x8x1xf32>
    %94 = vector.shape_cast %93 : vector<1x8x1xf32> to vector<8x1xf32>
    %95 = vector.shape_cast %66 : vector<8x1xf32> to vector<1x8x1xf32>
    tpu.vector_store %arg10[%c1_53, %c0_54, %c0_55], %95 {strides = array<i32>} : memref<2x8x1xf32, #tpu.memory_space<vmem>>, vector<1x8x1xf32>,
    %c0_i32_56 = arith.constant 0 : i32
    %96 = arith.cmpi eq, %arg1, %c0_i32_56 : i32
    %97 = arith.extui %96 : i1 to i32
    %c0_i32_57 = arith.constant 0 : i32
    %98 = arith.cmpi ne, %97, %c0_i32_57 : i32
    scf.if %98 {
      %c0_58 = arith.constant 0 : index
      %c0_59 = arith.constant 0 : index
      %99 = vector.load %arg4[%c0_58, %c0_59] : memref<8x8xbf16, #tpu.memory_space<vmem>>, vector<8x8xbf16>
      %c0_60 = arith.constant 0 : index
      %c0_61 = arith.constant 0 : index
      %100 = vector.load %arg3[%c0_60, %c0_61] : memref<8x128xbf16, #tpu.memory_space<vmem>>, vector<8x128xbf16>
      %c0_62 = arith.constant 0 : index
      %c0_63 = arith.constant 0 : index
      %101 = vector.load %arg6[%c0_62, %c0_63] : memref<128x128xbf16, #tpu.memory_space<vmem>>, vector<128x128xbf16>
      %c0_64 = arith.constant 0 : index
      %c0_65 = arith.constant 0 : index
      %c0_66 = arith.constant 0 : index
      %102 = vector.load %arg11[%c0_64, %c0_65, %c0_66] : memref<2x8x1xf32, #tpu.memory_space<vmem>>, vector<1x8x1xf32>
      %103 = vector.shape_cast %102 : vector<1x8x1xf32> to vector<8x1xf32>
      %104 = tpu.reciprocal %103 {approx = true} : vector<8x1xf32> -> vector<8x1xf32>
      %c0_67 = arith.constant 0 : index
      %c0_68 = arith.constant 0 : index
      %c0_69 = arith.constant 0 : index
      %105 = vector.load %arg12[%c0_67, %c0_68, %c0_69] : memref<2x8x128xf32, #tpu.memory_space<vmem>>, vector<1x8x128xf32>
      %106 = vector.shape_cast %105 : vector<1x8x128xf32> to vector<8x128xf32>
      %107 = vector.broadcast %104 : vector<8x1xf32> to vector<8x128xf32>
      %108 = arith.mulf %106, %107 : vector<8x128xf32>
      %109 = arith.truncf %108 : vector<8x128xf32> to vector<8x128xbf16>
      %110 = arith.mulf %109, %100 : vector<8x128xbf16>
      %cst_70 = arith.constant dense<0.000000e+00> : vector<8x128xf32>
      %111 = tpu.matmul %99, %110, %cst_70 {dimension_numbers = #tpu.dot_dimension_numbers<[1], [0], [0], [1], [0, 0, 1, 1], [], []>} : vector<8x8xbf16>, vector<8x128xbf16>, vector<8x128xf32> -> vector<8x128xf32>
      %112 = arith.truncf %111 : vector<8x128xf32> to vector<8x128xbf16>
      %cst_71 = arith.constant dense<0.000000e+00> : vector<8x128xf32>
      %113 = tpu.matmul %112, %101, %cst_71 {dimension_numbers = #tpu.dot_dimension_numbers<[1], [0], [0], [1], [0, 0, 1, 1], [], []>} : vector<8x128xbf16>, vector<128x128xbf16>, vector<8x128xf32> -> vector<8x128xf32>
      %c0_72 = arith.constant 0 : index
      %c0_73 = arith.constant 0 : index
      %114 = vector.load %arg9[%c0_72, %c0_73] : memref<16x128xf32, #tpu.memory_space<vmem>>, vector<8x128xf32>
      tpu.vector_store %arg9[%c0_72, %c0_73], %113 {strides = array<i32>} : memref<16x128xf32, #tpu.memory_space<vmem>>, vector<8x128xf32>,
      %c1_74 = arith.constant 1 : index
      %c0_75 = arith.constant 0 : index
      %c0_76 = arith.constant 0 : index
      %115 = vector.load %arg11[%c1_74, %c0_75, %c0_76] : memref<2x8x1xf32, #tpu.memory_space<vmem>>, vector<1x8x1xf32>
      %116 = vector.shape_cast %115 : vector<1x8x1xf32> to vector<8x1xf32>
      %117 = tpu.reciprocal %116 {approx = true} : vector<8x1xf32> -> vector<8x1xf32>
      %c1_77 = arith.constant 1 : index
      %c0_78 = arith.constant 0 : index
      %c0_79 = arith.constant 0 : index
      %118 = vector.load %arg12[%c1_77, %c0_78, %c0_79] : memref<2x8x128xf32, #tpu.memory_space<vmem>>, vector<1x8x128xf32>
      %119 = vector.shape_cast %118 : vector<1x8x128xf32> to vector<8x128xf32>
      %120 = vector.broadcast %117 : vector<8x1xf32> to vector<8x128xf32>
      %121 = arith.mulf %119, %120 : vector<8x128xf32>
      %122 = arith.truncf %121 : vector<8x128xf32> to vector<8x128xbf16>
      %123 = arith.mulf %122, %100 : vector<8x128xbf16>
      %cst_80 = arith.constant dense<0.000000e+00> : vector<8x128xf32>
      %124 = tpu.matmul %99, %123, %cst_80 {dimension_numbers = #tpu.dot_dimension_numbers<[1], [0], [0], [1], [0, 0, 1, 1], [], []>} : vector<8x8xbf16>, vector<8x128xbf16>, vector<8x128xf32> -> vector<8x128xf32>
      %125 = arith.truncf %124 : vector<8x128xf32> to vector<8x128xbf16>
      %cst_81 = arith.constant dense<0.000000e+00> : vector<8x128xf32>
      %126 = tpu.matmul %125, %101, %cst_81 {dimension_numbers = #tpu.dot_dimension_numbers<[1], [0], [0], [1], [0, 0, 1, 1], [], []>} : vector<8x128xbf16>, vector<128x128xbf16>, vector<8x128xf32> -> vector<8x128xf32>
      %c8 = arith.constant 8 : index
      %c0_82 = arith.constant 0 : index
      %127 = vector.load %arg9[%c8, %c0_82] : memref<16x128xf32, #tpu.memory_space<vmem>>, vector<8x128xf32>
      tpu.vector_store %arg9[%c8, %c0_82], %126 {strides = array<i32>} : memref<16x128xf32, #tpu.memory_space<vmem>>, vector<8x128xf32>,
    } else {
    }
    return
  }
  func.func @transform_0(%arg0: i32, %arg1: i32) -> (i32, i32) {
    %c0_i32 = arith.constant 0 : i32
    %c0_i32_0 = arith.constant 0 : i32
    %c0_i32_1 = arith.constant 0 : i32
    return %c0_i32, %c0_i32_0 : i32, i32
  }
  func.func @transform_1(%arg0: i32, %arg1: i32) -> (i32, i32) {
    %c0_i32 = arith.constant 0 : i32
    %c0_i32_0 = arith.constant 0 : i32
    %c0_i32_1 = arith.constant 0 : i32
    return %c0_i32, %c0_i32_0 : i32, i32
  }
  func.func @transform_2(%arg0: i32, %arg1: i32) -> (i32, i32) {
    %c0_i32 = arith.constant 0 : i32
    %c0_i32_0 = arith.constant 0 : i32
    %c0_i32_1 = arith.constant 0 : i32
    return %c0_i32, %c0_i32_0 : i32, i32
  }
  func.func @transform_3(%arg0: i32, %arg1: i32) -> (i32, i32) {
    %c0_i32 = arith.constant 0 : i32
    %c0_i32_0 = arith.constant 0 : i32
    %c0_i32_1 = arith.constant 0 : i32
    return %c0_i32, %c0_i32_0 : i32, i32
  }
  func.func @transform_4(%arg0: i32, %arg1: i32) -> (i32, i32) {
    %c0_i32 = arith.constant 0 : i32
    %c0_i32_0 = arith.constant 0 : i32
    %c0_i32_1 = arith.constant 0 : i32
    return %c0_i32, %c0_i32_0 : i32, i32
  }
  func.func @transform_5(%arg0: i32, %arg1: i32) -> (i32, i32, i32) {
    %c0_i32 = arith.constant 0 : i32
    %c0_i32_0 = arith.constant 0 : i32
    return %arg0, %arg1, %c0_i32 : i32, i32, i32
  }
  func.func @transform_6(%arg0: i32, %arg1: i32) -> (i32, i32, i32) {
    %c0_i32 = arith.constant 0 : i32
    %c0_i32_0 = arith.constant 0 : i32
    return %arg0, %c0_i32, %arg1 : i32, i32, i32
  }
  func.func @transform_7(%arg0: i32, %arg1: i32) -> (i32, i32) {
    %c0_i32 = arith.constant 0 : i32
    %c0_i32_0 = arith.constant 0 : i32
    return %arg0, %c0_i32 : i32, i32
  }
}

</mosaic_0001>

<llo_original>
// kernel: tpu_custom_call.1
$region0: #{tpu_custom_call.1}
  #allocation0 [shape = 'u32[]', space=smem, size = 0x4, offset = 0x4, fixed_abs, tag = 'smem constant byte address 0x4 - core index']
  #allocation1 [shape = 'u32[144,128]{1,0:T(1,128)}', space=vmem, size = 0x12000, scoped, tag = 'internal scratch']
  #allocation2 [shape = 'f32[2,8,1]{2,1,0:T(8,128)}', space=vmem, size = 0x2000, scoped, tag = 'scratch operand']
  #allocation3 [shape = 'f32[2,8,1]{2,1,0:T(8,128)}', space=vmem, size = 0x2000, scoped, tag = 'scratch operand']
  #allocation4 [shape = 'f32[2,8,128]{2,1,0:T(8,128)}', space=vmem, size = 0x2000, scoped, tag = 'scratch operand']
  %s0 = inlined_call_operand.hbm [shape: bf16[8,128], index: 0, kind: input, shape index: {}]
  %s1 = inlined_call_operand.hbm [shape: bf16[8,128], index: 1, kind: input, shape index: {}]
  %s2 = inlined_call_operand.hbm [shape: bf16[8,8], index: 2, kind: input, shape index: {}]
  %s3 = inlined_call_operand.hbm [shape: bf16[128,256], index: 3, kind: input, shape index: {}]
  %s4 = inlined_call_operand.hbm [shape: bf16[128,128], index: 4, kind: input, shape index: {}]
  %s5 = inlined_call_operand.hbm [shape: f32[4,16,128], index: 5, kind: input, shape index: {}]
  %s6 = inlined_call_operand.vmem [shape: f32[4,1,16], index: 6, kind: input, shape index: {}]
  %s7 = inlined_call_operand.hbm [shape: f32[32,128], index: 7, kind: output, shape index: {}]
  %s8 = sld [smem:[#allocation0]]
  $region93: #{tpu_custom_call.1} parent=0
    _
  %s10 = ssub.s32 1, %s8
  %s11 = scalar_select 0, %s10, %s8
  $region1: #{tpu_custom_call.1} parent=0
    #allocation5 [shape = 'u8[2048]{0}', space=vmem, size = 0x800, scoped, tag = 'input window, operand 0, single buffered']
    #allocation6 [shape = 's32[2]{0}', space=sflag, size = 0x8, scoped, tag = 'scoped memory for tpu_custom_call.1']
    #allocation7 [shape = 's32[2]{0}', space=sflag, size = 0x8, scoped, tag = 'scoped memory for tpu_custom_call.1']
    #allocation8 [shape = 'u8[2048]{0}', space=vmem, size = 0x800, scoped, tag = 'input window, operand 1, single buffered']
    #allocation9 [shape = 's32[1]{0}', space=sflag, size = 0x4, scoped, tag = 'scoped memory for tpu_custom_call.1']
    #allocation10 [shape = 'u8[2048]{0}', space=vmem, size = 0x800, scoped, tag = 'input window, operand 2, single buffered']
    #allocation11 [shape = 'u8[65536]{0}', space=vmem, size = 0x10000, scoped, tag = 'input window, operand 3, single buffered']
    #allocation12 [shape = 's32[1]{0}', space=sflag, size = 0x4, scoped, tag = 'scoped memory for tpu_custom_call.1']
    #allocation13 [shape = 'u8[32768]{0}', space=vmem, size = 0x8000, scoped, tag = 'input window, operand 4, single buffered']
    #allocation14 [shape = 'u8[32768]{0}', space=vmem, size = 0x8000, scoped, tag = 'input window, operand 5']
    #allocation15 [shape = 's32[2]{0}', space=sflag, size = 0x8, scoped, tag = 'scoped memory for tpu_custom_call.1']
    #allocation16 [shape = 'u8[16384]{0}', space=vmem, size = 0x4000, scoped, tag = 'output window, operand 0']
    %12 = vsyncpa [#allocation6], 0
    %13 = vsyncpa [#allocation9], 0
    %14 = vsyncpa [#allocation12], 0
    %15 = vsyncpa [#allocation15], 0
    %s16 = scalar_lea.sflag [#allocation15], 1
    %17 = vsyncpa %s16, 0
    %18 = vsyncpa [#allocation7], 0
    %s19 = scalar_lea.sflag [#allocation7], 1
    %20 = vsyncpa %s19, 0
    loop: start=0, step=1, limit=4
    $region2: #{tpu_custom_call.1} parent=1 // loop_pre_header
      _
    $region3: #{tpu_custom_call.1} parent=1 // loop_header
      %s22 = sphi 0, %s26
      %p23 = scmp.ge.s32.totalorder %s22, 4
      %s29 = sphi 0, %s41
      %s30 = sphi 0, %s37
      %s31 = sphi 0, %s29
      %s32 = sphi 0, %s30
      %s33 = sphi 0, %s31
      %s34 = sphi 0, %s32
      %s42 = sphi 0, %s42
      %s44 = sphi 0, %s42
      %s45 = sphi 0, %s44
      %s59 = sphi 0, %s45
      %s63 = sphi 0, %s63
      %s65 = sphi 0, %s63
      %s66 = sphi 0, %s65
      %s80 = sphi 0, %s66
      %s84 = sphi 0, %s84
      %s86 = sphi 0, %s84
      %s87 = sphi 0, %s86
      %s101 = sphi 0, %s87
      %s105 = sphi 0, %s105
      %s107 = sphi 0, %s105
      %s108 = sphi 0, %s107
      %s122 = sphi 0, %s108
      %s126 = sphi 0, %s126
      %s128 = sphi 0, %s126
      %s129 = sphi 0, %s128
      %s143 = sphi 0, %s129
      %s151 = sphi 0, %s153
      %s154 = sphi 0, %s151
      %s155 = sphi 0, %s154
      %s171 = sphi 0, %s155
      %s179 = sphi 0, %s181
      %s182 = sphi 0, %s179
      %s183 = sphi 0, %s182
      %s199 = sphi 0, %s183
      %s205 = sphi 0, %s207
      %s208 = sphi 0, %s205
      %s209 = sphi 0, %s208
      %s225 = sphi 0, %s209
    $region4: #{tpu_custom_call.1} parent=1 // loop_header_branch
      %25 = sbr.rel (%p23) target = $region8
    $region5: #{tpu_custom_call.1} parent=1 // loop_body
      %s27 = ssub.s32 %s22, 1
      %s28 = ssub.s32 %s22, 2
      %s35 = sadd.s32 1, %s30
      %p36 = scmp.ge.s32.totalorder %s35, 1
      %s37 = scalar_select %p36, 0, %s35
      %s38 = sadd.s32 1, %s29
      %s39 = scalar_select %p36, %s38, %s29
      %p40 = scmp.ge.s32.totalorder %s39, 2
      %s41 = scalar_select %p40, 0, %s39
      %s43 = sadd.s32 %s42, 1
      %p46 = scmp.eq.s32.totalorder %s22, 1
      %p47 = scmp.ne.s32.totalorder %s42, %s44
      %p48 = scmp.eq.s32.totalorder %s22, 0
      %p49 = por %p47, %p48
      %p50 = scmp.ne.s32.totalorder %s42, %s44
      %p51 = scmp.eq.s32.totalorder %s27, 1
      %p52 = por %p50, %p51
      %p53 = scmp.ne.s32.totalorder %s44, %s45
      %p54 = scmp.eq.s32.totalorder %s27, 0
      %p55 = por %p53, %p54
      %p56 = scmp.ne.s32.totalorder %s44, %s45
      %p57 = scmp.eq.s32.totalorder %s28, 1
      %p58 = por %p56, %p57
      %p60 = scmp.ne.s32.totalorder %s45, %s59
      %p61 = scmp.eq.s32.totalorder %s28, 0
      %p62 = por %p60, %p61
      %s64 = sadd.s32 %s63, 1
      %p67 = scmp.eq.s32.totalorder %s22, 1
      %p68 = scmp.ne.s32.totalorder %s63, %s65
      %p69 = scmp.eq.s32.totalorder %s22, 0
      %p70 = por %p68, %p69
      %p71 = scmp.ne.s32.totalorder %s63, %s65
      %p72 = scmp.eq.s32.totalorder %s27, 1
      %p73 = por %p71, %p72
      %p74 = scmp.ne.s32.totalorder %s65, %s66
      %p75 = scmp.eq.s32.totalorder %s27, 0
      %p76 = por %p74, %p75
      %p77 = scmp.ne.s32.totalorder %s65, %s66
      %p78 = scmp.eq.s32.totalorder %s28, 1
      %p79 = por %p77, %p78
      %p81 = scmp.ne.s32.totalorder %s66, %s80
      %p82 = scmp.eq.s32.totalorder %s28, 0
      %p83 = por %p81, %p82
      %s85 = sadd.s32 %s84, 1
      %p88 = scmp.eq.s32.totalorder %s22, 1
      %p89 = scmp.ne.s32.totalorder %s84, %s86
      %p90 = scmp.eq.s32.totalorder %s22, 0
      %p91 = por %p89, %p90
      %p92 = scmp.ne.s32.totalorder %s84, %s86
      %p93 = scmp.eq.s32.totalorder %s27, 1
      %p94 = por %p92, %p93
      %p95 = scmp.ne.s32.totalorder %s86, %s87
      %p96 = scmp.eq.s32.totalorder %s27, 0
      %p97 = por %p95, %p96
      %p98 = scmp.ne.s32.totalorder %s86, %s87
      %p99 = scmp.eq.s32.totalorder %s28, 1
      %p100 = por %p98, %p99
      %p102 = scmp.ne.s32.totalorder %s87, %s101
      %p103 = scmp.eq.s32.totalorder %s28, 0
      %p104 = por %p102, %p103
      %s106 = sadd.s32 %s105, 1
      %p109 = scmp.eq.s32.totalorder %s22, 1
      %p110 = scmp.ne.s32.totalorder %s105, %s107
      %p111 = scmp.eq.s32.totalorder %s22, 0
      %p112 = por %p110, %p111
      %p113 = scmp.ne.s32.totalorder %s105, %s107
      %p114 = scmp.eq.s32.totalorder %s27, 1
      %p115 = por %p113, %p114
      %p116 = scmp.ne.s32.totalorder %s107, %s108
      %p117 = scmp.eq.s32.totalorder %s27, 0
      %p118 = por %p116, %p117
      %p119 = scmp.ne.s32.totalorder %s107, %s108
      %p120 = scmp.eq.s32.totalorder %s28, 1
      %p121 = por %p119, %p120
      %p123 = scmp.ne.s32.totalorder %s108, %s122
      %p124 = scmp.eq.s32.totalorder %s28, 0
      %p125 = por %p123, %p124
      %s127 = sadd.s32 %s126, 1
      %p130 = scmp.eq.s32.totalorder %s22, 1
      %p131 = scmp.ne.s32.totalorder %s126, %s128
      %p132 = scmp.eq.s32.totalorder %s22, 0
      %p133 = por %p131, %p132
      %p134 = scmp.ne.s32.totalorder %s126, %s128
      %p135 = scmp.eq.s32.totalorder %s27, 1
      %p136 = por %p134, %p135
      %p137 = scmp.ne.s32.totalorder %s128, %s129
      %p138 = scmp.eq.s32.totalorder %s27, 0
      %p139 = por %p137, %p138
      %p140 = scmp.ne.s32.totalorder %s128, %s129
      %p141 = scmp.eq.s32.totalorder %s28, 1
      %p142 = por %p140, %p141
      %p144 = scmp.ne.s32.totalorder %s129, %s143
      %p145 = scmp.eq.s32.totalorder %s28, 0
      %p146 = por %p144, %p145
      %s147 = ssub.s32 %s29, %s41
      %s148 = ssub.s32 %s30, %s37
      %s149 = sor.u32 %s147, %s148
      %p150 = scmp.eq.s32.totalorder %s149, 0
      %s152 = sadd.s32 %s151, 1
      %s153 = scalar_select %p150, %s151, %s152
      %p156 = pneg %p150
      %p157 = scmp.eq.s32.totalorder %s22, 1
      %p158 = por %p156, %p157
      %p159 = scmp.ne.s32.totalorder %s151, %s154
      %p160 = scmp.eq.s32.totalorder %s22, 0
      %p161 = por %p159, %p160
      %p162 = scmp.ne.s32.totalorder %s151, %s154
      %p163 = scmp.eq.s32.totalorder %s27, 1
      %p164 = por %p162, %p163
      %p165 = scmp.ne.s32.totalorder %s154, %s155
      %p166 = scmp.eq.s32.totalorder %s27, 0
      %p167 = por %p165, %p166
      %p168 = scmp.ne.s32.totalorder %s154, %s155
      %p169 = scmp.eq.s32.totalorder %s28, 1
      %p170 = por %p168, %p169
      %p172 = scmp.ne.s32.totalorder %s155, %s171
      %p173 = scmp.eq.s32.totalorder %s28, 0
      %p174 = por %p172, %p173
      %s175 = ssub.s32 %s29, %s41
      %s176 = ssub.s32 %s30, %s37
      %s177 = sor.u32 %s175, %s176
      %p178 = scmp.eq.s32.totalorder %s177, 0
      %s180 = sadd.s32 %s179, 1
      %s181 = scalar_select %p178, %s179, %s180
      %p184 = pneg %p178
      %p185 = scmp.eq.s32.totalorder %s22, 1
      %p186 = por %p184, %p185
      %p187 = scmp.ne.s32.totalorder %s179, %s182
      %p188 = scmp.eq.s32.totalorder %s22, 0
      %p189 = por %p187, %p188
      %p190 = scmp.ne.s32.totalorder %s179, %s182
      %p191 = scmp.eq.s32.totalorder %s27, 1
      %p192 = por %p190, %p191
      %p193 = scmp.ne.s32.totalorder %s182, %s183
      %p194 = scmp.eq.s32.totalorder %s27, 0
      %p195 = por %p193, %p194
      %p196 = scmp.ne.s32.totalorder %s182, %s183
      %p197 = scmp.eq.s32.totalorder %s28, 1
      %p198 = por %p196, %p197
      %p200 = scmp.ne.s32.totalorder %s183, %s199
      %p201 = scmp.eq.s32.totalorder %s28, 0
      %p202 = por %p200, %p201
      %s203 = ssub.s32 %s29, %s41
      %p204 = scmp.eq.s32.totalorder %s203, 0
      %s206 = sadd.s32 %s205, 1
      %s207 = scalar_select %p204, %s205, %s206
      %p210 = pneg %p204
      %p211 = scmp.eq.s32.totalorder %s22, 1
      %p212 = por %p210, %p211
      %p213 = scmp.ne.s32.totalorder %s205, %s208
      %p214 = scmp.eq.s32.totalorder %s22, 0
      %p215 = por %p213, %p214
      %p216 = scmp.ne.s32.totalorder %s205, %s208
      %p217 = scmp.eq.s32.totalorder %s27, 1
      %p218 = por %p216, %p217
      %p219 = scmp.ne.s32.totalorder %s208, %s209
      %p220 = scmp.eq.s32.totalorder %s27, 0
      %p221 = por %p219, %p220
      %p222 = scmp.ne.s32.totalorder %s208, %s209
      %p223 = scmp.eq.s32.totalorder %s28, 1
      %p224 = por %p222, %p223
      %p226 = scmp.ne.s32.totalorder %s209, %s225
      %p227 = scmp.eq.s32.totalorder %s28, 0
      %p228 = por %p226, %p227
      %p229 = scmp.le.s32.totalorder 1, %s22
      %p230 = scmp.lt.s32.totalorder %s22, 3
      %p231 = pnand %p229, %p230
      %p232 = pneg %p231
      // Predicated region
      $region9: #{tpu_custom_call.1} parent=5 // pred_check
        _
      $region10: #{tpu_custom_call.1} parent=5 // pred_check_branch
        %234 = sbr.rel (%p231) target = $region12
      $region11: #{tpu_custom_call.1} parent=5 // pred_region
        %s235 = ssub.s32 %s22, 1
        // Predicated region
        $region13: #{tpu_custom_call.1} parent=11 // pred_check
          %p236 = pneg %p55
        $region14: #{tpu_custom_call.1} parent=11 // pred_check_branch
          %238 = sbr.rel (%p236) target = $region16
        $region15: #{tpu_custom_call.1} parent=11 // pred_region
          %s240 = ssub.s32 64, 64
          %241 = vsyncadd [#allocation6], %s240
          %s243 = sshll.u32 [#allocation5], 4
          %s244 = int_to_ptr.vmem [resolvable:$true] %s243
          %246 = dma.hbm_to_vmem [thread:$0]  %s0, 64, %s244, [#allocation6]
        $region16: #{tpu_custom_call.1} parent=11 // pred_fallthru
          _
        // Predicated region
        $region17: #{tpu_custom_call.1} parent=11 // pred_check
          %p247 = pneg %p76
        $region18: #{tpu_custom_call.1} parent=11 // pred_check_branch
          %249 = sbr.rel (%p247) target = $region20
        $region19: #{tpu_custom_call.1} parent=11 // pred_region
          %s251 = ssub.s32 64, 64
          %252 = vsyncadd [#allocation9], %s251
          %s254 = sshll.u32 [#allocation8], 4
          %s255 = int_to_ptr.vmem [resolvable:$true] %s254
          %257 = dma.hbm_to_vmem [thread:$0]  %s1, 64, %s255, [#allocation9]
        $region20: #{tpu_custom_call.1} parent=11 // pred_fallthru
          _
        // Predicated region
        $region21: #{tpu_custom_call.1} parent=11 // pred_check
          %p258 = pneg %p97
        $region22: #{tpu_custom_call.1} parent=11 // pred_check_branch
          %260 = sbr.rel (%p258) target = $region24
        $region23: #{tpu_custom_call.1} parent=11 // pred_region
          %s262 = ssub.s32 64, 64
          %263 = vsyncadd [#allocation9], %s262
          %s265 = sshll.u32 [#allocation10], 4
          %s266 = int_to_ptr.vmem [resolvable:$true] %s265
          %268 = dma.hbm_to_vmem [thread:$0]  %s2, 64, %s266, [#allocation9]
        $region24: #{tpu_custom_call.1} parent=11 // pred_fallthru
          _
        // Predicated region
        $region25: #{tpu_custom_call.1} parent=11 // pred_check
          %p269 = pneg %p118
        $region26: #{tpu_custom_call.1} parent=11 // pred_check_branch
          %271 = sbr.rel (%p269) target = $region28
        $region27: #{tpu_custom_call.1} parent=11 // pred_region
          %s273 = ssub.s32 2048, 2048
          %274 = vsyncadd [#allocation12], %s273
          %s275 = sshll.u32 [#allocation11], 4
          %s276 = int_to_ptr.vmem [resolvable:$true] %s275
          %281 = dma.hbm_to_vmem [thread:$0]  %s3, 2048, %s276, [#allocation12], 128, 128, 8
        $region28: #{tpu_custom_call.1} parent=11 // pred_fallthru
          _
        // Predicated region
        $region29: #{tpu_custom_call.1} parent=11 // pred_check
          %p282 = pneg %p139
        $region30: #{tpu_custom_call.1} parent=11 // pred_check_branch
          %284 = sbr.rel (%p282) target = $region32
        $region31: #{tpu_custom_call.1} parent=11 // pred_region
          %s286 = ssub.s32 1024, 1024
          %287 = vsyncadd [#allocation12], %s286
          %s288 = sshll.u32 [#allocation13], 4
          %s289 = int_to_ptr.vmem [resolvable:$true] %s288
          %294 = dma.hbm_to_vmem [thread:$0]  %s4, 1024, %s289, [#allocation12], 64, 64, 4
        $region32: #{tpu_custom_call.1} parent=11 // pred_fallthru
          _
      $region12: #{tpu_custom_call.1} parent=5 // pred_fallthru
        _
      %p295 = scmp.lt.s32.totalorder %s22, 2
      // Predicated region
      $region33: #{tpu_custom_call.1} parent=5 // pred_check
        %p296 = pneg %p295
      $region34: #{tpu_custom_call.1} parent=5 // pred_check_branch
        %298 = sbr.rel (%p296) target = $region36
      $region35: #{tpu_custom_call.1} parent=5 // pred_region
        // Predicated region
        $region37: #{tpu_custom_call.1} parent=35 // pred_check
          %p299 = pneg %p161
        $region38: #{tpu_custom_call.1} parent=35 // pred_check_branch
          %301 = sbr.rel (%p299) target = $region40
        $region39: #{tpu_custom_call.1} parent=35 // pred_region
          %s302 = sand.u32 %s151, 1
          %s303 = scalar_lea.sflag [#allocation15], %s302
          %s304 = sand.u32 %s151, 1
          %s305 = smul.addr %s304, 32
          %s306 = scalar_lea.vmem [#allocation14], %s305
          %s307 = smul.u32 2, %s29
          %s308 = smul.u32 2, %s30
          %s310 = ssub.s32 512, 512
          %311 = vsyncadd %s303, %s310
          %s312 = smul.addr %s307, 2
          %s313 = sadd.s32 %s308, %s312
          %s314 = smul.addr %s313, 128
          %s315 = scalar_lea.hbm %s5, %s314
          %s316 = sshll.u32 %s306, 4
          %s317 = int_to_ptr.vmem [resolvable:$true] %s316
          %322 = dma.hbm_to_vmem [thread:$0]  %s315, 512, %s317, %s303, 128, 128, 8
        $region40: #{tpu_custom_call.1} parent=35 // pred_fallthru
          _
        // Predicated region
        $region41: #{tpu_custom_call.1} parent=35 // pred_check
          %p323 = pneg %p189
        $region42: #{tpu_custom_call.1} parent=35 // pred_check_branch
          %325 = sbr.rel (%p323) target = $region44
        $region43: #{tpu_custom_call.1} parent=35 // pred_region
          %s326 = smul.u32 2, %s29
          %p327 = scmp.lt.s32.totalorder %s326, 3
          %s328 = scalar_select %p327, %s326, 3
          %p329 = scmp.lt.s32.totalorder %s30, 0
          %s330 = scalar_select %p329, %s30, 0
          %s331 = sadd.s32 %s330, %s328
          %s332 = scalar_lea.vmem %s6, %s331
          %s333 = smul.u32 2, %s29
        $region44: #{tpu_custom_call.1} parent=35 // pred_fallthru
          _
      $region36: #{tpu_custom_call.1} parent=5 // pred_fallthru
        _
      %p334 = scmp.le.s32.totalorder 1, %s22
      %p335 = scmp.lt.s32.totalorder %s22, 3
      %p336 = pnand %p334, %p335
      %p337 = pneg %p336
      // Predicated region
      $region45: #{tpu_custom_call.1} parent=5 // pred_check
        _
      $region46: #{tpu_custom_call.1} parent=5 // pred_check_branch
        %339 = sbr.rel (%p336) target = $region48
      $region47: #{tpu_custom_call.1} parent=5 // pred_region
        %s340 = ssub.s32 %s22, 1
        // Predicated region
        $region49: #{tpu_custom_call.1} parent=47 // pred_check
          %p341 = pneg %p55
        $region50: #{tpu_custom_call.1} parent=47 // pred_check_branch
          %343 = sbr.rel (%p341) target = $region52
        $region51: #{tpu_custom_call.1} parent=47 // pred_region
          %344 = dma.done [#allocation6], 64
        $region52: #{tpu_custom_call.1} parent=47 // pred_fallthru
          _
        // Predicated region
        $region53: #{tpu_custom_call.1} parent=47 // pred_check
          %p345 = pneg %p76
        $region54: #{tpu_custom_call.1} parent=47 // pred_check_branch
          %347 = sbr.rel (%p345) target = $region56
        $region55: #{tpu_custom_call.1} parent=47 // pred_region
          %348 = dma.done [#allocation9], 64
        $region56: #{tpu_custom_call.1} parent=47 // pred_fallthru
          _
        // Predicated region
        $region57: #{tpu_custom_call.1} parent=47 // pred_check
          %p349 = pneg %p97
        $region58: #{tpu_custom_call.1} parent=47 // pred_check_branch
          %351 = sbr.rel (%p349) target = $region60
        $region59: #{tpu_custom_call.1} parent=47 // pred_region
          %352 = dma.done [#allocation9], 64
        $region60: #{tpu_custom_call.1} parent=47 // pred_fallthru
          _
        // Predicated region
        $region61: #{tpu_custom_call.1} parent=47 // pred_check
          %p353 = pneg %p118
        $region62: #{tpu_custom_call.1} parent=47 // pred_check_branch
          %355 = sbr.rel (%p353) target = $region64
        $region63: #{tpu_custom_call.1} parent=47 // pred_region
          %356 = dma.done [#allocation12], 2048
        $region64: #{tpu_custom_call.1} parent=47 // pred_fallthru
          _
        // Predicated region
        $region65: #{tpu_custom_call.1} parent=47 // pred_check
          %p357 = pneg %p139
        $region66: #{tpu_custom_call.1} parent=47 // pred_check_branch
          %359 = sbr.rel (%p357) target = $region68
        $region67: #{tpu_custom_call.1} parent=47 // pred_region
          %360 = dma.done [#allocation12], 1024
        $region68: #{tpu_custom_call.1} parent=47 // pred_fallthru
          _
        %s361 = sand.u32 %s154, 1
        %s362 = scalar_lea.sflag [#allocation15], %s361
        %s363 = sand.u32 %s154, 1
        %s364 = smul.addr %s363, 32
        %s365 = scalar_lea.vmem [#allocation14], %s364
        // Predicated region
        $region69: #{tpu_custom_call.1} parent=47 // pred_check
          %p366 = pneg %p167
        $region70: #{tpu_custom_call.1} parent=47 // pred_check_branch
          %368 = sbr.rel (%p366) target = $region72
        $region71: #{tpu_custom_call.1} parent=47 // pred_region
          %369 = dma.done %s362, 512
        $region72: #{tpu_custom_call.1} parent=47 // pred_fallthru
          _
        %p370 = pneg %p55
        %p371 = pneg %p52
        %p372 = pneg %p76
        %p373 = pneg %p73
        %p374 = pneg %p97
        %p375 = pneg %p94
        %p376 = pneg %p118
        %p377 = pneg %p115
        %p378 = pneg %p139
        %p379 = pneg %p136
        %s380 = sand.u32 %s154, 1
        %s381 = scalar_lea.sflag [#allocation15], %s380
        %s382 = sand.u32 %s154, 1
        %s383 = smul.addr %s382, 32
        %s384 = scalar_lea.vmem [#allocation14], %s383
        %p385 = pneg %p167
        %p386 = pneg %p164
        %s387 = smul.u32 2, %s31
        %p388 = scmp.lt.s32.totalorder %s387, 3
        %s389 = scalar_select %p388, %s387, 3
        %p390 = scmp.lt.s32.totalorder %s32, 0
        %s391 = scalar_select %p390, %s32, 0
        %s392 = sadd.s32 %s391, %s389
        %s393 = scalar_lea.vmem %s6, %s392
        %p394 = pneg %p195
        %p395 = pneg %p192
        %p396 = pneg %p221
        %p397 = pneg %p218
        %s398 = sand.u32 %s208, 1
        %s399 = scalar_lea.sflag [#allocation7], %s398
        %s400 = sand.u32 %s208, 1
        %s401 = smul.addr %s400, 16
        %s402 = scalar_lea.vmem [#allocation16], %s401
        %s403 = smul.u32 2, %s31
        %s404 = smul.u32 2, %s32
        %s405 = smul.u32 2, %s31
        %p406 = scmp.lt.s32.totalorder %s405, 3
        %s407 = scalar_select %p406, %s405, 3
        %p408 = scmp.lt.s32.totalorder %s32, 0
        %s409 = scalar_select %p408, %s32, 0
        %s410 = sadd.s32 %s409, %s407
        %s411 = scalar_lea.vmem %s6, %s410
        %s412 = smul.u32 2, %s31
        %s413 = smul.u32 2, %s31
        %p415 = scmp.eq.s32.totalorder %s32, 0
        // Predicated region
        $region73: #{tpu_custom_call.1} parent=47 // pred_check
          %p416 = pneg %p415
        $region74: #{tpu_custom_call.1} parent=47 // pred_check_branch
          %418 = sbr.rel (%p416) target = $region76
        $region75: #{tpu_custom_call.1} parent=47 // pred_region
          %vm419 = vcmask 7168
          %420 = vst.msk [vmem:[#allocation2] sm:$0xff] %vm419, -inf
          %421 = vst.msk [vmem:[#allocation2 + $0x8] sm:$0xff] %vm419, -inf
          %422 = vst.msk [vmem:[#allocation3] sm:$0xff] %vm419, 0.0
          %423 = vst.msk [vmem:[#allocation3 + $0x8] sm:$0xff] %vm419, 0.0
          %424 = vst [vmem:[#allocation4] sm:$0xff] 0.0
          %425 = vst [vmem:[#allocation4 + $0x8] sm:$0xff] 0.0
        $region76: #{tpu_custom_call.1} parent=47 // pred_fallthru
          _
        %v426 = vld [vmem:[%s365] sm:$0xff]
        %v427 = vld [vmem:[%s365 + $0x8] sm:$0xff]
        %v428 = vld [vmem:[%s365 + $0x10] sm:$0xff]
        %v429 = vld [vmem:[%s365 + $0x18] sm:$0xff]
        %v430 = vpack.c.bf16 %v427, %v426
        %v431 = vpack.c.bf16 %v429, %v428
        %v432 = vld [vmem:[#allocation11] sm:$0xff]
        %v433 = vld [vmem:[#allocation11 + $0x8] sm:$0xff]
        %v434 = vld [vmem:[#allocation11 + $0x10] sm:$0xff]
        %v435 = vld [vmem:[#allocation11 + $0x18] sm:$0xff]
        %v436 = vld [vmem:[#allocation11 + $0x20] sm:$0xff]
        %v437 = vld [vmem:[#allocation11 + $0x28] sm:$0xff]
        %v438 = vld [vmem:[#allocation11 + $0x30] sm:$0xff]
        %v439 = vld [vmem:[#allocation11 + $0x38] sm:$0xff]
        %v440 = vld [vmem:[#allocation11 + $0x40] sm:$0xff]
        %v441 = vld [vmem:[#allocation11 + $0x48] sm:$0xff]
        %v442 = vld [vmem:[#allocation11 + $0x50] sm:$0xff]
        %v443 = vld [vmem:[#allocation11 + $0x58] sm:$0xff]
        %v444 = vld [vmem:[#allocation11 + $0x60] sm:$0xff]
        %v445 = vld [vmem:[#allocation11 + $0x68] sm:$0xff]
        %v446 = vld [vmem:[#allocation11 + $0x70] sm:$0xff]
        %v447 = vld [vmem:[#allocation11 + $0x78] sm:$0xff]
        %v464 = vunpack.c.l.b16 %v432
        %v465 = vunpack.c.h.b16 %v432
        %v466 = vunpack.c.l.b16 %v433
        %v467 = vunpack.c.h.b16 %v433
        %v468 = vunpack.c.l.b16 %v434
        %v469 = vunpack.c.h.b16 %v434
        %v470 = vunpack.c.l.b16 %v435
        %v471 = vunpack.c.h.b16 %v435
        %v472 = vunpack.c.l.b16 %v436
        %v473 = vunpack.c.h.b16 %v436
        %v474 = vunpack.c.l.b16 %v437
        %v475 = vunpack.c.h.b16 %v437
        %v476 = vunpack.c.l.b16 %v438
        %v477 = vunpack.c.h.b16 %v438
        %v478 = vunpack.c.l.b16 %v439
        %v479 = vunpack.c.h.b16 %v439
        %v480 = vunpack.c.l.b16 %v440
        %v481 = vunpack.c.h.b16 %v440
        %v482 = vunpack.c.l.b16 %v441
        %v483 = vunpack.c.h.b16 %v441
        %v484 = vunpack.c.l.b16 %v442
        %v485 = vunpack.c.h.b16 %v442
        %v486 = vunpack.c.l.b16 %v443
        %v487 = vunpack.c.h.b16 %v443
        %v488 = vunpack.c.l.b16 %v444
        %v489 = vunpack.c.h.b16 %v444
        %v490 = vunpack.c.l.b16 %v445
        %v491 = vunpack.c.h.b16 %v445
        %v492 = vunpack.c.l.b16 %v446
        %v493 = vunpack.c.h.b16 %v446
        %v494 = vunpack.c.l.b16 %v447
        %v495 = vunpack.c.h.b16 %v447
        %v496 = vpack.c.b16 %v466, %v464
        %v497 = vpack.c.b16 %v467, %v465
        %v498 = vpack.c.b16 %v470, %v468
        %v499 = vpack.c.b16 %v471, %v469
        %v500 = vpack.c.b16 %v474, %v472
        %v501 = vpack.c.b16 %v475, %v473
        %v502 = vpack.c.b16 %v478, %v476
        %v503 = vpack.c.b16 %v479, %v477
        %v504 = vpack.c.b16 %v482, %v480
        %v505 = vpack.c.b16 %v483, %v481
        %v506 = vpack.c.b16 %v486, %v484
        %v507 = vpack.c.b16 %v487, %v485
        %v508 = vpack.c.b16 %v490, %v488
        %v509 = vpack.c.b16 %v491, %v489
        %v510 = vpack.c.b16 %v494, %v492
        %v511 = vpack.c.b16 %v495, %v493
        %528 = vmatprep.subr.bf16.mxu0 %v511
        %529 = vmatpush1.bf16.msra.mxu0 %v510
        %530 = vmatprep.subr.bf16.mxu0 %v509
        %531 = vmatpush1.bf16.msra.mxu0 %v508
        %532 = vmatprep.subr.bf16.mxu0 %v507
        %533 = vmatpush1.bf16.msra.mxu0 %v506
        %534 = vmatprep.subr.bf16.mxu0 %v505
        %535 = vmatpush1.bf16.msra.mxu0 %v504
        %536 = vmatprep.subr.bf16.mxu0 %v503
        %537 = vmatpush1.bf16.msra.mxu0 %v502
        %538 = vmatprep.subr.bf16.mxu0 %v501
        %539 = vmatpush1.bf16.msra.mxu0 %v500
        %540 = vmatprep.subr.bf16.mxu0 %v499
        %541 = vmatpush1.bf16.msra.mxu0 %v498
        %542 = vmatprep.subr.bf16.mxu0 %v497
        %543 = vmatpush1.bf16.msra.mxu0 %v496
        %544 = vmatprep.subr.bf16.mxu0 0
        %545 = vmatpush2.bf16.msra.mxu0 0
        %546 = vmatprep.subr.bf16.mxu0 0
        %547 = vmatpush2.bf16.msra.mxu0 0
        %548 = vmatprep.subr.bf16.mxu0 0
        %549 = vmatpush2.bf16.msra.mxu0 0
        %550 = vmatprep.subr.bf16.mxu0 0
        %551 = vmatpush2.bf16.msra.mxu0 0
        %552 = vmatprep.subr.bf16.mxu0 0
        %553 = vmatpush2.bf16.msra.mxu0 0
        %554 = vmatprep.subr.bf16.mxu0 0
        %555 = vmatpush2.bf16.msra.mxu0 0
        %556 = vmatprep.subr.bf16.mxu0 0
        %557 = vmatpush2.bf16.msra.mxu0 0
        %558 = vmatprep.subr.bf16.mxu0 0
        %559 = vmatpush2.bf16.msra.mxu0 0
        %560 = vmatprep.mubr.bf16.mxu0 0
        %561 = vmatmul.mubr.bf16.gmra.mxu0 %v430
        %v562 = vpop.f32.mrf.mxu0
        %v563 = vadd.f32 0.0, %v562
        %v564 = vpop.f32.mrf.mxu0
        %v565 = vadd.f32 0.0, %v564
        %v566 = vpop.f32.mrf.mxu0
        %v567 = vadd.f32 0.0, %v566
        %v568 = vpop.f32.mrf.mxu0
        %v569 = vadd.f32 0.0, %v568
        %570 = vmatprep.mubr.bf16.mxu0 0
        %571 = vmatmul.mubr.bf16.gmra.mxu0 %v431
        %v572 = vpop.f32.mrf.mxu0
        %v573 = vadd.f32 0.0, %v572
        %v574 = vpop.f32.mrf.mxu0
        %v575 = vadd.f32 0.0, %v574
        %v576 = vpop.f32.mrf.mxu0
        %v577 = vadd.f32 0.0, %v576
        %v578 = vpop.f32.mrf.mxu0
        %v579 = vadd.f32 0.0, %v578
        %580 = vdwg.mxu0
        %v581 = vpack.c.bf16 %v567, %v563
        %v582 = vpack.c.bf16 %v569, %v565
        %v583 = vpack.c.bf16 %v577, %v573
        %v584 = vpack.c.bf16 %v579, %v575
        %v585 = vld [vmem:[#allocation5] sm:$0xf]
        %v586 = vld [vmem:[%s411] sm:$0x1]
        %v588 = vlaneseq
        %v589 = vshrl.u32 %v588, 7
        %v590 = vsub.s32 0, %v589
        %v591 = vrot.slane %v586, %v590
        %593 = vmatprep.subr.bf16.mxu0 0
        %594 = vmatpush1.bf16.xpose.msra.mxu0 0
        %595 = vmatprep.subr.bf16.mxu0 0
        %596 = vmatpush1.bf16.xpose.msra.mxu0 0
        %597 = vmatprep.subr.bf16.mxu0 0
        %598 = vmatpush1.bf16.xpose.msra.mxu0 0
        %599 = vmatprep.subr.bf16.mxu0 0
        %600 = vmatpush1.bf16.xpose.msra.mxu0 0
        %601 = vmatprep.subr.bf16.mxu0 0
        %602 = vmatpush1.bf16.xpose.msra.mxu0 0
        %603 = vmatprep.subr.bf16.mxu0 0
        %604 = vmatpush1.bf16.xpose.msra.mxu0 0
        %605 = vmatprep.subr.bf16.mxu0 0
        %606 = vmatpush1.bf16.xpose.msra.mxu0 0
        %607 = vmatprep.subr.bf16.mxu0 0
        %608 = vmatpush1.bf16.xpose.msra.mxu0 %v581
        %609 = vmatprep.subr.bf16.mxu0 0
        %610 = vmatpush2.bf16.xpose.msra.mxu0 0
        %611 = vmatprep.subr.bf16.mxu0 0
        %612 = vmatpush2.bf16.xpose.msra.mxu0 0
        %613 = vmatprep.subr.bf16.mxu0 0
        %614 = vmatpush2.bf16.xpose.msra.mxu0 0
        %615 = vmatprep.subr.bf16.mxu0 0
        %616 = vmatpush2.bf16.xpose.msra.mxu0 0
        %617 = vmatprep.subr.bf16.mxu0 0
        %618 = vmatpush2.bf16.xpose.msra.mxu0 0
        %619 = vmatprep.subr.bf16.mxu0 0
        %620 = vmatpush2.bf16.xpose.msra.mxu0 0
        %621 = vmatprep.subr.bf16.mxu0 0
        %622 = vmatpush2.bf16.xpose.msra.mxu0 0
        %623 = vmatprep.subr.bf16.mxu0 0
        %624 = vmatpush2.bf16.xpose.msra.mxu0 0
        %625 = vmatprep.mubr.bf16.mxu0 0
        %626 = vmatmul.mubr.bf16.gmra.mxu0 %v585
        %v627 = vpop.f32.mrf.mxu0
        %v628 = vadd.f32 %v591, %v627
        %v629 = vpop.f32.mrf.mxu0
        %v630 = vpop.f32.mrf.mxu0
        %v631 = vpop.f32.mrf.mxu0
        %632 = vdwg.mxu0
        %v633 = vld [vmem:[#allocation2] sm:$0xff]
        %vm634 = vcmask 130048
        %v635 = vsel %vm634, %v628, -inf
        %636 = vmax.xlane.f32.xlu0 %v635
        %v637 = vpop.xlane.xlu0 %636
        %v638 = vmax.f32 %v633, %v637
        %v639 = vsub.f32 %v633, %v638
        %v640 = vmul.f32 %v639, 1.442695
        %v641 = vpow.pop %v640
        %643 = vset.pattern.permute.xlu0 0
        %644 = vperm.xlu0 %643, %v638
        %v645 = vpop.permute.xlu0 %644
        %v647 = vsub.f32 %v628, %v645
        %v648 = vmul.f32 %v647, 1.442695
        %v649 = vpow.pop %v648
        %v650 = vld [vmem:[#allocation3] sm:$0xff]
        %v651 = vmul.f32 %v641, %v650
        %v652 = vsel %vm634, %v649, 0.0
        %653 = vadd.xlane.f32.xlu0 %v652
        %v654 = vpop.xlane.xlu0 %653
        %v655 = vadd.f32 %v651, %v654
        %vm656 = vcmask 7168
        %657 = vst.msk [vmem:[#allocation3] sm:$0xff] %vm656, %v655
        %v658 = vld [vmem:[#allocation4] sm:$0xff]
        %660 = vset.pattern.permute.xlu0 0
        %661 = vperm.xlu0 %660, %v641
        %v662 = vpop.permute.xlu0 %661
        %v664 = vmul.f32 %v662, %v658
        %v665 = vpack.c.bf16 %v649, %v649
        %v667 = vsel %vm634, %v665, 0
        %669 = vmatprep.subr.bf16.mxu0 0
        %670 = vmatpush1.bf16.msra.mxu0 0
        %671 = vmatprep.subr.bf16.mxu0 0
        %672 = vmatpush1.bf16.msra.mxu0 0
        %673 = vmatprep.subr.bf16.mxu0 0
        %674 = vmatpush1.bf16.msra.mxu0 0
        %675 = vmatprep.subr.bf16.mxu0 0
        %676 = vmatpush1.bf16.msra.mxu0 0
        %677 = vmatprep.subr.bf16.mxu0 0
        %678 = vmatpush1.bf16.msra.mxu0 0
        %679 = vmatprep.subr.bf16.mxu0 0
        %680 = vmatpush1.bf16.msra.mxu0 0
        %681 = vmatprep.subr.bf16.mxu0 0
        %682 = vmatpush1.bf16.msra.mxu0 0
        %683 = vmatprep.subr.bf16.mxu0 0
        %684 = vmatpush1.bf16.msra.mxu0 %v582
        %685 = vmatprep.subr.bf16.mxu0 0
        %686 = vmatpush2.bf16.msra.mxu0 0
        %687 = vmatprep.subr.bf16.mxu0 0
        %688 = vmatpush2.bf16.msra.mxu0 0
        %689 = vmatprep.subr.bf16.mxu0 0
        %690 = vmatpush2.bf16.msra.mxu0 0
        %691 = vmatprep.subr.bf16.mxu0 0
        %692 = vmatpush2.bf16.msra.mxu0 0
        %693 = vmatprep.subr.bf16.mxu0 0
        %694 = vmatpush2.bf16.msra.mxu0 0
        %695 = vmatprep.subr.bf16.mxu0 0
        %696 = vmatpush2.bf16.msra.mxu0 0
        %697 = vmatprep.subr.bf16.mxu0 0
        %698 = vmatpush2.bf16.msra.mxu0 0
        %699 = vmatprep.subr.bf16.mxu0 0
        %700 = vmatpush2.bf16.msra.mxu0 0
        %701 = vmatprep.mubr.bf16.mxu0 0
        %702 = vmatmul.mubr.bf16.gmra.mxu0 %v667
        %v703 = vpop.f32.mrf.mxu0
        %v704 = vadd.f32 0.0, %v703
        %v705 = vpop.f32.mrf.mxu0
        %v706 = vpop.f32.mrf.mxu0
        %v707 = vpop.f32.mrf.mxu0
        %708 = vdwg.mxu0
        %v709 = vadd.f32 %v664, %v704
        %710 = vst [vmem:[#allocation4] sm:$0xff] %v709
        %711 = vst.msk [vmem:[#allocation2] sm:$0xff] %vm656, %v638
        %s712 = scalar_lea.vmem %s411, 1
        %v713 = vld [vmem:[%s712] sm:$0x1]
        %v715 = vlaneseq
        %v716 = vshrl.u32 %v715, 7
        %v717 = vsub.s32 0, %v716
        %v718 = vrot.slane %v713, %v717
        %720 = vmatprep.subr.bf16.mxu0 0
        %721 = vmatpush1.bf16.xpose.msra.mxu0 0
        %722 = vmatprep.subr.bf16.mxu0 0
        %723 = vmatpush1.bf16.xpose.msra.mxu0 0
        %724 = vmatprep.subr.bf16.mxu0 0
        %725 = vmatpush1.bf16.xpose.msra.mxu0 0
        %726 = vmatprep.subr.bf16.mxu0 0
        %727 = vmatpush1.bf16.xpose.msra.mxu0 0
        %728 = vmatprep.subr.bf16.mxu0 0
        %729 = vmatpush1.bf16.xpose.msra.mxu0 0
        %730 = vmatprep.subr.bf16.mxu0 0
        %731 = vmatpush1.bf16.xpose.msra.mxu0 0
        %732 = vmatprep.subr.bf16.mxu0 0
        %733 = vmatpush1.bf16.xpose.msra.mxu0 0
        %734 = vmatprep.subr.bf16.mxu0 0
        %735 = vmatpush1.bf16.xpose.msra.mxu0 %v583
        %736 = vmatprep.subr.bf16.mxu0 0
        %737 = vmatpush2.bf16.xpose.msra.mxu0 0
        %738 = vmatprep.subr.bf16.mxu0 0
        %739 = vmatpush2.bf16.xpose.msra.mxu0 0
        %740 = vmatprep.subr.bf16.mxu0 0
        %741 = vmatpush2.bf16.xpose.msra.mxu0 0
        %742 = vmatprep.subr.bf16.mxu0 0
        %743 = vmatpush2.bf16.xpose.msra.mxu0 0
        %744 = vmatprep.subr.bf16.mxu0 0
        %745 = vmatpush2.bf16.xpose.msra.mxu0 0
        %746 = vmatprep.subr.bf16.mxu0 0
        %747 = vmatpush2.bf16.xpose.msra.mxu0 0
        %748 = vmatprep.subr.bf16.mxu0 0
        %749 = vmatpush2.bf16.xpose.msra.mxu0 0
        %750 = vmatprep.subr.bf16.mxu0 0
        %751 = vmatpush2.bf16.xpose.msra.mxu0 0
        %752 = vmatprep.mubr.bf16.mxu0 0
        %753 = vmatmul.mubr.bf16.gmra.mxu0 %v585
        %v754 = vpop.f32.mrf.mxu0
        %v755 = vadd.f32 %v718, %v754
        %v756 = vpop.f32.mrf.mxu0
        %v757 = vpop.f32.mrf.mxu0
        %v758 = vpop.f32.mrf.mxu0
        %759 = vdwg.mxu0
        %s760 = scalar_lea.vmem [#allocation2], 8
        %v761 = vld [vmem:[%s760] sm:$0xff]
        %v762 = vsel %vm634, %v755, -inf
        %763 = vmax.xlane.f32.xlu0 %v762
        %v764 = vpop.xlane.xlu0 %763
        %v765 = vmax.f32 %v761, %v764
        %v766 = vsub.f32 %v761, %v765
        %v767 = vmul.f32 %v766, 1.442695
        %v768 = vpow.pop %v767
        %770 = vset.pattern.permute.xlu0 0
        %771 = vperm.xlu0 %770, %v765
        %v772 = vpop.permute.xlu0 %771
        %v774 = vsub.f32 %v755, %v772
        %v775 = vmul.f32 %v774, 1.442695
        %v776 = vpow.pop %v775
        %s777 = scalar_lea.vmem [#allocation3], 8
        %v778 = vld [vmem:[%s777] sm:$0xff]
        %v779 = vmul.f32 %v768, %v778
        %v780 = vsel %vm634, %v776, 0.0
        %781 = vadd.xlane.f32.xlu0 %v780
        %v782 = vpop.xlane.xlu0 %781
        %v783 = vadd.f32 %v779, %v782
        %784 = vst.msk [vmem:[%s777] sm:$0xff] %vm656, %v783
        %s785 = scalar_lea.vmem [#allocation4], 8
        %v786 = vld [vmem:[%s785] sm:$0xff]
        %788 = vset.pattern.permute.xlu0 0
        %789 = vperm.xlu0 %788, %v768
        %v790 = vpop.permute.xlu0 %789
        %v792 = vmul.f32 %v790, %v786
        %v793 = vpack.c.bf16 %v776, %v776
        %v795 = vsel %vm634, %v793, 0
        %797 = vmatprep.subr.bf16.mxu0 0
        %798 = vmatpush1.bf16.msra.mxu0 0
        %799 = vmatprep.subr.bf16.mxu0 0
        %800 = vmatpush1.bf16.msra.mxu0 0
        %801 = vmatprep.subr.bf16.mxu0 0
        %802 = vmatpush1.bf16.msra.mxu0 0
        %803 = vmatprep.subr.bf16.mxu0 0
        %804 = vmatpush1.bf16.msra.mxu0 0
        %805 = vmatprep.subr.bf16.mxu0 0
        %806 = vmatpush1.bf16.msra.mxu0 0
        %807 = vmatprep.subr.bf16.mxu0 0
        %808 = vmatpush1.bf16.msra.mxu0 0
        %809 = vmatprep.subr.bf16.mxu0 0
        %810 = vmatpush1.bf16.msra.mxu0 0
        %811 = vmatprep.subr.bf16.mxu0 0
        %812 = vmatpush1.bf16.msra.mxu0 %v584
        %813 = vmatprep.subr.bf16.mxu0 0
        %814 = vmatpush2.bf16.msra.mxu0 0
        %815 = vmatprep.subr.bf16.mxu0 0
        %816 = vmatpush2.bf16.msra.mxu0 0
        %817 = vmatprep.subr.bf16.mxu0 0
        %818 = vmatpush2.bf16.msra.mxu0 0
        %819 = vmatprep.subr.bf16.mxu0 0
        %820 = vmatpush2.bf16.msra.mxu0 0
        %821 = vmatprep.subr.bf16.mxu0 0
        %822 = vmatpush2.bf16.msra.mxu0 0
        %823 = vmatprep.subr.bf16.mxu0 0
        %824 = vmatpush2.bf16.msra.mxu0 0
        %825 = vmatprep.subr.bf16.mxu0 0
        %826 = vmatpush2.bf16.msra.mxu0 0
        %827 = vmatprep.subr.bf16.mxu0 0
        %828 = vmatpush2.bf16.msra.mxu0 0
        %829 = vmatprep.mubr.bf16.mxu0 0
        %830 = vmatmul.mubr.bf16.gmra.mxu0 %v795
        %v831 = vpop.f32.mrf.mxu0
        %v832 = vadd.f32 0.0, %v831
        %v833 = vpop.f32.mrf.mxu0
        %v834 = vpop.f32.mrf.mxu0
        %v835 = vpop.f32.mrf.mxu0
        %836 = vdwg.mxu0
        %v837 = vadd.f32 %v792, %v832
        %838 = vst [vmem:[%s785] sm:$0xff] %v837
        %839 = vst.msk [vmem:[%s760] sm:$0xff] %vm656, %v765
        // Predicated region
        $region77: #{tpu_custom_call.1} parent=47 // pred_check
          %p840 = pneg %p415
        $region78: #{tpu_custom_call.1} parent=47 // pred_check_branch
          %842 = sbr.rel (%p840) target = $region80
        $region79: #{tpu_custom_call.1} parent=47 // pred_region
          %v843 = vld [vmem:[#allocation10] sm:$0xf]
          %v844 = vld [vmem:[#allocation8] sm:$0xf]
          %v845 = vld [vmem:[#allocation13] sm:$0xf]
          %v846 = vld [vmem:[#allocation13 + $0x4] sm:$0xf]
          %v847 = vld [vmem:[#allocation13 + $0x8] sm:$0xf]
          %v848 = vld [vmem:[#allocation13 + $0xc] sm:$0xf]
          %v849 = vld [vmem:[#allocation13 + $0x10] sm:$0xf]
          %v850 = vld [vmem:[#allocation13 + $0x14] sm:$0xf]
          %v851 = vld [vmem:[#allocation13 + $0x18] sm:$0xf]
          %v852 = vld [vmem:[#allocation13 + $0x1c] sm:$0xf]
          %v853 = vld [vmem:[#allocation13 + $0x20] sm:$0xf]
          %v854 = vld [vmem:[#allocation13 + $0x24] sm:$0xf]
          %v855 = vld [vmem:[#allocation13 + $0x28] sm:$0xf]
          %v856 = vld [vmem:[#allocation13 + $0x2c] sm:$0xf]
          %v857 = vld [vmem:[#allocation13 + $0x30] sm:$0xf]
          %v858 = vld [vmem:[#allocation13 + $0x34] sm:$0xf]
          %v859 = vld [vmem:[#allocation13 + $0x38] sm:$0xf]
          %v860 = vld [vmem:[#allocation13 + $0x3c] sm:$0xf]
          %v861 = vld [vmem:[#allocation3] sm:$0xff]
          %v862 = vrcp.pop %v861
          %v863 = vld [vmem:[#allocation4] sm:$0xff]
          %865 = vset.pattern.permute.xlu0 0
          %866 = vperm.xlu0 %865, %v862
          %v867 = vpop.permute.xlu0 %866
          %v869 = vmul.f32 %v863, %v867
          %v870 = vpack.c.bf16 %v869, %v869
          %v871 = vmul.bf16 %v870, %v844
          %vm872 = vcmask 64512
          %v874 = vsel %vm872, %v843, 0
          %vm876 = vcmask 1043456
          %v878 = vsel %vm876, %v871, 0
          %880 = vmatprep.subr.bf16.mxu0 0
          %881 = vmatpush1.bf16.msra.mxu0 0
          %882 = vmatprep.subr.bf16.mxu0 0
          %883 = vmatpush1.bf16.msra.mxu0 0
          %884 = vmatprep.subr.bf16.mxu0 0
          %885 = vmatpush1.bf16.msra.mxu0 0
          %886 = vmatprep.subr.bf16.mxu0 0
          %887 = vmatpush1.bf16.msra.mxu0 0
          %888 = vmatprep.subr.bf16.mxu0 0
          %889 = vmatpush1.bf16.msra.mxu0 0
          %890 = vmatprep.subr.bf16.mxu0 0
          %891 = vmatpush1.bf16.msra.mxu0 0
          %892 = vmatprep.subr.bf16.mxu0 0
          %893 = vmatpush1.bf16.msra.mxu0 0
          %894 = vmatprep.subr.bf16.mxu0 0
          %895 = vmatpush1.bf16.msra.mxu0 %v878
          %896 = vmatprep.subr.bf16.mxu0 0
          %897 = vmatpush2.bf16.msra.mxu0 0
          %898 = vmatprep.subr.bf16.mxu0 0
          %899 = vmatpush2.bf16.msra.mxu0 0
          %900 = vmatprep.subr.bf16.mxu0 0
          %901 = vmatpush2.bf16.msra.mxu0 0
          %902 = vmatprep.subr.bf16.mxu0 0
          %903 = vmatpush2.bf16.msra.mxu0 0
          %904 = vmatprep.subr.bf16.mxu0 0
          %905 = vmatpush2.bf16.msra.mxu0 0
          %906 = vmatprep.subr.bf16.mxu0 0
          %907 = vmatpush2.bf16.msra.mxu0 0
          %908 = vmatprep.subr.bf16.mxu0 0
          %909 = vmatpush2.bf16.msra.mxu0 0
          %910 = vmatprep.subr.bf16.mxu0 0
          %911 = vmatpush2.bf16.msra.mxu0 0
          %912 = vmatprep.mubr.bf16.mxu0 0
          %913 = vmatmul.mubr.bf16.gmra.mxu0 %v874
          %v914 = vpop.f32.mrf.mxu0
          %v915 = vadd.f32 0.0, %v914
          %v916 = vpop.f32.mrf.mxu0
          %v917 = vpop.f32.mrf.mxu0
          %v918 = vpop.f32.mrf.mxu0
          %919 = vdwg.mxu0
          %v920 = vpack.c.bf16 %v915, %v915
          %v937 = vunpack.c.l.b16 %v845
          %v938 = vunpack.c.l.b16 %v846
          %v939 = vunpack.c.l.b16 %v847
          %v940 = vunpack.c.l.b16 %v848
          %v941 = vunpack.c.l.b16 %v849
          %v942 = vunpack.c.l.b16 %v850
          %v943 = vunpack.c.l.b16 %v851
          %v944 = vunpack.c.l.b16 %v852
          %v945 = vunpack.c.l.b16 %v853
          %v946 = vunpack.c.l.b16 %v854
          %v947 = vunpack.c.l.b16 %v855
          %v948 = vunpack.c.l.b16 %v856
          %v949 = vunpack.c.l.b16 %v857
          %v950 = vunpack.c.l.b16 %v858
          %v951 = vunpack.c.l.b16 %v859
          %v952 = vunpack.c.l.b16 %v860
          %v953 = vpack.c.b16 %v938, %v937
          %v954 = vpack.c.b16 %v940, %v939
          %v955 = vpack.c.b16 %v942, %v941
          %v956 = vpack.c.b16 %v944, %v943
          %v957 = vpack.c.b16 %v946, %v945
          %v958 = vpack.c.b16 %v948, %v947
          %v959 = vpack.c.b16 %v950, %v949
          %v960 = vpack.c.b16 %v952, %v951
          %969 = vmatprep.subr.bf16.mxu0 0
          %970 = vmatpush1.bf16.msra.mxu0 %v960
          %971 = vmatprep.subr.bf16.mxu0 0
          %972 = vmatpush1.bf16.msra.mxu0 %v959
          %973 = vmatprep.subr.bf16.mxu0 0
          %974 = vmatpush1.bf16.msra.mxu0 %v958
          %975 = vmatprep.subr.bf16.mxu0 0
          %976 = vmatpush1.bf16.msra.mxu0 %v957
          %977 = vmatprep.subr.bf16.mxu0 0
          %978 = vmatpush1.bf16.msra.mxu0 %v956
          %979 = vmatprep.subr.bf16.mxu0 0
          %980 = vmatpush1.bf16.msra.mxu0 %v955
          %981 = vmatprep.subr.bf16.mxu0 0
          %982 = vmatpush1.bf16.msra.mxu0 %v954
          %983 = vmatprep.subr.bf16.mxu0 0
          %984 = vmatpush1.bf16.msra.mxu0 %v953
          %985 = vmatprep.subr.bf16.mxu0 0
          %986 = vmatpush2.bf16.msra.mxu0 0
          %987 = vmatprep.subr.bf16.mxu0 0
          %988 = vmatpush2.bf16.msra.mxu0 0
          %989 = vmatprep.subr.bf16.mxu0 0
          %990 = vmatpush2.bf16.msra.mxu0 0
          %991 = vmatprep.subr.bf16.mxu0 0
          %992 = vmatpush2.bf16.msra.mxu0 0
          %993 = vmatprep.subr.bf16.mxu0 0
          %994 = vmatpush2.bf16.msra.mxu0 0
          %995 = vmatprep.subr.bf16.mxu0 0
          %996 = vmatpush2.bf16.msra.mxu0 0
          %997 = vmatprep.subr.bf16.mxu0 0
          %998 = vmatpush2.bf16.msra.mxu0 0
          %999 = vmatprep.subr.bf16.mxu0 0
          %1000 = vmatpush2.bf16.msra.mxu0 0
          %1001 = vmatprep.mubr.bf16.mxu0 0
          %1002 = vmatmul.mubr.bf16.gmra.mxu0 %v920
          %v1003 = vpop.f32.mrf.mxu0
          %v1004 = vadd.f32 0.0, %v1003
          %v1005 = vpop.f32.mrf.mxu0
          %v1006 = vpop.f32.mrf.mxu0
          %v1007 = vpop.f32.mrf.mxu0
          %1008 = vdwg.mxu0
          %1009 = vst [vmem:[%s402] sm:$0xff] %v1004
          %v1010 = vld [vmem:[%s777] sm:$0xff]
          %v1011 = vrcp.pop %v1010
          %v1012 = vld [vmem:[%s785] sm:$0xff]
          %1014 = vset.pattern.permute.xlu0 0
          %1015 = vperm.xlu0 %1014, %v1011
          %v1016 = vpop.permute.xlu0 %1015
          %v1018 = vmul.f32 %v1012, %v1016
          %v1019 = vpack.c.bf16 %v1018, %v1018
          %v1020 = vmul.bf16 %v1019, %v844
          %v1022 = vsel %vm876, %v1020, 0
          %1024 = vmatprep.subr.bf16.mxu0 0
          %1025 = vmatpush1.bf16.msra.mxu0 0
          %1026 = vmatprep.subr.bf16.mxu0 0
          %1027 = vmatpush1.bf16.msra.mxu0 0
          %1028 = vmatprep.subr.bf16.mxu0 0
          %1029 = vmatpush1.bf16.msra.mxu0 0
          %1030 = vmatprep.subr.bf16.mxu0 0
          %1031 = vmatpush1.bf16.msra.mxu0 0
          %1032 = vmatprep.subr.bf16.mxu0 0
          %1033 = vmatpush1.bf16.msra.mxu0 0
          %1034 = vmatprep.subr.bf16.mxu0 0
          %1035 = vmatpush1.bf16.msra.mxu0 0
          %1036 = vmatprep.subr.bf16.mxu0 0
          %1037 = vmatpush1.bf16.msra.mxu0 0
          %1038 = vmatprep.subr.bf16.mxu0 0
          %1039 = vmatpush1.bf16.msra.mxu0 %v1022
          %1040 = vmatprep.subr.bf16.mxu0 0
          %1041 = vmatpush2.bf16.msra.mxu0 0
          %1042 = vmatprep.subr.bf16.mxu0 0
          %1043 = vmatpush2.bf16.msra.mxu0 0
          %1044 = vmatprep.subr.bf16.mxu0 0
          %1045 = vmatpush2.bf16.msra.mxu0 0
          %1046 = vmatprep.subr.bf16.mxu0 0
          %1047 = vmatpush2.bf16.msra.mxu0 0
          %1048 = vmatprep.subr.bf16.mxu0 0
          %1049 = vmatpush2.bf16.msra.mxu0 0
          %1050 = vmatprep.subr.bf16.mxu0 0
          %1051 = vmatpush2.bf16.msra.mxu0 0
          %1052 = vmatprep.subr.bf16.mxu0 0
          %1053 = vmatpush2.bf16.msra.mxu0 0
          %1054 = vmatprep.subr.bf16.mxu0 0
          %1055 = vmatpush2.bf16.msra.mxu0 0
          %1056 = vmatprep.mubr.bf16.mxu0 0
          %1057 = vmatmul.mubr.bf16.gmra.mxu0 %v874
          %v1058 = vpop.f32.mrf.mxu0
          %v1059 = vadd.f32 0.0, %v1058
          %v1060 = vpop.f32.mrf.mxu0
          %v1061 = vpop.f32.mrf.mxu0
          %v1062 = vpop.f32.mrf.mxu0
          %1063 = vdwg.mxu0
          %v1064 = vpack.c.bf16 %v1059, %v1059
          %1065 = vmatprep.subr.bf16.mxu0 0
          %1066 = vmatpush1.bf16.msra.mxu0 %v960
          %1067 = vmatprep.subr.bf16.mxu0 0
          %1068 = vmatpush1.bf16.msra.mxu0 %v959
          %1069 = vmatprep.subr.bf16.mxu0 0
          %1070 = vmatpush1.bf16.msra.mxu0 %v958
          %1071 = vmatprep.subr.bf16.mxu0 0
          %1072 = vmatpush1.bf16.msra.mxu0 %v957
          %1073 = vmatprep.subr.bf16.mxu0 0
          %1074 = vmatpush1.bf16.msra.mxu0 %v956
          %1075 = vmatprep.subr.bf16.mxu0 0
          %1076 = vmatpush1.bf16.msra.mxu0 %v955
          %1077 = vmatprep.subr.bf16.mxu0 0
          %1078 = vmatpush1.bf16.msra.mxu0 %v954
          %1079 = vmatprep.subr.bf16.mxu0 0
          %1080 = vmatpush1.bf16.msra.mxu0 %v953
          %1081 = vmatprep.subr.bf16.mxu0 0
          %1082 = vmatpush2.bf16.msra.mxu0 0
          %1083 = vmatprep.subr.bf16.mxu0 0
          %1084 = vmatpush2.bf16.msra.mxu0 0
          %1085 = vmatprep.subr.bf16.mxu0 0
          %1086 = vmatpush2.bf16.msra.mxu0 0
          %1087 = vmatprep.subr.bf16.mxu0 0
          %1088 = vmatpush2.bf16.msra.mxu0 0
          %1089 = vmatprep.subr.bf16.mxu0 0
          %1090 = vmatpush2.bf16.msra.mxu0 0
          %1091 = vmatprep.subr.bf16.mxu0 0
          %1092 = vmatpush2.bf16.msra.mxu0 0
          %1093 = vmatprep.subr.bf16.mxu0 0
          %1094 = vmatpush2.bf16.msra.mxu0 0
          %1095 = vmatprep.subr.bf16.mxu0 0
          %1096 = vmatpush2.bf16.msra.mxu0 0
          %1097 = vmatprep.mubr.bf16.mxu0 0
          %1098 = vmatmul.mubr.bf16.gmra.mxu0 %v1064
          %v1099 = vpop.f32.mrf.mxu0
          %v1100 = vadd.f32 0.0, %v1099
          %v1101 = vpop.f32.mrf.mxu0
          %v1102 = vpop.f32.mrf.mxu0
          %v1103 = vpop.f32.mrf.mxu0
          %1104 = vdwg.mxu0
          %1105 = vst [vmem:[%s402 + $0x8] sm:$0xff] %v1100
        $region80: #{tpu_custom_call.1} parent=47 // pred_fallthru
          _
        %s1106 = sand.u32 %s208, 1
        %s1107 = scalar_lea.sflag [#allocation7], %s1106
        %s1108 = sand.u32 %s208, 1
        %s1109 = smul.addr %s1108, 16
        %s1110 = scalar_lea.vmem [#allocation16], %s1109
        // Predicated region
        $region81: #{tpu_custom_call.1} parent=47 // pred_check
          %p1111 = pneg %p218
        $region82: #{tpu_custom_call.1} parent=47 // pred_check_branch
          %1113 = sbr.rel (%p1111) target = $region84
        $region83: #{tpu_custom_call.1} parent=47 // pred_region
          %s1114 = smul.u32 2, %s31
          %s1116 = ssub.s32 256, 256
          %1117 = vsyncadd %s1107, %s1116
          %s1118 = smul.addr %s1114, 128
          %s1119 = scalar_lea.hbm %s7, %s1118
          %s1120 = sshll.u32 %s1110, 4
          %s1121 = int_to_ptr.vmem [resolvable:$true] %s1120
          %1126 = dma.vmem_to_hbm [thread:$0]  %s1121, 256, %s1119, %s1107, 128, 128, 8
        $region84: #{tpu_custom_call.1} parent=47 // pred_fallthru
          _
      $region48: #{tpu_custom_call.1} parent=5 // pred_fallthru
        _
      %p1127 = scmp.le.s32.totalorder 2, %s22
      // Predicated region
      $region85: #{tpu_custom_call.1} parent=5 // pred_check
        %p1128 = pneg %p1127
      $region86: #{tpu_custom_call.1} parent=5 // pred_check_branch
        %1130 = sbr.rel (%p1128) target = $region88
      $region87: #{tpu_custom_call.1} parent=5 // pred_region
        %s1131 = ssub.s32 %s22, 2
        // Predicated region
        $region89: #{tpu_custom_call.1} parent=87 // pred_check
          %p1132 = pneg %p224
        $region90: #{tpu_custom_call.1} parent=87 // pred_check_branch
          %1134 = sbr.rel (%p1132) target = $region92
        $region91: #{tpu_custom_call.1} parent=87 // pred_region
          %s1135 = sand.u32 %s209, 1
          %s1136 = scalar_lea.sflag [#allocation7], %s1135
          %s1137 = sand.u32 %s209, 1
          %s1138 = smul.addr %s1137, 16
          %s1139 = scalar_lea.vmem [#allocation16], %s1138
          %1140 = dma.done %s1136, 256
        $region92: #{tpu_custom_call.1} parent=87 // pred_fallthru
          _
      $region88: #{tpu_custom_call.1} parent=5 // pred_fallthru
        _
    $region6: #{tpu_custom_call.1} parent=1 // loop_footer
      %s26 = sadd.s32 1, %s22
    $region7: #{tpu_custom_call.1} parent=1 // loop_footer_branch
      %21 = sbr.rel target = $region3
    $region8: #{tpu_custom_call.1} parent=1 // loop_exit
      _
    %1141 = vsyncpa [#allocation6], 1
    %s1142 = scalar_lea.sflag [#allocation6], 1
    %1143 = vsyncpa %s1142, 1
    %1144 = vsyncpa [#allocation9], 1
    %1145 = vsyncpa [#allocation12], 1
    %1146 = vsyncpa [#allocation15], 1
    %s1147 = scalar_lea.sflag [#allocation15], 1
    %1148 = vsyncpa %s1147, 1
    %1149 = vsyncpa [#allocation7], 1
    %s1150 = scalar_lea.sflag [#allocation7], 1
    %1151 = vsyncpa %s1150, 1

// kernel: tpu_custom_call.1
$region0: #{tpu_custom_call.1}
  #allocation0 [shape = 'u32[]', space=smem, size = 0x4, offset = 0x4, fixed_abs, tag = 'smem constant byte address 0x4 - core index']
  #allocation1 [shape = 'u32[144,128]{1,0:T(1,128)}', space=vmem, size = 0x12000, scoped, tag = 'internal scratch']
  #allocation2 [shape = 'f32[2,8,1]{2,1,0:T(8,128)}', space=vmem, size = 0x2000, scoped, tag = 'scratch operand']
  #allocation3 [shape = 'f32[2,8,1]{2,1,0:T(8,128)}', space=vmem, size = 0x2000, scoped, tag = 'scratch operand']
  #allocation4 [shape = 'f32[2,8,128]{2,1,0:T(8,128)}', space=vmem, size = 0x2000, scoped, tag = 'scratch operand']
  %s0 = inlined_call_operand.hbm [shape: bf16[8,128], index: 0, kind: input, shape index: {}]
  %s1 = inlined_call_operand.hbm [shape: bf16[8,128], index: 1, kind: input, shape index: {}]
  %s2 = inlined_call_operand.hbm [shape: bf16[8,8], index: 2, kind: input, shape index: {}]
  %s3 = inlined_call_operand.hbm [shape: bf16[128,256], index: 3, kind: input, shape index: {}]
  %s4 = inlined_call_operand.hbm [shape: bf16[128,128], index: 4, kind: input, shape index: {}]
  %s5 = inlined_call_operand.hbm [shape: f32[4,16,128], index: 5, kind: input, shape index: {}]
  %s6 = inlined_call_operand.vmem [shape: f32[4,1,16], index: 6, kind: input, shape index: {}]
  %s7 = inlined_call_operand.hbm [shape: f32[32,128], index: 7, kind: output, shape index: {}]
  %s8 = sld [smem:[#allocation0]]
  $region93: #{tpu_custom_call.1} parent=0
    _
  %s10 = ssub.s32 1, %s8
  %s11 = scalar_select 0, %s10, %s8
  $region1: #{tpu_custom_call.1} parent=0
    #allocation5 [shape = 'u8[2048]{0}', space=vmem, size = 0x800, scoped, tag = 'input window, operand 0, single buffered']
    #allocation6 [shape = 's32[2]{0}', space=sflag, size = 0x8, scoped, tag = 'scoped memory for tpu_custom_call.1']
    #allocation7 [shape = 's32[2]{0}', space=sflag, size = 0x8, scoped, tag = 'scoped memory for tpu_custom_call.1']
    #allocation8 [shape = 'u8[2048]{0}', space=vmem, size = 0x800, scoped, tag = 'input window, operand 1, single buffered']
    #allocation9 [shape = 's32[1]{0}', space=sflag, size = 0x4, scoped, tag = 'scoped memory for tpu_custom_call.1']
    #allocation10 [shape = 'u8[2048]{0}', space=vmem, size = 0x800, scoped, tag = 'input window, operand 2, single buffered']
    #allocation11 [shape = 'u8[65536]{0}', space=vmem, size = 0x10000, scoped, tag = 'input window, operand 3, single buffered']
    #allocation12 [shape = 's32[1]{0}', space=sflag, size = 0x4, scoped, tag = 'scoped memory for tpu_custom_call.1']
    #allocation13 [shape = 'u8[32768]{0}', space=vmem, size = 0x8000, scoped, tag = 'input window, operand 4, single buffered']
    #allocation14 [shape = 'u8[32768]{0}', space=vmem, size = 0x8000, scoped, tag = 'input window, operand 5']
    #allocation15 [shape = 's32[2]{0}', space=sflag, size = 0x8, scoped, tag = 'scoped memory for tpu_custom_call.1']
    #allocation16 [shape = 'u8[16384]{0}', space=vmem, size = 0x4000, scoped, tag = 'output window, operand 0']
    %12 = vsyncpa [#allocation6], 0
    %13 = vsyncpa [#allocation9], 0
    %14 = vsyncpa [#allocation12], 0
    %15 = vsyncpa [#allocation15], 0
    %s16 = scalar_lea.sflag [#allocation15], 1
    %17 = vsyncpa %s16, 0
    %18 = vsyncpa [#allocation7], 0
    %s19 = scalar_lea.sflag [#allocation7], 1
    %20 = vsyncpa %s19, 0
    loop: start=0, step=1, limit=4
    $region2: #{tpu_custom_call.1} parent=1 // loop_pre_header
      _
    $region3: #{tpu_custom_call.1} parent=1 // loop_header
      %s22 = sphi 0, %s26
      %p23 = scmp.ge.s32.totalorder %s22, 4
      %s29 = sphi 0, %s41
      %s30 = sphi 0, %s37
      %s31 = sphi 0, %s29
      %s32 = sphi 0, %s30
      %s33 = sphi 0, %s31
      %s34 = sphi 0, %s32
      %s42 = sphi 0, %s42
      %s44 = sphi 0, %s42
      %s45 = sphi 0, %s44
      %s59 = sphi 0, %s45
      %s63 = sphi 0, %s63
      %s65 = sphi 0, %s63
      %s66 = sphi 0, %s65
      %s80 = sphi 0, %s66
      %s84 = sphi 0, %s84
      %s86 = sphi 0, %s84
      %s87 = sphi 0, %s86
      %s101 = sphi 0, %s87
      %s105 = sphi 0, %s105
      %s107 = sphi 0, %s105
      %s108 = sphi 0, %s107
      %s122 = sphi 0, %s108
      %s126 = sphi 0, %s126
      %s128 = sphi 0, %s126
      %s129 = sphi 0, %s128
      %s143 = sphi 0, %s129
      %s151 = sphi 0, %s153
      %s154 = sphi 0, %s151
      %s155 = sphi 0, %s154
      %s171 = sphi 0, %s155
      %s179 = sphi 0, %s181
      %s182 = sphi 0, %s179
      %s183 = sphi 0, %s182
      %s199 = sphi 0, %s183
      %s205 = sphi 0, %s207
      %s208 = sphi 0, %s205
      %s209 = sphi 0, %s208
      %s225 = sphi 0, %s209
    $region4: #{tpu_custom_call.1} parent=1 // loop_header_branch
      %25 = sbr.rel (%p23) target = $region8
    $region5: #{tpu_custom_call.1} parent=1 // loop_body
      %s27 = ssub.s32 %s22, 1
      %s28 = ssub.s32 %s22, 2
      %s35 = sadd.s32 1, %s30
      %p36 = scmp.ge.s32.totalorder %s35, 1
      %s37 = scalar_select %p36, 0, %s35
      %s38 = sadd.s32 1, %s29
      %s39 = scalar_select %p36, %s38, %s29
      %p40 = scmp.ge.s32.totalorder %s39, 2
      %s41 = scalar_select %p40, 0, %s39
      %s43 = sadd.s32 %s42, 1
      %p46 = scmp.eq.s32.totalorder %s22, 1
      %p47 = scmp.ne.s32.totalorder %s42, %s44
      %p48 = scmp.eq.s32.totalorder %s22, 0
      %p49 = por %p47, %p48
      %p50 = scmp.ne.s32.totalorder %s42, %s44
      %p51 = scmp.eq.s32.totalorder %s27, 1
      %p52 = por %p50, %p51
      %p53 = scmp.ne.s32.totalorder %s44, %s45
      %p54 = scmp.eq.s32.totalorder %s27, 0
      %p55 = por %p53, %p54
      %p56 = scmp.ne.s32.totalorder %s44, %s45
      %p57 = scmp.eq.s32.totalorder %s28, 1
      %p58 = por %p56, %p57
      %p60 = scmp.ne.s32.totalorder %s45, %s59
      %p61 = scmp.eq.s32.totalorder %s28, 0
      %p62 = por %p60, %p61
      %s64 = sadd.s32 %s63, 1
      %p67 = scmp.eq.s32.totalorder %s22, 1
      %p68 = scmp.ne.s32.totalorder %s63, %s65
      %p69 = scmp.eq.s32.totalorder %s22, 0
      %p70 = por %p68, %p69
      %p71 = scmp.ne.s32.totalorder %s63, %s65
      %p72 = scmp.eq.s32.totalorder %s27, 1
      %p73 = por %p71, %p72
      %p74 = scmp.ne.s32.totalorder %s65, %s66
      %p75 = scmp.eq.s32.totalorder %s27, 0
      %p76 = por %p74, %p75
      %p77 = scmp.ne.s32.totalorder %s65, %s66
      %p78 = scmp.eq.s32.totalorder %s28, 1
      %p79 = por %p77, %p78
      %p81 = scmp.ne.s32.totalorder %s66, %s80
      %p82 = scmp.eq.s32.totalorder %s28, 0
      %p83 = por %p81, %p82
      %s85 = sadd.s32 %s84, 1
      %p88 = scmp.eq.s32.totalorder %s22, 1
      %p89 = scmp.ne.s32.totalorder %s84, %s86
      %p90 = scmp.eq.s32.totalorder %s22, 0
      %p91 = por %p89, %p90
      %p92 = scmp.ne.s32.totalorder %s84, %s86
      %p93 = scmp.eq.s32.totalorder %s27, 1
      %p94 = por %p92, %p93
      %p95 = scmp.ne.s32.totalorder %s86, %s87
      %p96 = scmp.eq.s32.totalorder %s27, 0
      %p97 = por %p95, %p96
      %p98 = scmp.ne.s32.totalorder %s86, %s87
      %p99 = scmp.eq.s32.totalorder %s28, 1
      %p100 = por %p98, %p99
      %p102 = scmp.ne.s32.totalorder %s87, %s101
      %p103 = scmp.eq.s32.totalorder %s28, 0
      %p104 = por %p102, %p103
      %s106 = sadd.s32 %s105, 1
      %p109 = scmp.eq.s32.totalorder %s22, 1
      %p110 = scmp.ne.s32.totalorder %s105, %s107
      %p111 = scmp.eq.s32.totalorder %s22, 0
      %p112 = por %p110, %p111
      %p113 = scmp.ne.s32.totalorder %s105, %s107
      %p114 = scmp.eq.s32.totalorder %s27, 1
      %p115 = por %p113, %p114
      %p116 = scmp.ne.s32.totalorder %s107, %s108
      %p117 = scmp.eq.s32.totalorder %s27, 0
      %p118 = por %p116, %p117
      %p119 = scmp.ne.s32.totalorder %s107, %s108
      %p120 = scmp.eq.s32.totalorder %s28, 1
      %p121 = por %p119, %p120
      %p123 = scmp.ne.s32.totalorder %s108, %s122
      %p124 = scmp.eq.s32.totalorder %s28, 0
      %p125 = por %p123, %p124
      %s127 = sadd.s32 %s126, 1
      %p130 = scmp.eq.s32.totalorder %s22, 1
      %p131 = scmp.ne.s32.totalorder %s126, %s128
      %p132 = scmp.eq.s32.totalorder %s22, 0
      %p133 = por %p131, %p132
      %p134 = scmp.ne.s32.totalorder %s126, %s128
      %p135 = scmp.eq.s32.totalorder %s27, 1
      %p136 = por %p134, %p135
      %p137 = scmp.ne.s32.totalorder %s128, %s129
      %p138 = scmp.eq.s32.totalorder %s27, 0
      %p139 = por %p137, %p138
      %p140 = scmp.ne.s32.totalorder %s128, %s129
      %p141 = scmp.eq.s32.totalorder %s28, 1
      %p142 = por %p140, %p141
      %p144 = scmp.ne.s32.totalorder %s129, %s143
      %p145 = scmp.eq.s32.totalorder %s28, 0
      %p146 = por %p144, %p145
      %s147 = ssub.s32 %s29, %s41
      %s148 = ssub.s32 %s30, %s37
      %s149 = sor.u32 %s147, %s148
      %p150 = scmp.eq.s32.totalorder %s149, 0
      %s152 = sadd.s32 %s151, 1
      %s153 = scalar_select %p150, %s151, %s152
      %p156 = pneg %p150
      %p157 = scmp.eq.s32.totalorder %s22, 1
      %p158 = por %p156, %p157
      %p159 = scmp.ne.s32.totalorder %s151, %s154
      %p160 = scmp.eq.s32.totalorder %s22, 0
      %p161 = por %p159, %p160
      %p162 = scmp.ne.s32.totalorder %s151, %s154
      %p163 = scmp.eq.s32.totalorder %s27, 1
      %p164 = por %p162, %p163
      %p165 = scmp.ne.s32.totalorder %s154, %s155
      %p166 = scmp.eq.s32.totalorder %s27, 0
      %p167 = por %p165, %p166
      %p168 = scmp.ne.s32.totalorder %s154, %s155
      %p169 = scmp.eq.s32.totalorder %s28, 1
      %p170 = por %p168, %p169
      %p172 = scmp.ne.s32.totalorder %s155, %s171
      %p173 = scmp.eq.s32.totalorder %s28, 0
      %p174 = por %p172, %p173
      %s175 = ssub.s32 %s29, %s41
      %s176 = ssub.s32 %s30, %s37
      %s177 = sor.u32 %s175, %s176
      %p178 = scmp.eq.s32.totalorder %s177, 0
      %s180 = sadd.s32 %s179, 1
      %s181 = scalar_select %p178, %s179, %s180
      %p184 = pneg %p178
      %p185 = scmp.eq.s32.totalorder %s22, 1
      %p186 = por %p184, %p185
      %p187 = scmp.ne.s32.totalorder %s179, %s182
      %p188 = scmp.eq.s32.totalorder %s22, 0
      %p189 = por %p187, %p188
      %p190 = scmp.ne.s32.totalorder %s179, %s182
      %p191 = scmp.eq.s32.totalorder %s27, 1
      %p192 = por %p190, %p191
      %p193 = scmp.ne.s32.totalorder %s182, %s183
      %p194 = scmp.eq.s32.totalorder %s27, 0
      %p195 = por %p193, %p194
      %p196 = scmp.ne.s32.totalorder %s182, %s183
      %p197 = scmp.eq.s32.totalorder %s28, 1
      %p198 = por %p196, %p197
      %p200 = scmp.ne.s32.totalorder %s183, %s199
      %p201 = scmp.eq.s32.totalorder %s28, 0
      %p202 = por %p200, %p201
      %s203 = ssub.s32 %s29, %s41
      %p204 = scmp.eq.s32.totalorder %s203, 0
      %s206 = sadd.s32 %s205, 1
      %s207 = scalar_select %p204, %s205, %s206
      %p210 = pneg %p204
      %p211 = scmp.eq.s32.totalorder %s22, 1
      %p212 = por %p210, %p211
      %p213 = scmp.ne.s32.totalorder %s205, %s208
      %p214 = scmp.eq.s32.totalorder %s22, 0
      %p215 = por %p213, %p214
      %p216 = scmp.ne.s32.totalorder %s205, %s208
      %p217 = scmp.eq.s32.totalorder %s27, 1
      %p218 = por %p216, %p217
      %p219 = scmp.ne.s32.totalorder %s208, %s209
      %p220 = scmp.eq.s32.totalorder %s27, 0
      %p221 = por %p219, %p220
      %p222 = scmp.ne.s32.totalorder %s208, %s209
      %p223 = scmp.eq.s32.totalorder %s28, 1
      %p224 = por %p222, %p223
      %p226 = scmp.ne.s32.totalorder %s209, %s225
      %p227 = scmp.eq.s32.totalorder %s28, 0
      %p228 = por %p226, %p227
      %p229 = scmp.le.s32.totalorder 1, %s22
      %p230 = scmp.lt.s32.totalorder %s22, 3
      %p231 = pnand %p229, %p230
      %p232 = pneg %p231
      // Predicated region
      $region9: #{tpu_custom_call.1} parent=5 // pred_check
        _
      $region10: #{tpu_custom_call.1} parent=5 // pred_check_branch
        %234 = sbr.rel (%p231) target = $region12
      $region11: #{tpu_custom_call.1} parent=5 // pred_region
        %s235 = ssub.s32 %s22, 1
        // Predicated region
        $region13: #{tpu_custom_call.1} parent=11 // pred_check
          %p236 = pneg %p55
        $region14: #{tpu_custom_call.1} parent=11 // pred_check_branch
          %238 = sbr.rel (%p236) target = $region16
        $region15: #{tpu_custom_call.1} parent=11 // pred_region
          %s240 = ssub.s32 64, 64
          %241 = vsyncadd [#allocation6], %s240
          %s243 = sshll.u32 [#allocation5], 4
          %s244 = int_to_ptr.vmem [resolvable:$true] %s243
          %246 = dma.hbm_to_vmem [thread:$0]  %s0, 64, %s244, [#allocation6]
        $region16: #{tpu_custom_call.1} parent=11 // pred_fallthru
          _
        // Predicated region
        $region17: #{tpu_custom_call.1} parent=11 // pred_check
          %p247 = pneg %p76
        $region18: #{tpu_custom_call.1} parent=11 // pred_check_branch
          %249 = sbr.rel (%p247) target = $region20
        $region19: #{tpu_custom_call.1} parent=11 // pred_region
          %s251 = ssub.s32 64, 64
          %252 = vsyncadd [#allocation9], %s251
          %s254 = sshll.u32 [#allocation8], 4
          %s255 = int_to_ptr.vmem [resolvable:$true] %s254
          %257 = dma.hbm_to_vmem [thread:$0]  %s1, 64, %s255, [#allocation9]
        $region20: #{tpu_custom_call.1} parent=11 // pred_fallthru
          _
        // Predicated region
        $region21: #{tpu_custom_call.1} parent=11 // pred_check
          %p258 = pneg %p97
        $region22: #{tpu_custom_call.1} parent=11 // pred_check_branch
          %260 = sbr.rel (%p258) target = $region24
        $region23: #{tpu_custom_call.1} parent=11 // pred_region
          %s262 = ssub.s32 64, 64
          %263 = vsyncadd [#allocation9], %s262
          %s265 = sshll.u32 [#allocation10], 4
          %s266 = int_to_ptr.vmem [resolvable:$true] %s265
          %268 = dma.hbm_to_vmem [thread:$0]  %s2, 64, %s266, [#allocation9]
        $region24: #{tpu_custom_call.1} parent=11 // pred_fallthru
          _
        // Predicated region
        $region25: #{tpu_custom_call.1} parent=11 // pred_check
          %p269 = pneg %p118
        $region26: #{tpu_custom_call.1} parent=11 // pred_check_branch
          %271 = sbr.rel (%p269) target = $region28
        $region27: #{tpu_custom_call.1} parent=11 // pred_region
          %s273 = ssub.s32 2048, 2048
          %274 = vsyncadd [#allocation12], %s273
          %s275 = sshll.u32 [#allocation11], 4
          %s276 = int_to_ptr.vmem [resolvable:$true] %s275
          %281 = dma.hbm_to_vmem [thread:$0]  %s3, 2048, %s276, [#allocation12], 128, 128, 8
        $region28: #{tpu_custom_call.1} parent=11 // pred_fallthru
          _
        // Predicated region
        $region29: #{tpu_custom_call.1} parent=11 // pred_check
          %p282 = pneg %p139
        $region30: #{tpu_custom_call.1} parent=11 // pred_check_branch
          %284 = sbr.rel (%p282) target = $region32
        $region31: #{tpu_custom_call.1} parent=11 // pred_region
          %s286 = ssub.s32 1024, 1024
          %287 = vsyncadd [#allocation12], %s286
          %s288 = sshll.u32 [#allocation13], 4
          %s289 = int_to_ptr.vmem [resolvable:$true] %s288
          %294 = dma.hbm_to_vmem [thread:$0]  %s4, 1024, %s289, [#allocation12], 64, 64, 4
        $region32: #{tpu_custom_call.1} parent=11 // pred_fallthru
          _
      $region12: #{tpu_custom_call.1} parent=5 // pred_fallthru
        _
      %p295 = scmp.lt.s32.totalorder %s22, 2
      // Predicated region
      $region33: #{tpu_custom_call.1} parent=5 // pred_check
        %p296 = pneg %p295
      $region34: #{tpu_custom_call.1} parent=5 // pred_check_branch
        %298 = sbr.rel (%p296) target = $region36
      $region35: #{tpu_custom_call.1} parent=5 // pred_region
        // Predicated region
        $region37: #{tpu_custom_call.1} parent=35 // pred_check
          %p299 = pneg %p161
        $region38: #{tpu_custom_call.1} parent=35 // pred_check_branch
          %301 = sbr.rel (%p299) target = $region40
        $region39: #{tpu_custom_call.1} parent=35 // pred_region
          %s302 = sand.u32 %s151, 1
          %s303 = scalar_lea.sflag [#allocation15], %s302
          %s304 = sand.u32 %s151, 1
          %s305 = smul.addr %s304, 32
          %s306 = scalar_lea.vmem [#allocation14], %s305
          %s307 = smul.u32 2, %s29
          %s308 = smul.u32 2, %s30
          %s310 = ssub.s32 512, 512
          %311 = vsyncadd %s303, %s310
          %s312 = smul.addr %s307, 2
          %s313 = sadd.s32 %s308, %s312
          %s314 = smul.addr %s313, 128
          %s315 = scalar_lea.hbm %s5, %s314
          %s316 = sshll.u32 %s306, 4
          %s317 = int_to_ptr.vmem [resolvable:$true] %s316
          %322 = dma.hbm_to_vmem [thread:$0]  %s315, 512, %s317, %s303, 128, 128, 8
        $region40: #{tpu_custom_call.1} parent=35 // pred_fallthru
          _
        // Predicated region
        $region41: #{tpu_custom_call.1} parent=35 // pred_check
          %p323 = pneg %p189
        $region42: #{tpu_custom_call.1} parent=35 // pred_check_branch
          %325 = sbr.rel (%p323) target = $region44
        $region43: #{tpu_custom_call.1} parent=35 // pred_region
          %s326 = smul.u32 2, %s29
          %p327 = scmp.lt.s32.totalorder %s326, 3
          %s328 = scalar_select %p327, %s326, 3
          %p329 = scmp.lt.s32.totalorder %s30, 0
          %s330 = scalar_select %p329, %s30, 0
          %s331 = sadd.s32 %s330, %s328
          %s332 = scalar_lea.vmem %s6, %s331
          %s333 = smul.u32 2, %s29
        $region44: #{tpu_custom_call.1} parent=35 // pred_fallthru
          _
      $region36: #{tpu_custom_call.1} parent=5 // pred_fallthru
        _
      %p334 = scmp.le.s32.totalorder 1, %s22
      %p335 = scmp.lt.s32.totalorder %s22, 3
      %p336 = pnand %p334, %p335
      %p337 = pneg %p336
      // Predicated region
      $region45: #{tpu_custom_call.1} parent=5 // pred_check
        _
      $region46: #{tpu_custom_call.1} parent=5 // pred_check_branch
        %339 = sbr.rel (%p336) target = $region48
      $region47: #{tpu_custom_call.1} parent=5 // pred_region
        %s340 = ssub.s32 %s22, 1
        // Predicated region
        $region49: #{tpu_custom_call.1} parent=47 // pred_check
          %p341 = pneg %p55
        $region50: #{tpu_custom_call.1} parent=47 // pred_check_branch
          %343 = sbr.rel (%p341) target = $region52
        $region51: #{tpu_custom_call.1} parent=47 // pred_region
          %344 = dma.done [#allocation6], 64
        $region52: #{tpu_custom_call.1} parent=47 // pred_fallthru
          _
        // Predicated region
        $region53: #{tpu_custom_call.1} parent=47 // pred_check
          %p345 = pneg %p76
        $region54: #{tpu_custom_call.1} parent=47 // pred_check_branch
          %347 = sbr.rel (%p345) target = $region56
        $region55: #{tpu_custom_call.1} parent=47 // pred_region
          %348 = dma.done [#allocation9], 64
        $region56: #{tpu_custom_call.1} parent=47 // pred_fallthru
          _
        // Predicated region
        $region57: #{tpu_custom_call.1} parent=47 // pred_check
          %p349 = pneg %p97
        $region58: #{tpu_custom_call.1} parent=47 // pred_check_branch
          %351 = sbr.rel (%p349) target = $region60
        $region59: #{tpu_custom_call.1} parent=47 // pred_region
          %352 = dma.done [#allocation9], 64
        $region60: #{tpu_custom_call.1} parent=47 // pred_fallthru
          _
        // Predicated region
        $region61: #{tpu_custom_call.1} parent=47 // pred_check
          %p353 = pneg %p118
        $region62: #{tpu_custom_call.1} parent=47 // pred_check_branch
          %355 = sbr.rel (%p353) target = $region64
        $region63: #{tpu_custom_call.1} parent=47 // pred_region
          %356 = dma.done [#allocation12], 2048
        $region64: #{tpu_custom_call.1} parent=47 // pred_fallthru
          _
        // Predicated region
        $region65: #{tpu_custom_call.1} parent=47 // pred_check
          %p357 = pneg %p139
        $region66: #{tpu_custom_call.1} parent=47 // pred_check_branch
          %359 = sbr.rel (%p357) target = $region68
        $region67: #{tpu_custom_call.1} parent=47 // pred_region
          %360 = dma.done [#allocation12], 1024
        $region68: #{tpu_custom_call.1} parent=47 // pred_fallthru
          _
        %s361 = sand.u32 %s154, 1
        %s362 = scalar_lea.sflag [#allocation15], %s361
        %s363 = sand.u32 %s154, 1
        %s364 = smul.addr %s363, 32
        %s365 = scalar_lea.vmem [#allocation14], %s364
        // Predicated region
        $region69: #{tpu_custom_call.1} parent=47 // pred_check
          %p366 = pneg %p167
        $region70: #{tpu_custom_call.1} parent=47 // pred_check_branch
          %368 = sbr.rel (%p366) target = $region72
        $region71: #{tpu_custom_call.1} parent=47 // pred_region
          %369 = dma.done %s362, 512
        $region72: #{tpu_custom_call.1} parent=47 // pred_fallthru
          _
        %p370 = pneg %p55
        %p371 = pneg %p52
        %p372 = pneg %p76
        %p373 = pneg %p73
        %p374 = pneg %p97
        %p375 = pneg %p94
        %p376 = pneg %p118
        %p377 = pneg %p115
        %p378 = pneg %p139
        %p379 = pneg %p136
        %s380 = sand.u32 %s154, 1
        %s381 = scalar_lea.sflag [#allocation15], %s380
        %s382 = sand.u32 %s154, 1
        %s383 = smul.addr %s382, 32
        %s384 = scalar_lea.vmem [#allocation14], %s383
        %p385 = pneg %p167
        %p386 = pneg %p164
        %s387 = smul.u32 2, %s31
        %p388 = scmp.lt.s32.totalorder %s387, 3
        %s389 = scalar_select %p388, %s387, 3
        %p390 = scmp.lt.s32.totalorder %s32, 0
        %s391 = scalar_select %p390, %s32, 0
        %s392 = sadd.s32 %s391, %s389
        %s393 = scalar_lea.vmem %s6, %s392
        %p394 = pneg %p195
        %p395 = pneg %p192
        %p396 = pneg %p221
        %p397 = pneg %p218
        %s398 = sand.u32 %s208, 1
        %s399 = scalar_lea.sflag [#allocation7], %s398
        %s400 = sand.u32 %s208, 1
        %s401 = smul.addr %s400, 16
        %s402 = scalar_lea.vmem [#allocation16], %s401
        %s403 = smul.u32 2, %s31
        %s404 = smul.u32 2, %s32
        %s405 = smul.u32 2, %s31
        %p406 = scmp.lt.s32.totalorder %s405, 3
        %s407 = scalar_select %p406, %s405, 3
        %p408 = scmp.lt.s32.totalorder %s32, 0
        %s409 = scalar_select %p408, %s32, 0
        %s410 = sadd.s32 %s409, %s407
        %s411 = scalar_lea.vmem %s6, %s410
        %s412 = smul.u32 2, %s31
        %s413 = smul.u32 2, %s31
        %p415 = scmp.eq.s32.totalorder %s32, 0
        // Predicated region
        $region73: #{tpu_custom_call.1} parent=47 // pred_check
          %p416 = pneg %p415
        $region74: #{tpu_custom_call.1} parent=47 // pred_check_branch
          %418 = sbr.rel (%p416) target = $region76
        $region75: #{tpu_custom_call.1} parent=47 // pred_region
          %vm419 = vcmask 7168
          %420 = vst.msk [vmem:[#allocation2] sm:$0xff] %vm419, -inf
          %421 = vst.msk [vmem:[#allocation2 + $0x8] sm:$0xff] %vm419, -inf
          %422 = vst.msk [vmem:[#allocation3] sm:$0xff] %vm419, 0.0
          %423 = vst.msk [vmem:[#allocation3 + $0x8] sm:$0xff] %vm419, 0.0
          %424 = vst [vmem:[#allocation4] sm:$0xff] 0.0
          %425 = vst [vmem:[#allocation4 + $0x8] sm:$0xff] 0.0
        $region76: #{tpu_custom_call.1} parent=47 // pred_fallthru
          _
        %v426 = vld [vmem:[%s365] sm:$0xff]
        %v427 = vld [vmem:[%s365 + $0x8] sm:$0xff]
        %v428 = vld [vmem:[%s365 + $0x10] sm:$0xff]
        %v429 = vld [vmem:[%s365 + $0x18] sm:$0xff]
        %v430 = vpack.c.bf16 %v427, %v426
        %v431 = vpack.c.bf16 %v429, %v428
        %v432 = vld [vmem:[#allocation11] sm:$0xff]
        %v433 = vld [vmem:[#allocation11 + $0x8] sm:$0xff]
        %v434 = vld [vmem:[#allocation11 + $0x10] sm:$0xff]
        %v435 = vld [vmem:[#allocation11 + $0x18] sm:$0xff]
        %v436 = vld [vmem:[#allocation11 + $0x20] sm:$0xff]
        %v437 = vld [vmem:[#allocation11 + $0x28] sm:$0xff]
        %v438 = vld [vmem:[#allocation11 + $0x30] sm:$0xff]
        %v439 = vld [vmem:[#allocation11 + $0x38] sm:$0xff]
        %v440 = vld [vmem:[#allocation11 + $0x40] sm:$0xff]
        %v441 = vld [vmem:[#allocation11 + $0x48] sm:$0xff]
        %v442 = vld [vmem:[#allocation11 + $0x50] sm:$0xff]
        %v443 = vld [vmem:[#allocation11 + $0x58] sm:$0xff]
        %v444 = vld [vmem:[#allocation11 + $0x60] sm:$0xff]
        %v445 = vld [vmem:[#allocation11 + $0x68] sm:$0xff]
        %v446 = vld [vmem:[#allocation11 + $0x70] sm:$0xff]
        %v447 = vld [vmem:[#allocation11 + $0x78] sm:$0xff]
        %v464 = vunpack.c.l.b16 %v432
        %v465 = vunpack.c.h.b16 %v432
        %v466 = vunpack.c.l.b16 %v433
        %v467 = vunpack.c.h.b16 %v433
        %v468 = vunpack.c.l.b16 %v434
        %v469 = vunpack.c.h.b16 %v434
        %v470 = vunpack.c.l.b16 %v435
        %v471 = vunpack.c.h.b16 %v435
        %v472 = vunpack.c.l.b16 %v436
        %v473 = vunpack.c.h.b16 %v436
        %v474 = vunpack.c.l.b16 %v437
        %v475 = vunpack.c.h.b16 %v437
        %v476 = vunpack.c.l.b16 %v438
        %v477 = vunpack.c.h.b16 %v438
        %v478 = vunpack.c.l.b16 %v439
        %v479 = vunpack.c.h.b16 %v439
        %v480 = vunpack.c.l.b16 %v440
        %v481 = vunpack.c.h.b16 %v440
        %v482 = vunpack.c.l.b16 %v441
        %v483 = vunpack.c.h.b16 %v441
        %v484 = vunpack.c.l.b16 %v442
        %v485 = vunpack.c.h.b16 %v442
        %v486 = vunpack.c.l.b16 %v443
        %v487 = vunpack.c.h.b16 %v443
        %v488 = vunpack.c.l.b16 %v444
        %v489 = vunpack.c.h.b16 %v444
        %v490 = vunpack.c.l.b16 %v445
        %v491 = vunpack.c.h.b16 %v445
        %v492 = vunpack.c.l.b16 %v446
        %v493 = vunpack.c.h.b16 %v446
        %v494 = vunpack.c.l.b16 %v447
        %v495 = vunpack.c.h.b16 %v447
        %v496 = vpack.c.b16 %v466, %v464
        %v497 = vpack.c.b16 %v467, %v465
        %v498 = vpack.c.b16 %v470, %v468
        %v499 = vpack.c.b16 %v471, %v469
        %v500 = vpack.c.b16 %v474, %v472
        %v501 = vpack.c.b16 %v475, %v473
        %v502 = vpack.c.b16 %v478, %v476
        %v503 = vpack.c.b16 %v479, %v477
        %v504 = vpack.c.b16 %v482, %v480
        %v505 = vpack.c.b16 %v483, %v481
        %v506 = vpack.c.b16 %v486, %v484
        %v507 = vpack.c.b16 %v487, %v485
        %v508 = vpack.c.b16 %v490, %v488
        %v509 = vpack.c.b16 %v491, %v489
        %v510 = vpack.c.b16 %v494, %v492
        %v511 = vpack.c.b16 %v495, %v493
        %528 = vmatprep.subr.bf16.mxu0 %v511
        %529 = vmatpush1.bf16.msra.mxu0 %v510
        %530 = vmatprep.subr.bf16.mxu0 %v509
        %531 = vmatpush1.bf16.msra.mxu0 %v508
        %532 = vmatprep.subr.bf16.mxu0 %v507
        %533 = vmatpush1.bf16.msra.mxu0 %v506
        %534 = vmatprep.subr.bf16.mxu0 %v505
        %535 = vmatpush1.bf16.msra.mxu0 %v504
        %536 = vmatprep.subr.bf16.mxu0 %v503
        %537 = vmatpush1.bf16.msra.mxu0 %v502
        %538 = vmatprep.subr.bf16.mxu0 %v501
        %539 = vmatpush1.bf16.msra.mxu0 %v500
        %540 = vmatprep.subr.bf16.mxu0 %v499
        %541 = vmatpush1.bf16.msra.mxu0 %v498
        %542 = vmatprep.subr.bf16.mxu0 %v497
        %543 = vmatpush1.bf16.msra.mxu0 %v496
        %544 = vmatprep.subr.bf16.mxu0 0
        %545 = vmatpush2.bf16.msra.mxu0 0
        %546 = vmatprep.subr.bf16.mxu0 0
        %547 = vmatpush2.bf16.msra.mxu0 0
        %548 = vmatprep.subr.bf16.mxu0 0
        %549 = vmatpush2.bf16.msra.mxu0 0
        %550 = vmatprep.subr.bf16.mxu0 0
        %551 = vmatpush2.bf16.msra.mxu0 0
        %552 = vmatprep.subr.bf16.mxu0 0
        %553 = vmatpush2.bf16.msra.mxu0 0
        %554 = vmatprep.subr.bf16.mxu0 0
        %555 = vmatpush2.bf16.msra.mxu0 0
        %556 = vmatprep.subr.bf16.mxu0 0
        %557 = vmatpush2.bf16.msra.mxu0 0
        %558 = vmatprep.subr.bf16.mxu0 0
        %559 = vmatpush2.bf16.msra.mxu0 0
        %560 = vmatprep.mubr.bf16.mxu0 0
        %561 = vmatmul.mubr.bf16.gmra.mxu0 %v430
        %v562 = vpop.f32.mrf.mxu0
        %v563 = vadd.f32 0.0, %v562
        %v564 = vpop.f32.mrf.mxu0
        %v565 = vadd.f32 0.0, %v564
        %v566 = vpop.f32.mrf.mxu0
        %v567 = vadd.f32 0.0, %v566
        %v568 = vpop.f32.mrf.mxu0
        %v569 = vadd.f32 0.0, %v568
        %570 = vmatprep.mubr.bf16.mxu0 0
        %571 = vmatmul.mubr.bf16.gmra.mxu0 %v431
        %v572 = vpop.f32.mrf.mxu0
        %v573 = vadd.f32 0.0, %v572
        %v574 = vpop.f32.mrf.mxu0
        %v575 = vadd.f32 0.0, %v574
        %v576 = vpop.f32.mrf.mxu0
        %v577 = vadd.f32 0.0, %v576
        %v578 = vpop.f32.mrf.mxu0
        %v579 = vadd.f32 0.0, %v578
        %580 = vdwg.mxu0
        %v581 = vpack.c.bf16 %v567, %v563
        %v582 = vpack.c.bf16 %v569, %v565
        %v583 = vpack.c.bf16 %v577, %v573
        %v584 = vpack.c.bf16 %v579, %v575
        %v585 = vld [vmem:[#allocation5] sm:$0xf]
        %v586 = vld [vmem:[%s411] sm:$0x1]
        %v588 = vlaneseq
        %v589 = vshrl.u32 %v588, 7
        %v590 = vsub.s32 0, %v589
        %v591 = vrot.slane %v586, %v590
        %593 = vmatprep.subr.bf16.mxu0 0
        %594 = vmatpush1.bf16.xpose.msra.mxu0 0
        %595 = vmatprep.subr.bf16.mxu0 0
        %596 = vmatpush1.bf16.xpose.msra.mxu0 0
        %597 = vmatprep.subr.bf16.mxu0 0
        %598 = vmatpush1.bf16.xpose.msra.mxu0 0
        %599 = vmatprep.subr.bf16.mxu0 0
        %600 = vmatpush1.bf16.xpose.msra.mxu0 0
        %601 = vmatprep.subr.bf16.mxu0 0
        %602 = vmatpush1.bf16.xpose.msra.mxu0 0
        %603 = vmatprep.subr.bf16.mxu0 0
        %604 = vmatpush1.bf16.xpose.msra.mxu0 0
        %605 = vmatprep.subr.bf16.mxu0 0
        %606 = vmatpush1.bf16.xpose.msra.mxu0 0
        %607 = vmatprep.subr.bf16.mxu0 0
        %608 = vmatpush1.bf16.xpose.msra.mxu0 %v581
        %609 = vmatprep.subr.bf16.mxu0 0
        %610 = vmatpush2.bf16.xpose.msra.mxu0 0
        %611 = vmatprep.subr.bf16.mxu0 0
        %612 = vmatpush2.bf16.xpose.msra.mxu0 0
        %613 = vmatprep.subr.bf16.mxu0 0
        %614 = vmatpush2.bf16.xpose.msra.mxu0 0
        %615 = vmatprep.subr.bf16.mxu0 0
        %616 = vmatpush2.bf16.xpose.msra.mxu0 0
        %617 = vmatprep.subr.bf16.mxu0 0
        %618 = vmatpush2.bf16.xpose.msra.mxu0 0
        %619 = vmatprep.subr.bf16.mxu0 0
        %620 = vmatpush2.bf16.xpose.msra.mxu0 0
        %621 = vmatprep.subr.bf16.mxu0 0
        %622 = vmatpush2.bf16.xpose.msra.mxu0 0
        %623 = vmatprep.subr.bf16.mxu0 0
        %624 = vmatpush2.bf16.xpose.msra.mxu0 0
        %625 = vmatprep.mubr.bf16.mxu0 0
        %626 = vmatmul.mubr.bf16.gmra.mxu0 %v585
        %v627 = vpop.f32.mrf.mxu0
        %v628 = vadd.f32 %v591, %v627
        %v629 = vpop.f32.mrf.mxu0
        %v630 = vpop.f32.mrf.mxu0
        %v631 = vpop.f32.mrf.mxu0
        %632 = vdwg.mxu0
        %v633 = vld [vmem:[#allocation2] sm:$0xff]
        %vm634 = vcmask 130048
        %v635 = vsel %vm634, %v628, -inf
        %636 = vmax.xlane.f32.xlu0 %v635
        %v637 = vpop.xlane.xlu0 %636
        %v638 = vmax.f32 %v633, %v637
        %v639 = vsub.f32 %v633, %v638
        %v640 = vmul.f32 %v639, 1.442695
        %v641 = vpow.pop %v640
        %643 = vset.pattern.permute.xlu0 0
        %644 = vperm.xlu0 %643, %v638
        %v645 = vpop.permute.xlu0 %644
        %v647 = vsub.f32 %v628, %v645
        %v648 = vmul.f32 %v647, 1.442695
        %v649 = vpow.pop %v648
        %v650 = vld [vmem:[#allocation3] sm:$0xff]
        %v651 = vmul.f32 %v641, %v650
        %v652 = vsel %vm634, %v649, 0.0
        %653 = vadd.xlane.f32.xlu0 %v652
        %v654 = vpop.xlane.xlu0 %653
        %v655 = vadd.f32 %v651, %v654
        %vm656 = vcmask 7168
        %657 = vst.msk [vmem:[#allocation3] sm:$0xff] %vm656, %v655
        %v658 = vld [vmem:[#allocation4] sm:$0xff]
        %660 = vset.pattern.permute.xlu0 0
        %661 = vperm.xlu0 %660, %v641
        %v662 = vpop.permute.xlu0 %661
        %v664 = vmul.f32 %v662, %v658
        %v665 = vpack.c.bf16 %v649, %v649
        %v667 = vsel %vm634, %v665, 0
        %669 = vmatprep.subr.bf16.mxu0 0
        %670 = vmatpush1.bf16.msra.mxu0 0
        %671 = vmatprep.subr.bf16.mxu0 0
        %672 = vmatpush1.bf16.msra.mxu0 0
        %673 = vmatprep.subr.bf16.mxu0 0
        %674 = vmatpush1.bf16.msra.mxu0 0
        %675 = vmatprep.subr.bf16.mxu0 0
        %676 = vmatpush1.bf16.msra.mxu0 0
        %677 = vmatprep.subr.bf16.mxu0 0
        %678 = vmatpush1.bf16.msra.mxu0 0
        %679 = vmatprep.subr.bf16.mxu0 0
        %680 = vmatpush1.bf16.msra.mxu0 0
        %681 = vmatprep.subr.bf16.mxu0 0
        %682 = vmatpush1.bf16.msra.mxu0 0
        %683 = vmatprep.subr.bf16.mxu0 0
        %684 = vmatpush1.bf16.msra.mxu0 %v582
        %685 = vmatprep.subr.bf16.mxu0 0
        %686 = vmatpush2.bf16.msra.mxu0 0
        %687 = vmatprep.subr.bf16.mxu0 0
        %688 = vmatpush2.bf16.msra.mxu0 0
        %689 = vmatprep.subr.bf16.mxu0 0
        %690 = vmatpush2.bf16.msra.mxu0 0
        %691 = vmatprep.subr.bf16.mxu0 0
        %692 = vmatpush2.bf16.msra.mxu0 0
        %693 = vmatprep.subr.bf16.mxu0 0
        %694 = vmatpush2.bf16.msra.mxu0 0
        %695 = vmatprep.subr.bf16.mxu0 0
        %696 = vmatpush2.bf16.msra.mxu0 0
        %697 = vmatprep.subr.bf16.mxu0 0
        %698 = vmatpush2.bf16.msra.mxu0 0
        %699 = vmatprep.subr.bf16.mxu0 0
        %700 = vmatpush2.bf16.msra.mxu0 0
        %701 = vmatprep.mubr.bf16.mxu0 0
        %702 = vmatmul.mubr.bf16.gmra.mxu0 %v667
        %v703 = vpop.f32.mrf.mxu0
        %v704 = vadd.f32 0.0, %v703
        %v705 = vpop.f32.mrf.mxu0
        %v706 = vpop.f32.mrf.mxu0
        %v707 = vpop.f32.mrf.mxu0
        %708 = vdwg.mxu0
        %v709 = vadd.f32 %v664, %v704
        %710 = vst [vmem:[#allocation4] sm:$0xff] %v709
        %711 = vst.msk [vmem:[#allocation2] sm:$0xff] %vm656, %v638
        %s712 = scalar_lea.vmem %s411, 1
        %v713 = vld [vmem:[%s712] sm:$0x1]
        %v715 = vlaneseq
        %v716 = vshrl.u32 %v715, 7
        %v717 = vsub.s32 0, %v716
        %v718 = vrot.slane %v713, %v717
        %720 = vmatprep.subr.bf16.mxu0 0
        %721 = vmatpush1.bf16.xpose.msra.mxu0 0
        %722 = vmatprep.subr.bf16.mxu0 0
        %723 = vmatpush1.bf16.xpose.msra.mxu0 0
        %724 = vmatprep.subr.bf16.mxu0 0
        %725 = vmatpush1.bf16.xpose.msra.mxu0 0
        %726 = vmatprep.subr.bf16.mxu0 0
        %727 = vmatpush1.bf16.xpose.msra.mxu0 0
        %728 = vmatprep.subr.bf16.mxu0 0
        %729 = vmatpush1.bf16.xpose.msra.mxu0 0
        %730 = vmatprep.subr.bf16.mxu0 0
        %731 = vmatpush1.bf16.xpose.msra.mxu0 0
        %732 = vmatprep.subr.bf16.mxu0 0
        %733 = vmatpush1.bf16.xpose.msra.mxu0 0
        %734 = vmatprep.subr.bf16.mxu0 0
        %735 = vmatpush1.bf16.xpose.msra.mxu0 %v583
        %736 = vmatprep.subr.bf16.mxu0 0
        %737 = vmatpush2.bf16.xpose.msra.mxu0 0
        %738 = vmatprep.subr.bf16.mxu0 0
        %739 = vmatpush2.bf16.xpose.msra.mxu0 0
        %740 = vmatprep.subr.bf16.mxu0 0
        %741 = vmatpush2.bf16.xpose.msra.mxu0 0
        %742 = vmatprep.subr.bf16.mxu0 0
        %743 = vmatpush2.bf16.xpose.msra.mxu0 0
        %744 = vmatprep.subr.bf16.mxu0 0
        %745 = vmatpush2.bf16.xpose.msra.mxu0 0
        %746 = vmatprep.subr.bf16.mxu0 0
        %747 = vmatpush2.bf16.xpose.msra.mxu0 0
        %748 = vmatprep.subr.bf16.mxu0 0
        %749 = vmatpush2.bf16.xpose.msra.mxu0 0
        %750 = vmatprep.subr.bf16.mxu0 0
        %751 = vmatpush2.bf16.xpose.msra.mxu0 0
        %752 = vmatprep.mubr.bf16.mxu0 0
        %753 = vmatmul.mubr.bf16.gmra.mxu0 %v585
        %v754 = vpop.f32.mrf.mxu0
        %v755 = vadd.f32 %v718, %v754
        %v756 = vpop.f32.mrf.mxu0
        %v757 = vpop.f32.mrf.mxu0
        %v758 = vpop.f32.mrf.mxu0
        %759 = vdwg.mxu0
        %s760 = scalar_lea.vmem [#allocation2], 8
        %v761 = vld [vmem:[%s760] sm:$0xff]
        %v762 = vsel %vm634, %v755, -inf
        %763 = vmax.xlane.f32.xlu0 %v762
        %v764 = vpop.xlane.xlu0 %763
        %v765 = vmax.f32 %v761, %v764
        %v766 = vsub.f32 %v761, %v765
        %v767 = vmul.f32 %v766, 1.442695
        %v768 = vpow.pop %v767
        %770 = vset.pattern.permute.xlu0 0
        %771 = vperm.xlu0 %770, %v765
        %v772 = vpop.permute.xlu0 %771
        %v774 = vsub.f32 %v755, %v772
        %v775 = vmul.f32 %v774, 1.442695
        %v776 = vpow.pop %v775
        %s777 = scalar_lea.vmem [#allocation3], 8
        %v778 = vld [vmem:[%s777] sm:$0xff]
        %v779 = vmul.f32 %v768, %v778
        %v780 = vsel %vm634, %v776, 0.0
        %781 = vadd.xlane.f32.xlu0 %v780
        %v782 = vpop.xlane.xlu0 %781
        %v783 = vadd.f32 %v779, %v782
        %784 = vst.msk [vmem:[%s777] sm:$0xff] %vm656, %v783
        %s785 = scalar_lea.vmem [#allocation4], 8
        %v786 = vld [vmem:[%s785] sm:$0xff]
        %788 = vset.pattern.permute.xlu0 0
        %789 = vperm.xlu0 %788, %v768
        %v790 = vpop.permute.xlu0 %789
        %v792 = vmul.f32 %v790, %v786
        %v793 = vpack.c.bf16 %v776, %v776
        %v795 = vsel %vm634, %v793, 0
        %797 = vmatprep.subr.bf16.mxu0 0
        %798 = vmatpush1.bf16.msra.mxu0 0
        %799 = vmatprep.subr.bf16.mxu0 0
        %800 = vmatpush1.bf16.msra.mxu0 0
        %801 = vmatprep.subr.bf16.mxu0 0
        %802 = vmatpush1.bf16.msra.mxu0 0
        %803 = vmatprep.subr.bf16.mxu0 0
        %804 = vmatpush1.bf16.msra.mxu0 0
        %805 = vmatprep.subr.bf16.mxu0 0
        %806 = vmatpush1.bf16.msra.mxu0 0
        %807 = vmatprep.subr.bf16.mxu0 0
        %808 = vmatpush1.bf16.msra.mxu0 0
        %809 = vmatprep.subr.bf16.mxu0 0
        %810 = vmatpush1.bf16.msra.mxu0 0
        %811 = vmatprep.subr.bf16.mxu0 0
        %812 = vmatpush1.bf16.msra.mxu0 %v584
        %813 = vmatprep.subr.bf16.mxu0 0
        %814 = vmatpush2.bf16.msra.mxu0 0
        %815 = vmatprep.subr.bf16.mxu0 0
        %816 = vmatpush2.bf16.msra.mxu0 0
        %817 = vmatprep.subr.bf16.mxu0 0
        %818 = vmatpush2.bf16.msra.mxu0 0
        %819 = vmatprep.subr.bf16.mxu0 0
        %820 = vmatpush2.bf16.msra.mxu0 0
        %821 = vmatprep.subr.bf16.mxu0 0
        %822 = vmatpush2.bf16.msra.mxu0 0
        %823 = vmatprep.subr.bf16.mxu0 0
        %824 = vmatpush2.bf16.msra.mxu0 0
        %825 = vmatprep.subr.bf16.mxu0 0
        %826 = vmatpush2.bf16.msra.mxu0 0
        %827 = vmatprep.subr.bf16.mxu0 0
        %828 = vmatpush2.bf16.msra.mxu0 0
        %829 = vmatprep.mubr.bf16.mxu0 0
        %830 = vmatmul.mubr.bf16.gmra.mxu0 %v795
        %v831 = vpop.f32.mrf.mxu0
        %v832 = vadd.f32 0.0, %v831
        %v833 = vpop.f32.mrf.mxu0
        %v834 = vpop.f32.mrf.mxu0
        %v835 = vpop.f32.mrf.mxu0
        %836 = vdwg.mxu0
        %v837 = vadd.f32 %v792, %v832
        %838 = vst [vmem:[%s785] sm:$0xff] %v837
        %839 = vst.msk [vmem:[%s760] sm:$0xff] %vm656, %v765
        // Predicated region
        $region77: #{tpu_custom_call.1} parent=47 // pred_check
          %p840 = pneg %p415
        $region78: #{tpu_custom_call.1} parent=47 // pred_check_branch
          %842 = sbr.rel (%p840) target = $region80
        $region79: #{tpu_custom_call.1} parent=47 // pred_region
          %v843 = vld [vmem:[#allocation10] sm:$0xf]
          %v844 = vld [vmem:[#allocation8] sm:$0xf]
          %v845 = vld [vmem:[#allocation13] sm:$0xf]
          %v846 = vld [vmem:[#allocation13 + $0x4] sm:$0xf]
          %v847 = vld [vmem:[#allocation13 + $0x8] sm:$0xf]
          %v848 = vld [vmem:[#allocation13 + $0xc] sm:$0xf]
          %v849 = vld [vmem:[#allocation13 + $0x10] sm:$0xf]
          %v850 = vld [vmem:[#allocation13 + $0x14] sm:$0xf]
          %v851 = vld [vmem:[#allocation13 + $0x18] sm:$0xf]
          %v852 = vld [vmem:[#allocation13 + $0x1c] sm:$0xf]
          %v853 = vld [vmem:[#allocation13 + $0x20] sm:$0xf]
          %v854 = vld [vmem:[#allocation13 + $0x24] sm:$0xf]
          %v855 = vld [vmem:[#allocation13 + $0x28] sm:$0xf]
          %v856 = vld [vmem:[#allocation13 + $0x2c] sm:$0xf]
          %v857 = vld [vmem:[#allocation13 + $0x30] sm:$0xf]
          %v858 = vld [vmem:[#allocation13 + $0x34] sm:$0xf]
          %v859 = vld [vmem:[#allocation13 + $0x38] sm:$0xf]
          %v860 = vld [vmem:[#allocation13 + $0x3c] sm:$0xf]
          %v861 = vld [vmem:[#allocation3] sm:$0xff]
          %v862 = vrcp.pop %v861
          %v863 = vld [vmem:[#allocation4] sm:$0xff]
          %865 = vset.pattern.permute.xlu0 0
          %866 = vperm.xlu0 %865, %v862
          %v867 = vpop.permute.xlu0 %866
          %v869 = vmul.f32 %v863, %v867
          %v870 = vpack.c.bf16 %v869, %v869
          %v871 = vmul.bf16 %v870, %v844
          %vm872 = vcmask 64512
          %v874 = vsel %vm872, %v843, 0
          %vm876 = vcmask 1043456
          %v878 = vsel %vm876, %v871, 0
          %880 = vmatprep.subr.bf16.mxu0 0
          %881 = vmatpush1.bf16.msra.mxu0 0
          %882 = vmatprep.subr.bf16.mxu0 0
          %883 = vmatpush1.bf16.msra.mxu0 0
          %884 = vmatprep.subr.bf16.mxu0 0
          %885 = vmatpush1.bf16.msra.mxu0 0
          %886 = vmatprep.subr.bf16.mxu0 0
          %887 = vmatpush1.bf16.msra.mxu0 0
          %888 = vmatprep.subr.bf16.mxu0 0
          %889 = vmatpush1.bf16.msra.mxu0 0
          %890 = vmatprep.subr.bf16.mxu0 0
          %891 = vmatpush1.bf16.msra.mxu0 0
          %892 = vmatprep.subr.bf16.mxu0 0
          %893 = vmatpush1.bf16.msra.mxu0 0
          %894 = vmatprep.subr.bf16.mxu0 0
          %895 = vmatpush1.bf16.msra.mxu0 %v878
          %896 = vmatprep.subr.bf16.mxu0 0
          %897 = vmatpush2.bf16.msra.mxu0 0
          %898 = vmatprep.subr.bf16.mxu0 0
          %899 = vmatpush2.bf16.msra.mxu0 0
          %900 = vmatprep.subr.bf16.mxu0 0
          %901 = vmatpush2.bf16.msra.mxu0 0
          %902 = vmatprep.subr.bf16.mxu0 0
          %903 = vmatpush2.bf16.msra.mxu0 0
          %904 = vmatprep.subr.bf16.mxu0 0
          %905 = vmatpush2.bf16.msra.mxu0 0
          %906 = vmatprep.subr.bf16.mxu0 0
          %907 = vmatpush2.bf16.msra.mxu0 0
          %908 = vmatprep.subr.bf16.mxu0 0
          %909 = vmatpush2.bf16.msra.mxu0 0
          %910 = vmatprep.subr.bf16.mxu0 0
          %911 = vmatpush2.bf16.msra.mxu0 0
          %912 = vmatprep.mubr.bf16.mxu0 0
          %913 = vmatmul.mubr.bf16.gmra.mxu0 %v874
          %v914 = vpop.f32.mrf.mxu0
          %v915 = vadd.f32 0.0, %v914
          %v916 = vpop.f32.mrf.mxu0
          %v917 = vpop.f32.mrf.mxu0
          %v918 = vpop.f32.mrf.mxu0
          %919 = vdwg.mxu0
          %v920 = vpack.c.bf16 %v915, %v915
          %v937 = vunpack.c.l.b16 %v845
          %v938 = vunpack.c.l.b16 %v846
          %v939 = vunpack.c.l.b16 %v847
          %v940 = vunpack.c.l.b16 %v848
          %v941 = vunpack.c.l.b16 %v849
          %v942 = vunpack.c.l.b16 %v850
          %v943 = vunpack.c.l.b16 %v851
          %v944 = vunpack.c.l.b16 %v852
          %v945 = vunpack.c.l.b16 %v853
          %v946 = vunpack.c.l.b16 %v854
          %v947 = vunpack.c.l.b16 %v855
          %v948 = vunpack.c.l.b16 %v856
          %v949 = vunpack.c.l.b16 %v857
          %v950 = vunpack.c.l.b16 %v858
          %v951 = vunpack.c.l.b16 %v859
          %v952 = vunpack.c.l.b16 %v860
          %v953 = vpack.c.b16 %v938, %v937
          %v954 = vpack.c.b16 %v940, %v939
          %v955 = vpack.c.b16 %v942, %v941
          %v956 = vpack.c.b16 %v944, %v943
          %v957 = vpack.c.b16 %v946, %v945
          %v958 = vpack.c.b16 %v948, %v947
          %v959 = vpack.c.b16 %v950, %v949
          %v960 = vpack.c.b16 %v952, %v951
          %969 = vmatprep.subr.bf16.mxu0 0
          %970 = vmatpush1.bf16.msra.mxu0 %v960
          %971 = vmatprep.subr.bf16.mxu0 0
          %972 = vmatpush1.bf16.msra.mxu0 %v959
          %973 = vmatprep.subr.bf16.mxu0 0
          %974 = vmatpush1.bf16.msra.mxu0 %v958
          %975 = vmatprep.subr.bf16.mxu0 0
          %976 = vmatpush1.bf16.msra.mxu0 %v957
          %977 = vmatprep.subr.bf16.mxu0 0
          %978 = vmatpush1.bf16.msra.mxu0 %v956
          %979 = vmatprep.subr.bf16.mxu0 0
          %980 = vmatpush1.bf16.msra.mxu0 %v955
          %981 = vmatprep.subr.bf16.mxu0 0
          %982 = vmatpush1.bf16.msra.mxu0 %v954
          %983 = vmatprep.subr.bf16.mxu0 0
          %984 = vmatpush1.bf16.msra.mxu0 %v953
          %985 = vmatprep.subr.bf16.mxu0 0
          %986 = vmatpush2.bf16.msra.mxu0 0
          %987 = vmatprep.subr.bf16.mxu0 0
          %988 = vmatpush2.bf16.msra.mxu0 0
          %989 = vmatprep.subr.bf16.mxu0 0
          %990 = vmatpush2.bf16.msra.mxu0 0
          %991 = vmatprep.subr.bf16.mxu0 0
          %992 = vmatpush2.bf16.msra.mxu0 0
          %993 = vmatprep.subr.bf16.mxu0 0
          %994 = vmatpush2.bf16.msra.mxu0 0
          %995 = vmatprep.subr.bf16.mxu0 0
          %996 = vmatpush2.bf16.msra.mxu0 0
          %997 = vmatprep.subr.bf16.mxu0 0
          %998 = vmatpush2.bf16.msra.mxu0 0
          %999 = vmatprep.subr.bf16.mxu0 0
          %1000 = vmatpush2.bf16.msra.mxu0 0
          %1001 = vmatprep.mubr.bf16.mxu0 0
          %1002 = vmatmul.mubr.bf16.gmra.mxu0 %v920
          %v1003 = vpop.f32.mrf.mxu0
          %v1004 = vadd.f32 0.0, %v1003
          %v1005 = vpop.f32.mrf.mxu0
          %v1006 = vpop.f32.mrf.mxu0
          %v1007 = vpop.f32.mrf.mxu0
          %1008 = vdwg.mxu0
          %1009 = vst [vmem:[%s402] sm:$0xff] %v1004
          %v1010 = vld [vmem:[%s777] sm:$0xff]
          %v1011 = vrcp.pop %v1010
          %v1012 = vld [vmem:[%s785] sm:$0xff]
          %1014 = vset.pattern.permute.xlu0 0
          %1015 = vperm.xlu0 %1014, %v1011
          %v1016 = vpop.permute.xlu0 %1015
          %v1018 = vmul.f32 %v1012, %v1016
          %v1019 = vpack.c.bf16 %v1018, %v1018
          %v1020 = vmul.bf16 %v1019, %v844
          %v1022 = vsel %vm876, %v1020, 0
          %1024 = vmatprep.subr.bf16.mxu0 0
          %1025 = vmatpush1.bf16.msra.mxu0 0
          %1026 = vmatprep.subr.bf16.mxu0 0
          %1027 = vmatpush1.bf16.msra.mxu0 0
          %1028 = vmatprep.subr.bf16.mxu0 0
          %1029 = vmatpush1.bf16.msra.mxu0 0
          %1030 = vmatprep.subr.bf16.mxu0 0
          %1031 = vmatpush1.bf16.msra.mxu0 0
          %1032 = vmatprep.subr.bf16.mxu0 0
          %1033 = vmatpush1.bf16.msra.mxu0 0
          %1034 = vmatprep.subr.bf16.mxu0 0
          %1035 = vmatpush1.bf16.msra.mxu0 0
          %1036 = vmatprep.subr.bf16.mxu0 0
          %1037 = vmatpush1.bf16.msra.mxu0 0
          %1038 = vmatprep.subr.bf16.mxu0 0
          %1039 = vmatpush1.bf16.msra.mxu0 %v1022
          %1040 = vmatprep.subr.bf16.mxu0 0
          %1041 = vmatpush2.bf16.msra.mxu0 0
          %1042 = vmatprep.subr.bf16.mxu0 0
          %1043 = vmatpush2.bf16.msra.mxu0 0
          %1044 = vmatprep.subr.bf16.mxu0 0
          %1045 = vmatpush2.bf16.msra.mxu0 0
          %1046 = vmatprep.subr.bf16.mxu0 0
          %1047 = vmatpush2.bf16.msra.mxu0 0
          %1048 = vmatprep.subr.bf16.mxu0 0
          %1049 = vmatpush2.bf16.msra.mxu0 0
          %1050 = vmatprep.subr.bf16.mxu0 0
          %1051 = vmatpush2.bf16.msra.mxu0 0
          %1052 = vmatprep.subr.bf16.mxu0 0
          %1053 = vmatpush2.bf16.msra.mxu0 0
          %1054 = vmatprep.subr.bf16.mxu0 0
          %1055 = vmatpush2.bf16.msra.mxu0 0
          %1056 = vmatprep.mubr.bf16.mxu0 0
          %1057 = vmatmul.mubr.bf16.gmra.mxu0 %v874
          %v1058 = vpop.f32.mrf.mxu0
          %v1059 = vadd.f32 0.0, %v1058
          %v1060 = vpop.f32.mrf.mxu0
          %v1061 = vpop.f32.mrf.mxu0
          %v1062 = vpop.f32.mrf.mxu0
          %1063 = vdwg.mxu0
          %v1064 = vpack.c.bf16 %v1059, %v1059
          %1065 = vmatprep.subr.bf16.mxu0 0
          %1066 = vmatpush1.bf16.msra.mxu0 %v960
          %1067 = vmatprep.subr.bf16.mxu0 0
          %1068 = vmatpush1.bf16.msra.mxu0 %v959
          %1069 = vmatprep.subr.bf16.mxu0 0
          %1070 = vmatpush1.bf16.msra.mxu0 %v958
          %1071 = vmatprep.subr.bf16.mxu0 0
          %1072 = vmatpush1.bf16.msra.mxu0 %v957
          %1073 = vmatprep.subr.bf16.mxu0 0
          %1074 = vmatpush1.bf16.msra.mxu0 %v956
          %1075 = vmatprep.subr.bf16.mxu0 0
          %1076 = vmatpush1.bf16.msra.mxu0 %v955
          %1077 = vmatprep.subr.bf16.mxu0 0
          %1078 = vmatpush1.bf16.msra.mxu0 %v954
          %1079 = vmatprep.subr.bf16.mxu0 0
          %1080 = vmatpush1.bf16.msra.mxu0 %v953
          %1081 = vmatprep.subr.bf16.mxu0 0
          %1082 = vmatpush2.bf16.msra.mxu0 0
          %1083 = vmatprep.subr.bf16.mxu0 0
          %1084 = vmatpush2.bf16.msra.mxu0 0
          %1085 = vmatprep.subr.bf16.mxu0 0
          %1086 = vmatpush2.bf16.msra.mxu0 0
          %1087 = vmatprep.subr.bf16.mxu0 0
          %1088 = vmatpush2.bf16.msra.mxu0 0
          %1089 = vmatprep.subr.bf16.mxu0 0
          %1090 = vmatpush2.bf16.msra.mxu0 0
          %1091 = vmatprep.subr.bf16.mxu0 0
          %1092 = vmatpush2.bf16.msra.mxu0 0
          %1093 = vmatprep.subr.bf16.mxu0 0
          %1094 = vmatpush2.bf16.msra.mxu0 0
          %1095 = vmatprep.subr.bf16.mxu0 0
          %1096 = vmatpush2.bf16.msra.mxu0 0
          %1097 = vmatprep.mubr.bf16.mxu0 0
          %1098 = vmatmul.mubr.bf16.gmra.mxu0 %v1064
          %v1099 = vpop.f32.mrf.mxu0
          %v1100 = vadd.f32 0.0, %v1099
          %v1101 = vpop.f32.mrf.mxu0
          %v1102 = vpop.f32.mrf.mxu0
          %v1103 = vpop.f32.mrf.mxu0
          %1104 = vdwg.mxu0
          %1105 = vst [vmem:[%s402 + $0x8] sm:$0xff] %v1100
        $region80: #{tpu_custom_call.1} parent=47 // pred_fallthru
          _
        %s1106 = sand.u32 %s208, 1
        %s1107 = scalar_lea.sflag [#allocation7], %s1106
        %s1108 = sand.u32 %s208, 1
        %s1109 = smul.addr %s1108, 16
        %s1110 = scalar_lea.vmem [#allocation16], %s1109
        // Predicated region
        $region81: #{tpu_custom_call.1} parent=47 // pred_check
          %p1111 = pneg %p218
        $region82: #{tpu_custom_call.1} parent=47 // pred_check_branch
          %1113 = sbr.rel (%p1111) target = $region84
        $region83: #{tpu_custom_call.1} parent=47 // pred_region
          %s1114 = smul.u32 2, %s31
          %s1116 = ssub.s32 256, 256
          %1117 = vsyncadd %s1107, %s1116
          %s1118 = smul.addr %s1114, 128
          %s1119 = scalar_lea.hbm %s7, %s1118
          %s1120 = sshll.u32 %s1110, 4
          %s1121 = int_to_ptr.vmem [resolvable:$true] %s1120
          %1126 = dma.vmem_to_hbm [thread:$0]  %s1121, 256, %s1119, %s1107, 128, 128, 8
        $region84: #{tpu_custom_call.1} parent=47 // pred_fallthru
          _
      $region48: #{tpu_custom_call.1} parent=5 // pred_fallthru
        _
      %p1127 = scmp.le.s32.totalorder 2, %s22
      // Predicated region
      $region85: #{tpu_custom_call.1} parent=5 // pred_check
        %p1128 = pneg %p1127
      $region86: #{tpu_custom_call.1} parent=5 // pred_check_branch
        %1130 = sbr.rel (%p1128) target = $region88
      $region87: #{tpu_custom_call.1} parent=5 // pred_region
        %s1131 = ssub.s32 %s22, 2
        // Predicated region
        $region89: #{tpu_custom_call.1} parent=87 // pred_check
          %p1132 = pneg %p224
        $region90: #{tpu_custom_call.1} parent=87 // pred_check_branch
          %1134 = sbr.rel (%p1132) target = $region92
        $region91: #{tpu_custom_call.1} parent=87 // pred_region
          %s1135 = sand.u32 %s209, 1
          %s1136 = scalar_lea.sflag [#allocation7], %s1135
          %s1137 = sand.u32 %s209, 1
          %s1138 = smul.addr %s1137, 16
          %s1139 = scalar_lea.vmem [#allocation16], %s1138
          %1140 = dma.done %s1136, 256
        $region92: #{tpu_custom_call.1} parent=87 // pred_fallthru
          _
      $region88: #{tpu_custom_call.1} parent=5 // pred_fallthru
        _
    $region6: #{tpu_custom_call.1} parent=1 // loop_footer
      %s26 = sadd.s32 1, %s22
    $region7: #{tpu_custom_call.1} parent=1 // loop_footer_branch
      %21 = sbr.rel target = $region3
    $region8: #{tpu_custom_call.1} parent=1 // loop_exit
      _
    %1141 = vsyncpa [#allocation6], 1
    %s1142 = scalar_lea.sflag [#allocation6], 1
    %1143 = vsyncpa %s1142, 1
    %1144 = vsyncpa [#allocation9], 1
    %1145 = vsyncpa [#allocation12], 1
    %1146 = vsyncpa [#allocation15], 1
    %s1147 = scalar_lea.sflag [#allocation15], 1
    %1148 = vsyncpa %s1147, 1
    %1149 = vsyncpa [#allocation7], 1
    %s1150 = scalar_lea.sflag [#allocation7], 1
    %1151 = vsyncpa %s1150, 1

</llo_original>
